<compile_context>
chip_gen: v7x
topology: tpu7x:2x2x1
jax: 0.10.0
libtpu: 0.0.40
codegen_flags: <defaults>
</compile_context>

<pallas_src>
import functools
import math

import jax
import jax.numpy as jnp
from jax.experimental import pallas as pl
from jax.experimental.pallas import tpu as pltpu


# ---------------------------------------------------------------------------
# Fused decoder-layer kernel: one batch element per grid step
# ---------------------------------------------------------------------------

def _decoder_layer_kernel(
    # activations / mask
    seq_ref, cond_ref, mask_ref,
    # self-attention block
    sa_wqkv_ref, sa_bqkv_ref, sa_wo_ref, sa_bo_ref, ln1_g_ref, ln1_b_ref,
    # cross-attention block
    ca_wq_ref, ca_bq_ref, ca_wkv_ref, ca_bkv_ref, ca_wo_ref, ca_bo_ref,
    ln2_g_ref, ln2_b_ref,
    # feed-forward block
    w1_ref, b1_ref, w2_ref, b2_ref, ln3_g_ref, ln3_b_ref,
    # output
    out_ref,
    *, num_heads):
  """Full DecoderLayer forward for one batch element."""
  H = num_heads
  f32 = jnp.float32
  bf16 = jnp.bfloat16

  x = seq_ref[0]                      # (S, D) f32
  c = cond_ref[0]                     # (T, D) f32
  S, D = x.shape
  Dh = D // H
  scale = f32(1.0 / math.sqrt(D / H))   # matches np.sqrt(embed_dim / num_heads)

  def split_heads(m):                 # (rows, D) -> (H, rows, Dh), bf16 for MXU
    rows = m.shape[0]
    return pltpu.einshape("shd->hsd", m.reshape(rows, H, Dh)).astype(bf16)

  def merge_heads(m):                 # (H, rows, Dh) -> (rows, D)
    rows = m.shape[1]
    return pltpu.einshape("hsd->shd", m).reshape(rows, D)

  def layer_norm(v, g, b):            # f32 LayerNorm over last axis, eps = 1e-5
    mu = jnp.mean(v, axis=-1, keepdims=True)
    var = jnp.mean(jnp.square(v - mu), axis=-1, keepdims=True)
    return (v - mu) * jax.lax.rsqrt(var + 1e-5) * g + b

  def attention(q, k, v, bias, wo, bo):
    # q: (Sq, D) f32; k, v: (Tk, D) f32; bias: (Sq, Tk) additive f32 or None.
    qh, kh, vh = split_heads(q), split_heads(k), split_heads(v)
    s = jnp.einsum("hsd,htd->hst", qh, kh,
                   preferred_element_type=f32) * scale
    if bias is not None:              # mask add stays in f32 (bf16-safe -1e9)
      s = s + bias[None]
    m = jnp.max(s, axis=-1, keepdims=True)
    e = jnp.exp(s - m)
    p = e * pl.reciprocal(jnp.sum(e, axis=-1, keepdims=True), approx=True)
    ctx = jnp.einsum("hst,htd->hsd", p.astype(bf16), vh,
                     preferred_element_type=f32)
    return jnp.dot(merge_heads(ctx).astype(bf16), wo,
                   preferred_element_type=f32) + bo

  # Self-attention mask bias, built in-kernel from the small (S, S) mask.
  sbias = (1.0 - mask_ref[...]) * f32(-1e9)

  xb = x.astype(bf16)
  cb = c.astype(bf16)

  # --- self-attention block: LN(seq + SelfAttn(seq)) ------------------------
  qkv = jnp.dot(xb, sa_wqkv_ref[...],
                preferred_element_type=f32) + sa_bqkv_ref[...]
  sa = attention(qkv[:, :D], qkv[:, D:2 * D], qkv[:, 2 * D:],
                 sbias, sa_wo_ref[...], sa_bo_ref[...])
  h1 = layer_norm(x + sa, ln1_g_ref[...], ln1_b_ref[...])

  # --- cross-attention block: LN(h1 + CrossAttn(h1, cond)) ------------------
  q_c = jnp.dot(h1.astype(bf16), ca_wq_ref[...],
                preferred_element_type=f32) + ca_bq_ref[...]
  kv_c = jnp.dot(cb, ca_wkv_ref[...],
                 preferred_element_type=f32) + ca_bkv_ref[...]
  ca = attention(q_c, kv_c[:, :D], kv_c[:, D:],
                 None, ca_wo_ref[...], ca_bo_ref[...])
  h2 = layer_norm(h1 + ca, ln2_g_ref[...], ln2_b_ref[...])

  # --- feed-forward block: LN(h2 + W2 . relu(W1 . h2)) ----------------------
  hid = jnp.maximum(
      jnp.dot(h2.astype(bf16), w1_ref[...],
              preferred_element_type=f32) + b1_ref[...],
      0.0)
  y = jnp.dot(hid.astype(bf16), w2_ref[...],
              preferred_element_type=f32) + b2_ref[...]
  out = layer_norm(h2 + y, ln3_g_ref[...], ln3_b_ref[...])

  out_ref[0] = out                    # lane-dense (D is a multiple of 128)


# ---------------------------------------------------------------------------
# One-time parameter repack (PyTorch layout -> kernel layout, bf16 weights)
# ---------------------------------------------------------------------------

def prepare_layer_params(p):
  """Repack PyTorch-layout params ((out,in) weights, 1-D biases) ONCE:
  weights transposed to (in, out) and cast to bf16 (MXU operands), Q/K/V and
  K/V packed, biases / LN params kept f32 as (1, out) rows."""
  tw = lambda w: jnp.asarray(w, jnp.float32).T.astype(jnp.bfloat16)
  rb = lambda b: jnp.asarray(b, jnp.float32).reshape(1, -1)
  sa, ca, ffn = p["sa"], p["ca"], p["ffn"]
  return dict(
      sa_wqkv=jnp.concatenate([tw(sa["wq"]), tw(sa["wk"]), tw(sa["wv"])], axis=1),
      sa_bqkv=jnp.concatenate([rb(sa["bq"]), rb(sa["bk"]), rb(sa["bv"])], axis=1),
      sa_wo=tw(sa["wo"]), sa_bo=rb(sa["bo"]),
      ln1_g=rb(sa["ln_g"]), ln1_b=rb(sa["ln_b"]),
      ca_wq=tw(ca["wq"]), ca_bq=rb(ca["bq"]),
      ca_wkv=jnp.concatenate([tw(ca["wk"]), tw(ca["wv"])], axis=1),
      ca_bkv=jnp.concatenate([rb(ca["bk"]), rb(ca["bv"])], axis=1),
      ca_wo=tw(ca["wo"]), ca_bo=rb(ca["bo"]),
      ln2_g=rb(ca["ln_g"]), ln2_b=rb(ca["ln_b"]),
      w1=tw(ffn["w1"]), b1=rb(ffn["b1"]),
      w2=tw(ffn["w2"]), b2=rb(ffn["b2"]),
      ln3_g=rb(ffn["ln_g"]), ln3_b=rb(ffn["ln_b"]),
  )


def _resident_spec(arr):
  """Weight / mask stays VMEM-resident across all grid steps (same block)."""
  nd = arr.ndim
  return pl.BlockSpec(arr.shape, lambda b, _nd=nd: (0,) * _nd)


_WEIGHT_KEYS = (
    "sa_wqkv", "sa_bqkv", "sa_wo", "sa_bo", "ln1_g", "ln1_b",
    "ca_wq", "ca_bq", "ca_wkv", "ca_bkv", "ca_wo", "ca_bo", "ln2_g", "ln2_b",
    "w1", "b1", "w2", "b2", "ln3_g", "ln3_b",
)


@functools.partial(jax.jit, static_argnames=("num_heads",))
def decoder_layer_forward(prep, seq, cond, mask, *, num_heads):
  """DecoderLayer.forward(seq, cond, mask) -> (N, S, D), fused Pallas kernel."""
  N, S, D = seq.shape
  T = cond.shape[1]
  seq = seq.astype(jnp.float32)
  cond = cond.astype(jnp.float32)
  mask = mask.astype(jnp.float32)

  weights = [prep[k] for k in _WEIGHT_KEYS]
  kernel = functools.partial(_decoder_layer_kernel, num_heads=num_heads)

  in_specs = (
      [pl.BlockSpec((1, S, D), lambda b: (b, 0, 0)),   # one batch row per step
       pl.BlockSpec((1, T, D), lambda b: (b, 0, 0)),
       _resident_spec(mask)]
      + [_resident_spec(w) for w in weights])

  return pl.pallas_call(
      kernel,
      out_shape=jax.ShapeDtypeStruct((N, S, D), jnp.float32),
      grid=(N,),
      in_specs=in_specs,
      out_specs=pl.BlockSpec((1, S, D), lambda b: (b, 0, 0)),
      compiler_params=pltpu.CompilerParams(
          dimension_semantics=("parallel",)),   # megacore on v7x, pipeline elsewhere
  )(seq, cond, mask, *weights)


# ---------------------------------------------------------------------------
# Pure-JAX reference (mirrors the PyTorch module, eval mode, f32 weights)
# ---------------------------------------------------------------------------

def reference_forward(params, seq, cond, mask, num_heads):
  def linear(x, w, b):
    return x @ w.T + b

  def ln(v, g, b):
    mu = v.mean(-1, keepdims=True)
    var = ((v - mu) ** 2).mean(-1, keepdims=True)
    return (v - mu) / jnp.sqrt(var + 1e-5) * g + b

  def mha(q, kv, m, p, H):
    Nq, Sq, D = q.shape
    Tk = kv.shape[1]
    Dh = D // H
    Q = linear(q, p["wq"], p["bq"]).reshape(Nq, Sq, H, Dh)
    K = linear(kv, p["wk"], p["bk"]).reshape(Nq, Tk, H, Dh)
    V = linear(kv, p["wv"], p["bv"]).reshape(Nq, Tk, H, Dh)
    s = jnp.einsum("nshd,nthd->nhst", Q, K) / jnp.sqrt(D / H)
    if m is not None:
      s = s + (1.0 - m) * -1e9
    a = jax.nn.softmax(s, axis=-1)
    o = jnp.einsum("nhst,nthd->nshd", a, V).reshape(Nq, Sq, D)
    return linear(o, p["wo"], p["bo"])

  sa, ca, ffn = params["sa"], params["ca"], params["ffn"]
  h1 = ln(mha(seq, seq, mask, sa, num_heads) + seq, sa["ln_g"], sa["ln_b"])
  h2 = ln(h1 + mha(h1, cond, None, ca, num_heads), ca["ln_g"], ca["ln_b"])
  hid = jnp.maximum(linear(h2, ffn["w1"], ffn["b1"]), 0.0)
  y = linear(hid, ffn["w2"], ffn["b2"])
  return ln(h2 + y, ffn["ln_g"], ffn["ln_b"])


# ---------------------------------------------------------------------------
# Deterministic parameter init (PyTorch layout: weights (out, in), biases 1-D)
# ---------------------------------------------------------------------------

def init_decoder_layer_params(key, embed_dim, dim_feedforward):
  keys = iter(jax.random.split(key, 64))
  nrm = lambda shape: 0.02 * jax.random.normal(next(keys), shape, jnp.float32)

  def mha_p():
    return dict(
        wq=nrm((embed_dim, embed_dim)), bq=nrm((embed_dim,)),
        wk=nrm((embed_dim, embed_dim)), bk=nrm((embed_dim,)),
        wv=nrm((embed_dim, embed_dim)), bv=nrm((embed_dim,)),
        wo=nrm((embed_dim, embed_dim)), bo=nrm((embed_dim,)),
        ln_g=1.0 + nrm((embed_dim,)), ln_b=nrm((embed_dim,)))

  ffn = dict(
      w1=nrm((dim_feedforward, embed_dim)), b1=nrm((dim_feedforward,)),
      w2=nrm((embed_dim, dim_feedforward)), b2=nrm((embed_dim,)),
      ln_g=1.0 + nrm((embed_dim,)), ln_b=nrm((embed_dim,)))
  return dict(sa=mha_p(), ca=mha_p(), ffn=ffn)


# ---------------------------------------------------------------------------

if __name__ == "__main__":
  key = jax.random.PRNGKey(0)
  N, S, T = 2, 8, 4            # batch, decoded seq len, conditioning seq len
  D, H, F = 128, 4, 256        # embed_dim (lane-aligned), num_heads, dim_feedforward

  kp, ks, kc = jax.random.split(key, 3)
  params = init_decoder_layer_params(kp, D, F)
  seq = jax.random.normal(ks, (N, S, D), jnp.float32)
  cond = jax.random.normal(kc, (N, T, D), jnp.float32)
  mask = jnp.tril(jnp.ones((S, S), jnp.float32))   # causal self-attention mask

  prep = prepare_layer_params(params)              # one-time bf16 weight repack

  out = decoder_layer_forward(prep, seq, cond, mask, num_heads=H)
  out = jax.block_until_ready(out)

  assert out.shape == (N, S, D)
  assert bool(jnp.all(jnp.isfinite(out)))

  ref = reference_forward(params, seq, cond, mask, H)
  max_err = float(jnp.max(jnp.abs(out - ref)))
  # bf16 MXU operands + approx reciprocal => slightly looser tolerance than f32.
  assert bool(jnp.allclose(out, ref, atol=2e-2, rtol=2e-2)), max_err

  print("KERNEL_OK")
</pallas_src>

<mosaic_0001>
module attributes {stable_mosaic.version = 11 : i64} {
  func.func @_decoder_layer_kernel(%arg0: i32, %arg1: memref<1x8x128xf32, #tpu.memory_space<vmem>>, %arg2: memref<1x4x128xf32, #tpu.memory_space<vmem>>, %arg3: memref<8x8xf32, #tpu.memory_space<vmem>>, %arg4: memref<128x384xbf16, #tpu.memory_space<vmem>>, %arg5: memref<1x384xf32, #tpu.memory_space<vmem>>, %arg6: memref<128x128xbf16, #tpu.memory_space<vmem>>, %arg7: memref<1x128xf32, #tpu.memory_space<vmem>>, %arg8: memref<1x128xf32, #tpu.memory_space<vmem>>, %arg9: memref<1x128xf32, #tpu.memory_space<vmem>>, %arg10: memref<128x128xbf16, #tpu.memory_space<vmem>>, %arg11: memref<1x128xf32, #tpu.memory_space<vmem>>, %arg12: memref<128x256xbf16, #tpu.memory_space<vmem>>, %arg13: memref<1x256xf32, #tpu.memory_space<vmem>>, %arg14: memref<128x128xbf16, #tpu.memory_space<vmem>>, %arg15: memref<1x128xf32, #tpu.memory_space<vmem>>, %arg16: memref<1x128xf32, #tpu.memory_space<vmem>>, %arg17: memref<1x128xf32, #tpu.memory_space<vmem>>, %arg18: memref<128x256xbf16, #tpu.memory_space<vmem>>, %arg19: memref<1x256xf32, #tpu.memory_space<vmem>>, %arg20: memref<256x128xbf16, #tpu.memory_space<vmem>>, %arg21: memref<1x128xf32, #tpu.memory_space<vmem>>, %arg22: memref<1x128xf32, #tpu.memory_space<vmem>>, %arg23: memref<1x128xf32, #tpu.memory_space<vmem>>, %arg24: memref<1x8x128xf32, #tpu.memory_space<vmem>>) attributes {dimension_semantics = [#tpu.dimension_semantics<parallel>], iteration_bounds = array<i64: 2>, scalar_prefetch = 0 : i64, scratch_operands = 0 : i64, tpu.core_type = #tpu.core_type<tc>, window_params = [{transform_indices = @transform_0, window_bounds = array<i64: 1, 8, 128>}, {transform_indices = @transform_1, window_bounds = array<i64: 1, 4, 128>}, {pipeline_mode = #tpu.pipeline_mode<synchronous>, transform_indices = @transform_2, window_bounds = array<i64: 8, 8>}, {pipeline_mode = #tpu.pipeline_mode<synchronous>, transform_indices = @transform_3, window_bounds = array<i64: 128, 384>}, {pipeline_mode = #tpu.pipeline_mode<synchronous>, transform_indices = @transform_4, window_bounds = array<i64: 1, 384>}, {pipeline_mode = #tpu.pipeline_mode<synchronous>, transform_indices = @transform_5, window_bounds = array<i64: 128, 128>}, {pipeline_mode = #tpu.pipeline_mode<synchronous>, transform_indices = @transform_6, window_bounds = array<i64: 1, 128>}, {pipeline_mode = #tpu.pipeline_mode<synchronous>, transform_indices = @transform_7, window_bounds = array<i64: 1, 128>}, {pipeline_mode = #tpu.pipeline_mode<synchronous>, transform_indices = @transform_8, window_bounds = array<i64: 1, 128>}, {pipeline_mode = #tpu.pipeline_mode<synchronous>, transform_indices = @transform_9, window_bounds = array<i64: 128, 128>}, {pipeline_mode = #tpu.pipeline_mode<synchronous>, transform_indices = @transform_10, window_bounds = array<i64: 1, 128>}, {pipeline_mode = #tpu.pipeline_mode<synchronous>, transform_indices = @transform_11, window_bounds = array<i64: 128, 256>}, {pipeline_mode = #tpu.pipeline_mode<synchronous>, transform_indices = @transform_12, window_bounds = array<i64: 1, 256>}, {pipeline_mode = #tpu.pipeline_mode<synchronous>, transform_indices = @transform_13, window_bounds = array<i64: 128, 128>}, {pipeline_mode = #tpu.pipeline_mode<synchronous>, transform_indices = @transform_14, window_bounds = array<i64: 1, 128>}, {pipeline_mode = #tpu.pipeline_mode<synchronous>, transform_indices = @transform_15, window_bounds = array<i64: 1, 128>}, {pipeline_mode = #tpu.pipeline_mode<synchronous>, transform_indices = @transform_16, window_bounds = array<i64: 1, 128>}, {pipeline_mode = #tpu.pipeline_mode<synchronous>, transform_indices = @transform_17, window_bounds = array<i64: 128, 256>}, {pipeline_mode = #tpu.pipeline_mode<synchronous>, transform_indices = @transform_18, window_bounds = array<i64: 1, 256>}, {pipeline_mode = #tpu.pipeline_mode<synchronous>, transform_indices = @transform_19, window_bounds = array<i64: 256, 128>}, {pipeline_mode = #tpu.pipeline_mode<synchronous>, transform_indices = @transform_20, window_bounds = array<i64: 1, 128>}, {pipeline_mode = #tpu.pipeline_mode<synchronous>, transform_indices = @transform_21, window_bounds = array<i64: 1, 128>}, {pipeline_mode = #tpu.pipeline_mode<synchronous>, transform_indices = @transform_22, window_bounds = array<i64: 1, 128>}, {transform_indices = @transform_23, window_bounds = array<i64: 1, 8, 128>}]} {
    %c0 = arith.constant 0 : index
    %c0_0 = arith.constant 0 : index
    %c0_1 = arith.constant 0 : index
    %0 = vector.load %arg1[%c0, %c0_0, %c0_1] : memref<1x8x128xf32, #tpu.memory_space<vmem>>, vector<1x8x128xf32>
    %1 = vector.shape_cast %0 : vector<1x8x128xf32> to vector<8x128xf32>
    %c0_2 = arith.constant 0 : index
    %c0_3 = arith.constant 0 : index
    %c0_4 = arith.constant 0 : index
    %2 = vector.load %arg2[%c0_2, %c0_3, %c0_4] : memref<1x4x128xf32, #tpu.memory_space<vmem>>, vector<1x4x128xf32>
    %3 = vector.shape_cast %2 : vector<1x4x128xf32> to vector<4x128xf32>
    %c0_5 = arith.constant 0 : index
    %c0_6 = arith.constant 0 : index
    %4 = vector.load %arg3[%c0_5, %c0_6] : memref<8x8xf32, #tpu.memory_space<vmem>>, vector<8x8xf32>
    %cst = arith.constant 1.000000e+00 : f32
    %5 = vector.broadcast %cst : f32 to vector<8x8xf32>
    %6 = arith.subf %5, %4 : vector<8x8xf32>
    %cst_7 = arith.constant -1.000000e+09 : f32
    %7 = vector.broadcast %cst_7 : f32 to vector<8x8xf32>
    %8 = arith.mulf %6, %7 : vector<8x8xf32>
    %9 = arith.truncf %1 : vector<8x128xf32> to vector<8x128xbf16>
    %10 = arith.truncf %3 : vector<4x128xf32> to vector<4x128xbf16>
    %c0_8 = arith.constant 0 : index
    %c0_9 = arith.constant 0 : index
    %11 = vector.load %arg4[%c0_8, %c0_9] : memref<128x384xbf16, #tpu.memory_space<vmem>>, vector<128x384xbf16>
    %cst_10 = arith.constant dense<0.000000e+00> : vector<8x384xf32>
    %12 = tpu.matmul %9, %11, %cst_10 {dimension_numbers = #tpu.dot_dimension_numbers<[1], [0], [0], [1], [0, 0, 1, 1], [], []>} : vector<8x128xbf16>, vector<128x384xbf16>, vector<8x384xf32> -> vector<8x384xf32>
    %c0_11 = arith.constant 0 : index
    %c0_12 = arith.constant 0 : index
    %13 = vector.load %arg5[%c0_11, %c0_12] : memref<1x384xf32, #tpu.memory_space<vmem>>, vector<1x384xf32>
    %14 = vector.broadcast %13 : vector<1x384xf32> to vector<8x384xf32>
    %15 = arith.addf %12, %14 : vector<8x384xf32>
    %16 = vector.extract_strided_slice %15 {offsets = [0, 0], sizes = [8, 128], strides = [1, 1]} : vector<8x384xf32> to vector<8x128xf32>
    %17 = vector.extract_strided_slice %15 {offsets = [0, 128], sizes = [8, 128], strides = [1, 1]} : vector<8x384xf32> to vector<8x128xf32>
    %18 = vector.extract_strided_slice %15 {offsets = [0, 256], sizes = [8, 128], strides = [1, 1]} : vector<8x384xf32> to vector<8x128xf32>
    %c0_13 = arith.constant 0 : index
    %c0_14 = arith.constant 0 : index
    %19 = vector.load %arg6[%c0_13, %c0_14] : memref<128x128xbf16, #tpu.memory_space<vmem>>, vector<128x128xbf16>
    %c0_15 = arith.constant 0 : index
    %c0_16 = arith.constant 0 : index
    %20 = vector.load %arg7[%c0_15, %c0_16] : memref<1x128xf32, #tpu.memory_space<vmem>>, vector<1x128xf32>
    %21 = vector.shape_cast %16 : vector<8x128xf32> to vector<8x4x32xf32>
    %22 = tpu.transpose %21, [1, 0, 2] : vector<8x4x32xf32> -> vector<4x8x32xf32>
    %23 = arith.truncf %22 : vector<4x8x32xf32> to vector<4x8x32xbf16>
    %24 = vector.shape_cast %17 : vector<8x128xf32> to vector<8x4x32xf32>
    %25 = tpu.transpose %24, [1, 0, 2] : vector<8x4x32xf32> -> vector<4x8x32xf32>
    %26 = arith.truncf %25 : vector<4x8x32xf32> to vector<4x8x32xbf16>
    %27 = vector.shape_cast %18 : vector<8x128xf32> to vector<8x4x32xf32>
    %28 = tpu.transpose %27, [1, 0, 2] : vector<8x4x32xf32> -> vector<4x8x32xf32>
    %29 = arith.truncf %28 : vector<4x8x32xf32> to vector<4x8x32xbf16>
    "tpu.trace_start"() <{level = 10 : i32, message = "hsd,htd->hst"}> : () -> ()
    %cst_17 = arith.constant dense<0.000000e+00> : vector<4x8x8xf32>
    %30 = tpu.matmul %23, %26, %cst_17 {dimension_numbers = #tpu.dot_dimension_numbers<[2], [2], [1], [1], [0, 0, 0, 1, 1, 1], [0], [0]>} : vector<4x8x32xbf16>, vector<4x8x32xbf16>, vector<4x8x8xf32> -> vector<4x8x8xf32>
    "tpu.trace_stop"() : () -> ()
    %cst_18 = arith.constant 0.176776692 : f32
    %31 = vector.broadcast %cst_18 : f32 to vector<4x8x8xf32>
    %32 = arith.mulf %30, %31 : vector<4x8x8xf32>
    %33 = vector.shape_cast %8 : vector<8x8xf32> to vector<1x8x8xf32>
    %34 = vector.broadcast %33 : vector<1x8x8xf32> to vector<4x8x8xf32>
    %35 = arith.addf %32, %34 : vector<4x8x8xf32>
    %cst_19 = arith.constant dense<0xFF800000> : vector<4x8xf32>
    %36 = vector.multi_reduction <maximumf>, %35, %cst_19 [2] : vector<4x8x8xf32> to vector<4x8xf32>
    %37 = vector.shape_cast %36 : vector<4x8xf32> to vector<4x8x1xf32>
    %38 = vector.broadcast %37 : vector<4x8x1xf32> to vector<4x8x8xf32>
    %39 = arith.subf %35, %38 : vector<4x8x8xf32>
    %40 = math.exp %39 : vector<4x8x8xf32>
    %cst_20 = arith.constant dense<0.000000e+00> : vector<4x8xf32>
    %41 = vector.multi_reduction <add>, %40, %cst_20 [2] : vector<4x8x8xf32> to vector<4x8xf32>
    %42 = vector.shape_cast %41 : vector<4x8xf32> to vector<4x8x1xf32>
    %43 = tpu.reciprocal %42 {approx = true} : vector<4x8x1xf32> -> vector<4x8x1xf32>
    %44 = vector.broadcast %43 : vector<4x8x1xf32> to vector<4x8x8xf32>
    %45 = arith.mulf %40, %44 : vector<4x8x8xf32>
    %46 = arith.truncf %45 : vector<4x8x8xf32> to vector<4x8x8xbf16>
    "tpu.trace_start"() <{level = 10 : i32, message = "hst,htd->hsd"}> : () -> ()
    %cst_21 = arith.constant dense<0.000000e+00> : vector<4x8x32xf32>
    %47 = tpu.matmul %46, %29, %cst_21 {dimension_numbers = #tpu.dot_dimension_numbers<[2], [1], [1], [2], [0, 0, 0, 1, 1, 2], [0], [0]>} : vector<4x8x8xbf16>, vector<4x8x32xbf16>, vector<4x8x32xf32> -> vector<4x8x32xf32>
    "tpu.trace_stop"() : () -> ()
    %48 = tpu.transpose %47, [1, 0, 2] : vector<4x8x32xf32> -> vector<8x4x32xf32>
    %49 = vector.shape_cast %48 : vector<8x4x32xf32> to vector<8x128xf32>
    %50 = arith.truncf %49 : vector<8x128xf32> to vector<8x128xbf16>
    %cst_22 = arith.constant dense<0.000000e+00> : vector<8x128xf32>
    %51 = tpu.matmul %50, %19, %cst_22 {dimension_numbers = #tpu.dot_dimension_numbers<[1], [0], [0], [1], [0, 0, 1, 1], [], []>} : vector<8x128xbf16>, vector<128x128xbf16>, vector<8x128xf32> -> vector<8x128xf32>
    %52 = vector.broadcast %20 : vector<1x128xf32> to vector<8x128xf32>
    %53 = arith.addf %51, %52 : vector<8x128xf32>
    %54 = arith.addf %1, %53 : vector<8x128xf32>
    %c0_23 = arith.constant 0 : index
    %c0_24 = arith.constant 0 : index
    %55 = vector.load %arg8[%c0_23, %c0_24] : memref<1x128xf32, #tpu.memory_space<vmem>>, vector<1x128xf32>
    %c0_25 = arith.constant 0 : index
    %c0_26 = arith.constant 0 : index
    %56 = vector.load %arg9[%c0_25, %c0_26] : memref<1x128xf32, #tpu.memory_space<vmem>>, vector<1x128xf32>
    %cst_27 = arith.constant dense<0.000000e+00> : vector<8xf32>
    %57 = vector.multi_reduction <add>, %54, %cst_27 [1] : vector<8x128xf32> to vector<8xf32>
    %58 = vector.shape_cast %57 : vector<8xf32> to vector<8x1xf32>
    %cst_28 = arith.constant 1.280000e+02 : f32
    %59 = vector.broadcast %cst_28 : f32 to vector<8x1xf32>
    %60 = arith.divf %58, %59 : vector<8x1xf32>
    %61 = vector.broadcast %60 : vector<8x1xf32> to vector<8x128xf32>
    %62 = arith.subf %54, %61 : vector<8x128xf32>
    %63 = arith.mulf %62, %62 : vector<8x128xf32>
    %cst_29 = arith.constant dense<0.000000e+00> : vector<8xf32>
    %64 = vector.multi_reduction <add>, %63, %cst_29 [1] : vector<8x128xf32> to vector<8xf32>
    %65 = vector.shape_cast %64 : vector<8xf32> to vector<8x1xf32>
    %cst_30 = arith.constant 1.280000e+02 : f32
    %66 = vector.broadcast %cst_30 : f32 to vector<8x1xf32>
    %67 = arith.divf %65, %66 : vector<8x1xf32>
    %68 = vector.broadcast %60 : vector<8x1xf32> to vector<8x128xf32>
    %69 = arith.subf %54, %68 : vector<8x128xf32>
    %cst_31 = arith.constant 9.99999974E-6 : f32
    %70 = vector.broadcast %cst_31 : f32 to vector<8x1xf32>
    %71 = arith.addf %67, %70 : vector<8x1xf32>
    %72 = math.rsqrt %71 : vector<8x1xf32>
    %73 = vector.broadcast %72 : vector<8x1xf32> to vector<8x128xf32>
    %74 = arith.mulf %69, %73 : vector<8x128xf32>
    %75 = vector.broadcast %55 : vector<1x128xf32> to vector<8x128xf32>
    %76 = arith.mulf %74, %75 : vector<8x128xf32>
    %77 = vector.broadcast %56 : vector<1x128xf32> to vector<8x128xf32>
    %78 = arith.addf %76, %77 : vector<8x128xf32>
    %79 = arith.truncf %78 : vector<8x128xf32> to vector<8x128xbf16>
    %c0_32 = arith.constant 0 : index
    %c0_33 = arith.constant 0 : index
    %80 = vector.load %arg10[%c0_32, %c0_33] : memref<128x128xbf16, #tpu.memory_space<vmem>>, vector<128x128xbf16>
    %cst_34 = arith.constant dense<0.000000e+00> : vector<8x128xf32>
    %81 = tpu.matmul %79, %80, %cst_34 {dimension_numbers = #tpu.dot_dimension_numbers<[1], [0], [0], [1], [0, 0, 1, 1], [], []>} : vector<8x128xbf16>, vector<128x128xbf16>, vector<8x128xf32> -> vector<8x128xf32>
    %c0_35 = arith.constant 0 : index
    %c0_36 = arith.constant 0 : index
    %82 = vector.load %arg11[%c0_35, %c0_36] : memref<1x128xf32, #tpu.memory_space<vmem>>, vector<1x128xf32>
    %83 = vector.broadcast %82 : vector<1x128xf32> to vector<8x128xf32>
    %84 = arith.addf %81, %83 : vector<8x128xf32>
    %c0_37 = arith.constant 0 : index
    %c0_38 = arith.constant 0 : index
    %85 = vector.load %arg12[%c0_37, %c0_38] : memref<128x256xbf16, #tpu.memory_space<vmem>>, vector<128x256xbf16>
    %cst_39 = arith.constant dense<0.000000e+00> : vector<4x256xf32>
    %86 = tpu.matmul %10, %85, %cst_39 {dimension_numbers = #tpu.dot_dimension_numbers<[1], [0], [0], [1], [0, 0, 1, 1], [], []>} : vector<4x128xbf16>, vector<128x256xbf16>, vector<4x256xf32> -> vector<4x256xf32>
    %c0_40 = arith.constant 0 : index
    %c0_41 = arith.constant 0 : index
    %87 = vector.load %arg13[%c0_40, %c0_41] : memref<1x256xf32, #tpu.memory_space<vmem>>, vector<1x256xf32>
    %88 = vector.broadcast %87 : vector<1x256xf32> to vector<4x256xf32>
    %89 = arith.addf %86, %88 : vector<4x256xf32>
    %90 = vector.extract_strided_slice %89 {offsets = [0, 0], sizes = [4, 128], strides = [1, 1]} : vector<4x256xf32> to vector<4x128xf32>
    %91 = vector.extract_strided_slice %89 {offsets = [0, 128], sizes = [4, 128], strides = [1, 1]} : vector<4x256xf32> to vector<4x128xf32>
    %c0_42 = arith.constant 0 : index
    %c0_43 = arith.constant 0 : index
    %92 = vector.load %arg14[%c0_42, %c0_43] : memref<128x128xbf16, #tpu.memory_space<vmem>>, vector<128x128xbf16>
    %c0_44 = arith.constant 0 : index
    %c0_45 = arith.constant 0 : index
    %93 = vector.load %arg15[%c0_44, %c0_45] : memref<1x128xf32, #tpu.memory_space<vmem>>, vector<1x128xf32>
    %94 = vector.shape_cast %84 : vector<8x128xf32> to vector<8x4x32xf32>
    %95 = tpu.transpose %94, [1, 0, 2] : vector<8x4x32xf32> -> vector<4x8x32xf32>
    %96 = arith.truncf %95 : vector<4x8x32xf32> to vector<4x8x32xbf16>
    %97 = vector.shape_cast %90 : vector<4x128xf32> to vector<4x4x32xf32>
    %98 = tpu.transpose %97, [1, 0, 2] : vector<4x4x32xf32> -> vector<4x4x32xf32>
    %99 = arith.truncf %98 : vector<4x4x32xf32> to vector<4x4x32xbf16>
    %100 = vector.shape_cast %91 : vector<4x128xf32> to vector<4x4x32xf32>
    %101 = tpu.transpose %100, [1, 0, 2] : vector<4x4x32xf32> -> vector<4x4x32xf32>
    %102 = arith.truncf %101 : vector<4x4x32xf32> to vector<4x4x32xbf16>
    "tpu.trace_start"() <{level = 10 : i32, message = "hsd,htd->hst"}> : () -> ()
    %cst_46 = arith.constant dense<0.000000e+00> : vector<4x8x4xf32>
    %103 = tpu.matmul %96, %99, %cst_46 {dimension_numbers = #tpu.dot_dimension_numbers<[2], [2], [1], [1], [0, 0, 0, 1, 1, 1], [0], [0]>} : vector<4x8x32xbf16>, vector<4x4x32xbf16>, vector<4x8x4xf32> -> vector<4x8x4xf32>
    "tpu.trace_stop"() : () -> ()
    %cst_47 = arith.constant 0.176776692 : f32
    %104 = vector.broadcast %cst_47 : f32 to vector<4x8x4xf32>
    %105 = arith.mulf %103, %104 : vector<4x8x4xf32>
    %cst_48 = arith.constant dense<0xFF800000> : vector<4x8xf32>
    %106 = vector.multi_reduction <maximumf>, %105, %cst_48 [2] : vector<4x8x4xf32> to vector<4x8xf32>
    %107 = vector.shape_cast %106 : vector<4x8xf32> to vector<4x8x1xf32>
    %108 = vector.broadcast %107 : vector<4x8x1xf32> to vector<4x8x4xf32>
    %109 = arith.subf %105, %108 : vector<4x8x4xf32>
    %110 = math.exp %109 : vector<4x8x4xf32>
    %cst_49 = arith.constant dense<0.000000e+00> : vector<4x8xf32>
    %111 = vector.multi_reduction <add>, %110, %cst_49 [2] : vector<4x8x4xf32> to vector<4x8xf32>
    %112 = vector.shape_cast %111 : vector<4x8xf32> to vector<4x8x1xf32>
    %113 = tpu.reciprocal %112 {approx = true} : vector<4x8x1xf32> -> vector<4x8x1xf32>
    %114 = vector.broadcast %113 : vector<4x8x1xf32> to vector<4x8x4xf32>
    %115 = arith.mulf %110, %114 : vector<4x8x4xf32>
    %116 = arith.truncf %115 : vector<4x8x4xf32> to vector<4x8x4xbf16>
    "tpu.trace_start"() <{level = 10 : i32, message = "hst,htd->hsd"}> : () -> ()
    %cst_50 = arith.constant dense<0.000000e+00> : vector<4x8x32xf32>
    %117 = tpu.matmul %116, %102, %cst_50 {dimension_numbers = #tpu.dot_dimension_numbers<[2], [1], [1], [2], [0, 0, 0, 1, 1, 2], [0], [0]>} : vector<4x8x4xbf16>, vector<4x4x32xbf16>, vector<4x8x32xf32> -> vector<4x8x32xf32>
    "tpu.trace_stop"() : () -> ()
    %118 = tpu.transpose %117, [1, 0, 2] : vector<4x8x32xf32> -> vector<8x4x32xf32>
    %119 = vector.shape_cast %118 : vector<8x4x32xf32> to vector<8x128xf32>
    %120 = arith.truncf %119 : vector<8x128xf32> to vector<8x128xbf16>
    %cst_51 = arith.constant dense<0.000000e+00> : vector<8x128xf32>
    %121 = tpu.matmul %120, %92, %cst_51 {dimension_numbers = #tpu.dot_dimension_numbers<[1], [0], [0], [1], [0, 0, 1, 1], [], []>} : vector<8x128xbf16>, vector<128x128xbf16>, vector<8x128xf32> -> vector<8x128xf32>
    %122 = vector.broadcast %93 : vector<1x128xf32> to vector<8x128xf32>
    %123 = arith.addf %121, %122 : vector<8x128xf32>
    %124 = arith.addf %78, %123 : vector<8x128xf32>
    %c0_52 = arith.constant 0 : index
    %c0_53 = arith.constant 0 : index
    %125 = vector.load %arg16[%c0_52, %c0_53] : memref<1x128xf32, #tpu.memory_space<vmem>>, vector<1x128xf32>
    %c0_54 = arith.constant 0 : index
    %c0_55 = arith.constant 0 : index
    %126 = vector.load %arg17[%c0_54, %c0_55] : memref<1x128xf32, #tpu.memory_space<vmem>>, vector<1x128xf32>
    %cst_56 = arith.constant dense<0.000000e+00> : vector<8xf32>
    %127 = vector.multi_reduction <add>, %124, %cst_56 [1] : vector<8x128xf32> to vector<8xf32>
    %128 = vector.shape_cast %127 : vector<8xf32> to vector<8x1xf32>
    %cst_57 = arith.constant 1.280000e+02 : f32
    %129 = vector.broadcast %cst_57 : f32 to vector<8x1xf32>
    %130 = arith.divf %128, %129 : vector<8x1xf32>
    %131 = vector.broadcast %130 : vector<8x1xf32> to vector<8x128xf32>
    %132 = arith.subf %124, %131 : vector<8x128xf32>
    %133 = arith.mulf %132, %132 : vector<8x128xf32>
    %cst_58 = arith.constant dense<0.000000e+00> : vector<8xf32>
    %134 = vector.multi_reduction <add>, %133, %cst_58 [1] : vector<8x128xf32> to vector<8xf32>
    %135 = vector.shape_cast %134 : vector<8xf32> to vector<8x1xf32>
    %cst_59 = arith.constant 1.280000e+02 : f32
    %136 = vector.broadcast %cst_59 : f32 to vector<8x1xf32>
    %137 = arith.divf %135, %136 : vector<8x1xf32>
    %138 = vector.broadcast %130 : vector<8x1xf32> to vector<8x128xf32>
    %139 = arith.subf %124, %138 : vector<8x128xf32>
    %cst_60 = arith.constant 9.99999974E-6 : f32
    %140 = vector.broadcast %cst_60 : f32 to vector<8x1xf32>
    %141 = arith.addf %137, %140 : vector<8x1xf32>
    %142 = math.rsqrt %141 : vector<8x1xf32>
    %143 = vector.broadcast %142 : vector<8x1xf32> to vector<8x128xf32>
    %144 = arith.mulf %139, %143 : vector<8x128xf32>
    %145 = vector.broadcast %125 : vector<1x128xf32> to vector<8x128xf32>
    %146 = arith.mulf %144, %145 : vector<8x128xf32>
    %147 = vector.broadcast %126 : vector<1x128xf32> to vector<8x128xf32>
    %148 = arith.addf %146, %147 : vector<8x128xf32>
    %149 = arith.truncf %148 : vector<8x128xf32> to vector<8x128xbf16>
    %c0_61 = arith.constant 0 : index
    %c0_62 = arith.constant 0 : index
    %150 = vector.load %arg18[%c0_61, %c0_62] : memref<128x256xbf16, #tpu.memory_space<vmem>>, vector<128x256xbf16>
    %cst_63 = arith.constant dense<0.000000e+00> : vector<8x256xf32>
    %151 = tpu.matmul %149, %150, %cst_63 {dimension_numbers = #tpu.dot_dimension_numbers<[1], [0], [0], [1], [0, 0, 1, 1], [], []>} : vector<8x128xbf16>, vector<128x256xbf16>, vector<8x256xf32> -> vector<8x256xf32>
    %c0_64 = arith.constant 0 : index
    %c0_65 = arith.constant 0 : index
    %152 = vector.load %arg19[%c0_64, %c0_65] : memref<1x256xf32, #tpu.memory_space<vmem>>, vector<1x256xf32>
    %153 = vector.broadcast %152 : vector<1x256xf32> to vector<8x256xf32>
    %154 = arith.addf %151, %153 : vector<8x256xf32>
    %cst_66 = arith.constant 0.000000e+00 : f32
    %155 = vector.broadcast %cst_66 : f32 to vector<8x256xf32>
    %156 = arith.maximumf %154, %155 : vector<8x256xf32>
    %157 = arith.truncf %156 : vector<8x256xf32> to vector<8x256xbf16>
    %c0_67 = arith.constant 0 : index
    %c0_68 = arith.constant 0 : index
    %158 = vector.load %arg20[%c0_67, %c0_68] : memref<256x128xbf16, #tpu.memory_space<vmem>>, vector<256x128xbf16>
    %cst_69 = arith.constant dense<0.000000e+00> : vector<8x128xf32>
    %159 = tpu.matmul %157, %158, %cst_69 {dimension_numbers = #tpu.dot_dimension_numbers<[1], [0], [0], [1], [0, 0, 1, 1], [], []>} : vector<8x256xbf16>, vector<256x128xbf16>, vector<8x128xf32> -> vector<8x128xf32>
    %c0_70 = arith.constant 0 : index
    %c0_71 = arith.constant 0 : index
    %160 = vector.load %arg21[%c0_70, %c0_71] : memref<1x128xf32, #tpu.memory_space<vmem>>, vector<1x128xf32>
    %161 = vector.broadcast %160 : vector<1x128xf32> to vector<8x128xf32>
    %162 = arith.addf %159, %161 : vector<8x128xf32>
    %163 = arith.addf %148, %162 : vector<8x128xf32>
    %c0_72 = arith.constant 0 : index
    %c0_73 = arith.constant 0 : index
    %164 = vector.load %arg22[%c0_72, %c0_73] : memref<1x128xf32, #tpu.memory_space<vmem>>, vector<1x128xf32>
    %c0_74 = arith.constant 0 : index
    %c0_75 = arith.constant 0 : index
    %165 = vector.load %arg23[%c0_74, %c0_75] : memref<1x128xf32, #tpu.memory_space<vmem>>, vector<1x128xf32>
    %cst_76 = arith.constant dense<0.000000e+00> : vector<8xf32>
    %166 = vector.multi_reduction <add>, %163, %cst_76 [1] : vector<8x128xf32> to vector<8xf32>
    %167 = vector.shape_cast %166 : vector<8xf32> to vector<8x1xf32>
    %cst_77 = arith.constant 1.280000e+02 : f32
    %168 = vector.broadcast %cst_77 : f32 to vector<8x1xf32>
    %169 = arith.divf %167, %168 : vector<8x1xf32>
    %170 = vector.broadcast %169 : vector<8x1xf32> to vector<8x128xf32>
    %171 = arith.subf %163, %170 : vector<8x128xf32>
    %172 = arith.mulf %171, %171 : vector<8x128xf32>
    %cst_78 = arith.constant dense<0.000000e+00> : vector<8xf32>
    %173 = vector.multi_reduction <add>, %172, %cst_78 [1] : vector<8x128xf32> to vector<8xf32>
    %174 = vector.shape_cast %173 : vector<8xf32> to vector<8x1xf32>
    %cst_79 = arith.constant 1.280000e+02 : f32
    %175 = vector.broadcast %cst_79 : f32 to vector<8x1xf32>
    %176 = arith.divf %174, %175 : vector<8x1xf32>
    %177 = vector.broadcast %169 : vector<8x1xf32> to vector<8x128xf32>
    %178 = arith.subf %163, %177 : vector<8x128xf32>
    %cst_80 = arith.constant 9.99999974E-6 : f32
    %179 = vector.broadcast %cst_80 : f32 to vector<8x1xf32>
    %180 = arith.addf %176, %179 : vector<8x1xf32>
    %181 = math.rsqrt %180 : vector<8x1xf32>
    %182 = vector.broadcast %181 : vector<8x1xf32> to vector<8x128xf32>
    %183 = arith.mulf %178, %182 : vector<8x128xf32>
    %184 = vector.broadcast %164 : vector<1x128xf32> to vector<8x128xf32>
    %185 = arith.mulf %183, %184 : vector<8x128xf32>
    %186 = vector.broadcast %165 : vector<1x128xf32> to vector<8x128xf32>
    %187 = arith.addf %185, %186 : vector<8x128xf32>
    %c0_81 = arith.constant 0 : index
    %c0_82 = arith.constant 0 : index
    %c0_83 = arith.constant 0 : index
    %188 = vector.load %arg24[%c0_81, %c0_82, %c0_83] : memref<1x8x128xf32, #tpu.memory_space<vmem>>, vector<1x8x128xf32>
    %189 = vector.shape_cast %188 : vector<1x8x128xf32> to vector<8x128xf32>
    %190 = vector.shape_cast %187 : vector<8x128xf32> to vector<1x8x128xf32>
    tpu.vector_store %arg24[%c0_81, %c0_82, %c0_83], %190 {strides = array<i32>} : memref<1x8x128xf32, #tpu.memory_space<vmem>>, vector<1x8x128xf32>,
    return
  }
  func.func @transform_0(%arg0: i32) -> (i32, i32, i32) {
    %c0_i32 = arith.constant 0 : i32
    %c0_i32_0 = arith.constant 0 : i32
    %c0_i32_1 = arith.constant 0 : i32
    return %arg0, %c0_i32, %c0_i32_0 : i32, i32, i32
  }
  func.func @transform_1(%arg0: i32) -> (i32, i32, i32) {
    %c0_i32 = arith.constant 0 : i32
    %c0_i32_0 = arith.constant 0 : i32
    %c0_i32_1 = arith.constant 0 : i32
    return %arg0, %c0_i32, %c0_i32_0 : i32, i32, i32
  }
  func.func @transform_2(%arg0: i32) -> (i32, i32) {
    %c0_i32 = arith.constant 0 : i32
    %c0_i32_0 = arith.constant 0 : i32
    %c0_i32_1 = arith.constant 0 : i32
    return %c0_i32, %c0_i32_0 : i32, i32
  }
  func.func @transform_3(%arg0: i32) -> (i32, i32) {
    %c0_i32 = arith.constant 0 : i32
    %c0_i32_0 = arith.constant 0 : i32
    %c0_i32_1 = arith.constant 0 : i32
    return %c0_i32, %c0_i32_0 : i32, i32
  }
  func.func @transform_4(%arg0: i32) -> (i32, i32) {
    %c0_i32 = arith.constant 0 : i32
    %c0_i32_0 = arith.constant 0 : i32
    %c0_i32_1 = arith.constant 0 : i32
    return %c0_i32, %c0_i32_0 : i32, i32
  }
  func.func @transform_5(%arg0: i32) -> (i32, i32) {
    %c0_i32 = arith.constant 0 : i32
    %c0_i32_0 = arith.constant 0 : i32
    %c0_i32_1 = arith.constant 0 : i32
    return %c0_i32, %c0_i32_0 : i32, i32
  }
  func.func @transform_6(%arg0: i32) -> (i32, i32) {
    %c0_i32 = arith.constant 0 : i32
    %c0_i32_0 = arith.constant 0 : i32
    %c0_i32_1 = arith.constant 0 : i32
    return %c0_i32, %c0_i32_0 : i32, i32
  }
  func.func @transform_7(%arg0: i32) -> (i32, i32) {
    %c0_i32 = arith.constant 0 : i32
    %c0_i32_0 = arith.constant 0 : i32
    %c0_i32_1 = arith.constant 0 : i32
    return %c0_i32, %c0_i32_0 : i32, i32
  }
  func.func @transform_8(%arg0: i32) -> (i32, i32) {
    %c0_i32 = arith.constant 0 : i32
    %c0_i32_0 = arith.constant 0 : i32
    %c0_i32_1 = arith.constant 0 : i32
    return %c0_i32, %c0_i32_0 : i32, i32
  }
  func.func @transform_9(%arg0: i32) -> (i32, i32) {
    %c0_i32 = arith.constant 0 : i32
    %c0_i32_0 = arith.constant 0 : i32
    %c0_i32_1 = arith.constant 0 : i32
    return %c0_i32, %c0_i32_0 : i32, i32
  }
  func.func @transform_10(%arg0: i32) -> (i32, i32) {
    %c0_i32 = arith.constant 0 : i32
    %c0_i32_0 = arith.constant 0 : i32
    %c0_i32_1 = arith.constant 0 : i32
    return %c0_i32, %c0_i32_0 : i32, i32
  }
  func.func @transform_11(%arg0: i32) -> (i32, i32) {
    %c0_i32 = arith.constant 0 : i32
    %c0_i32_0 = arith.constant 0 : i32
    %c0_i32_1 = arith.constant 0 : i32
    return %c0_i32, %c0_i32_0 : i32, i32
  }
  func.func @transform_12(%arg0: i32) -> (i32, i32) {
    %c0_i32 = arith.constant 0 : i32
    %c0_i32_0 = arith.constant 0 : i32
    %c0_i32_1 = arith.constant 0 : i32
    return %c0_i32, %c0_i32_0 : i32, i32
  }
  func.func @transform_13(%arg0: i32) -> (i32, i32) {
    %c0_i32 = arith.constant 0 : i32
    %c0_i32_0 = arith.constant 0 : i32
    %c0_i32_1 = arith.constant 0 : i32
    return %c0_i32, %c0_i32_0 : i32, i32
  }
  func.func @transform_14(%arg0: i32) -> (i32, i32) {
    %c0_i32 = arith.constant 0 : i32
    %c0_i32_0 = arith.constant 0 : i32
    %c0_i32_1 = arith.constant 0 : i32
    return %c0_i32, %c0_i32_0 : i32, i32
  }
  func.func @transform_15(%arg0: i32) -> (i32, i32) {
    %c0_i32 = arith.constant 0 : i32
    %c0_i32_0 = arith.constant 0 : i32
    %c0_i32_1 = arith.constant 0 : i32
    return %c0_i32, %c0_i32_0 : i32, i32
  }
  func.func @transform_16(%arg0: i32) -> (i32, i32) {
    %c0_i32 = arith.constant 0 : i32
    %c0_i32_0 = arith.constant 0 : i32
    %c0_i32_1 = arith.constant 0 : i32
    return %c0_i32, %c0_i32_0 : i32, i32
  }
  func.func @transform_17(%arg0: i32) -> (i32, i32) {
    %c0_i32 = arith.constant 0 : i32
    %c0_i32_0 = arith.constant 0 : i32
    %c0_i32_1 = arith.constant 0 : i32
    return %c0_i32, %c0_i32_0 : i32, i32
  }
  func.func @transform_18(%arg0: i32) -> (i32, i32) {
    %c0_i32 = arith.constant 0 : i32
    %c0_i32_0 = arith.constant 0 : i32
    %c0_i32_1 = arith.constant 0 : i32
    return %c0_i32, %c0_i32_0 : i32, i32
  }
  func.func @transform_19(%arg0: i32) -> (i32, i32) {
    %c0_i32 = arith.constant 0 : i32
    %c0_i32_0 = arith.constant 0 : i32
    %c0_i32_1 = arith.constant 0 : i32
    return %c0_i32, %c0_i32_0 : i32, i32
  }
  func.func @transform_20(%arg0: i32) -> (i32, i32) {
    %c0_i32 = arith.constant 0 : i32
    %c0_i32_0 = arith.constant 0 : i32
    %c0_i32_1 = arith.constant 0 : i32
    return %c0_i32, %c0_i32_0 : i32, i32
  }
  func.func @transform_21(%arg0: i32) -> (i32, i32) {
    %c0_i32 = arith.constant 0 : i32
    %c0_i32_0 = arith.constant 0 : i32
    %c0_i32_1 = arith.constant 0 : i32
    return %c0_i32, %c0_i32_0 : i32, i32
  }
  func.func @transform_22(%arg0: i32) -> (i32, i32) {
    %c0_i32 = arith.constant 0 : i32
    %c0_i32_0 = arith.constant 0 : i32
    %c0_i32_1 = arith.constant 0 : i32
    return %c0_i32, %c0_i32_0 : i32, i32
  }
  func.func @transform_23(%arg0: i32) -> (i32, i32, i32) {
    %c0_i32 = arith.constant 0 : i32
    %c0_i32_0 = arith.constant 0 : i32
    %c0_i32_1 = arith.constant 0 : i32
    return %arg0, %c0_i32, %c0_i32_0 : i32, i32, i32
  }
}

</mosaic_0001>

<llo_original>
// kernel: decoder_layer_forward.1
$region0: #{decoder_layer_forward.1}
  #allocation0 [shape = 'u32[]', space=smem, size = 0x4, offset = 0x4, fixed_abs, tag = 'smem constant byte address 0x4 - core index']
  #allocation1 [shape = 'u32[144,128]{1,0:T(1,128)}', space=vmem, size = 0x12000, scoped, tag = 'internal scratch']
  %s0 = inlined_call_operand.vmem [shape: f32[2,8,128], index: 0, kind: input, shape index: {}]
  %s1 = inlined_call_operand.vmem [shape: f32[2,4,128], index: 1, kind: input, shape index: {}]
  %s2 = inlined_call_operand.vmem [shape: f32[8,8], index: 2, kind: input, shape index: {}]
  %s3 = inlined_call_operand.hbm [shape: bf16[128,384], index: 3, kind: input, shape index: {}]
  %s4 = inlined_call_operand.vmem [shape: f32[1,384], index: 4, kind: input, shape index: {}]
  %s5 = inlined_call_operand.hbm [shape: bf16[128,128], index: 5, kind: input, shape index: {}]
  %s6 = inlined_call_operand.vmem [shape: f32[1,128], index: 6, kind: input, shape index: {}]
  %s7 = inlined_call_operand.hbm [shape: f32[1,128], index: 7, kind: input, shape index: {}]
  %s8 = inlined_call_operand.hbm [shape: f32[1,128], index: 8, kind: input, shape index: {}]
  %s9 = inlined_call_operand.hbm [shape: bf16[128,128], index: 9, kind: input, shape index: {}]
  %s10 = inlined_call_operand.hbm [shape: f32[1,128], index: 10, kind: input, shape index: {}]
  %s11 = inlined_call_operand.hbm [shape: bf16[128,256], index: 11, kind: input, shape index: {}]
  %s12 = inlined_call_operand.vmem [shape: f32[1,256], index: 12, kind: input, shape index: {}]
  %s13 = inlined_call_operand.hbm [shape: bf16[128,128], index: 13, kind: input, shape index: {}]
  %s14 = inlined_call_operand.hbm [shape: f32[1,128], index: 14, kind: input, shape index: {}]
  %s15 = inlined_call_operand.vmem [shape: f32[1,128], index: 15, kind: input, shape index: {}]
  %s16 = inlined_call_operand.hbm [shape: f32[1,128], index: 16, kind: input, shape index: {}]
  %s17 = inlined_call_operand.hbm [shape: bf16[128,256], index: 17, kind: input, shape index: {}]
  %s18 = inlined_call_operand.hbm [shape: f32[1,256], index: 18, kind: input, shape index: {}]
  %s19 = inlined_call_operand.hbm [shape: bf16[256,128], index: 19, kind: input, shape index: {}]
  %s20 = inlined_call_operand.hbm [shape: f32[1,128], index: 20, kind: input, shape index: {}]
  %s21 = inlined_call_operand.vmem [shape: f32[1,128], index: 21, kind: input, shape index: {}]
  %s22 = inlined_call_operand.vmem [shape: f32[1,128], index: 22, kind: input, shape index: {}]
  %s23 = inlined_call_operand.hbm [shape: f32[2,8,128], index: 23, kind: output, shape index: {}]
  %s24 = sld [smem:[#allocation0]]
  $region181: #{decoder_layer_forward.1} parent=0
    _
  %s26 = ssub.s32 1, %s24
  %s27 = scalar_select 0, %s26, %s24
  $region1: #{decoder_layer_forward.1} parent=0
    #allocation2 [shape = 'u8[98304]{0}', space=vmem, size = 0x18000, scoped, tag = 'input window, operand 3, single buffered']
    #allocation3 [shape = 's32[2]{0}', space=sflag, size = 0x8, scoped, tag = 'scoped memory for decoder_layer_forward.1']
    #allocation4 [shape = 's32[2]{0}', space=sflag, size = 0x8, scoped, tag = 'scoped memory for decoder_layer_forward.1']
    #allocation5 [shape = 'u8[32768]{0}', space=vmem, size = 0x8000, scoped, tag = 'input window, operand 5, single buffered']
    #allocation6 [shape = 's32[1]{0}', space=sflag, size = 0x4, scoped, tag = 'scoped memory for decoder_layer_forward.1']
    #allocation7 [shape = 'u8[512]{0}', space=vmem, size = 0x400, scoped, tag = 'input window, operand 7, single buffered']
    #allocation8 [shape = 'u8[512]{0}', space=vmem, size = 0x400, scoped, tag = 'input window, operand 8, single buffered']
    #allocation9 [shape = 's32[1]{0}', space=sflag, size = 0x4, scoped, tag = 'scoped memory for decoder_layer_forward.1']
    #allocation10 [shape = 'u8[32768]{0}', space=vmem, size = 0x8000, scoped, tag = 'input window, operand 9, single buffered']
    #allocation11 [shape = 'u8[512]{0}', space=vmem, size = 0x400, scoped, tag = 'input window, operand 10, single buffered']
    #allocation12 [shape = 's32[1]{0}', space=sflag, size = 0x4, scoped, tag = 'scoped memory for decoder_layer_forward.1']
    #allocation13 [shape = 'u8[65536]{0}', space=vmem, size = 0x10000, scoped, tag = 'input window, operand 11, single buffered']
    #allocation14 [shape = 'u8[32768]{0}', space=vmem, size = 0x8000, scoped, tag = 'input window, operand 13, single buffered']
    #allocation15 [shape = 's32[1]{0}', space=sflag, size = 0x4, scoped, tag = 'scoped memory for decoder_layer_forward.1']
    #allocation16 [shape = 'u8[512]{0}', space=vmem, size = 0x400, scoped, tag = 'input window, operand 14, single buffered']
    #allocation17 [shape = 'u8[512]{0}', space=vmem, size = 0x400, scoped, tag = 'input window, operand 16, single buffered']
    #allocation18 [shape = 's32[1]{0}', space=sflag, size = 0x4, scoped, tag = 'scoped memory for decoder_layer_forward.1']
    #allocation19 [shape = 'u8[65536]{0}', space=vmem, size = 0x10000, scoped, tag = 'input window, operand 17, single buffered']
    #allocation20 [shape = 'u8[1024]{0}', space=vmem, size = 0x400, scoped, tag = 'input window, operand 18, single buffered']
    #allocation21 [shape = 's32[1]{0}', space=sflag, size = 0x4, scoped, tag = 'scoped memory for decoder_layer_forward.1']
    #allocation22 [shape = 'u8[65536]{0}', space=vmem, size = 0x10000, scoped, tag = 'input window, operand 19, single buffered']
    #allocation23 [shape = 'u8[512]{0}', space=vmem, size = 0x400, scoped, tag = 'input window, operand 20, single buffered']
    #allocation24 [shape = 's32[1]{0}', space=sflag, size = 0x4, scoped, tag = 'scoped memory for decoder_layer_forward.1']
    #allocation25 [shape = 'u8[8192]{0}', space=vmem, size = 0x2000, scoped, tag = 'output window, operand 0']
    %28 = vsyncpa [#allocation3], 0
    %29 = vsyncpa [#allocation6], 0
    %30 = vsyncpa [#allocation9], 0
    %31 = vsyncpa [#allocation12], 0
    %32 = vsyncpa [#allocation15], 0
    %33 = vsyncpa [#allocation18], 0
    %34 = vsyncpa [#allocation21], 0
    %35 = vsyncpa [#allocation24], 0
    %36 = vsyncpa [#allocation4], 0
    %s37 = scalar_lea.sflag [#allocation4], 1
    %38 = vsyncpa %s37, 0
    loop: start=0, step=1, limit=4
    $region2: #{decoder_layer_forward.1} parent=1 // loop_pre_header
      _
    $region3: #{decoder_layer_forward.1} parent=1 // loop_header
      %s40 = sphi 0, %s44
      %p41 = scmp.ge.s32.totalorder %s40, 4
      %s50 = sphi 0, %s52
      %s53 = sphi 0, %s50
      %s54 = sphi 0, %s53
      %s70 = sphi 0, %s54
      %s76 = sphi 0, %s78
      %s79 = sphi 0, %s76
      %s80 = sphi 0, %s79
      %s96 = sphi 0, %s80
      %s100 = sphi 0, %s100
      %s102 = sphi 0, %s100
      %s103 = sphi 0, %s102
      %s117 = sphi 0, %s103
      %s121 = sphi 0, %s121
      %s123 = sphi 0, %s121
      %s124 = sphi 0, %s123
      %s138 = sphi 0, %s124
      %s142 = sphi 0, %s142
      %s144 = sphi 0, %s142
      %s145 = sphi 0, %s144
      %s159 = sphi 0, %s145
      %s163 = sphi 0, %s163
      %s165 = sphi 0, %s163
      %s166 = sphi 0, %s165
      %s180 = sphi 0, %s166
      %s184 = sphi 0, %s184
      %s186 = sphi 0, %s184
      %s187 = sphi 0, %s186
      %s201 = sphi 0, %s187
      %s205 = sphi 0, %s205
      %s207 = sphi 0, %s205
      %s208 = sphi 0, %s207
      %s222 = sphi 0, %s208
      %s226 = sphi 0, %s226
      %s228 = sphi 0, %s226
      %s229 = sphi 0, %s228
      %s243 = sphi 0, %s229
      %s247 = sphi 0, %s247
      %s249 = sphi 0, %s247
      %s250 = sphi 0, %s249
      %s264 = sphi 0, %s250
      %s268 = sphi 0, %s268
      %s270 = sphi 0, %s268
      %s271 = sphi 0, %s270
      %s285 = sphi 0, %s271
      %s289 = sphi 0, %s289
      %s291 = sphi 0, %s289
      %s292 = sphi 0, %s291
      %s306 = sphi 0, %s292
      %s310 = sphi 0, %s310
      %s312 = sphi 0, %s310
      %s313 = sphi 0, %s312
      %s327 = sphi 0, %s313
      %s331 = sphi 0, %s331
      %s333 = sphi 0, %s331
      %s334 = sphi 0, %s333
      %s348 = sphi 0, %s334
      %s352 = sphi 0, %s352
      %s354 = sphi 0, %s352
      %s355 = sphi 0, %s354
      %s369 = sphi 0, %s355
      %s373 = sphi 0, %s373
      %s375 = sphi 0, %s373
      %s376 = sphi 0, %s375
      %s390 = sphi 0, %s376
      %s394 = sphi 0, %s394
      %s396 = sphi 0, %s394
      %s397 = sphi 0, %s396
      %s411 = sphi 0, %s397
      %s415 = sphi 0, %s415
      %s417 = sphi 0, %s415
      %s418 = sphi 0, %s417
      %s432 = sphi 0, %s418
      %s436 = sphi 0, %s436
      %s438 = sphi 0, %s436
      %s439 = sphi 0, %s438
      %s453 = sphi 0, %s439
      %s457 = sphi 0, %s457
      %s459 = sphi 0, %s457
      %s460 = sphi 0, %s459
      %s474 = sphi 0, %s460
      %s478 = sphi 0, %s478
      %s480 = sphi 0, %s478
      %s481 = sphi 0, %s480
      %s495 = sphi 0, %s481
      %s499 = sphi 0, %s499
      %s501 = sphi 0, %s499
      %s502 = sphi 0, %s501
      %s516 = sphi 0, %s502
      %s520 = sphi 0, %s520
      %s522 = sphi 0, %s520
      %s523 = sphi 0, %s522
      %s537 = sphi 0, %s523
      %s543 = sphi 0, %s545
      %s546 = sphi 0, %s543
      %s547 = sphi 0, %s546
      %s563 = sphi 0, %s547
    $region4: #{decoder_layer_forward.1} parent=1 // loop_header_branch
      %43 = sbr.rel (%p41) target = $region8
    $region5: #{decoder_layer_forward.1} parent=1 // loop_body
      %s45 = ssub.s32 %s40, 1
      %s46 = ssub.s32 %s40, 2
      %s47 = sadd.s32 %s40, 1
      %s48 = ssub.s32 %s40, %s47
      %p49 = scmp.eq.s32.totalorder %s48, 0
      %s51 = sadd.s32 %s50, 1
      %s52 = scalar_select %p49, %s50, %s51
      %p55 = pneg %p49
      %p56 = scmp.eq.s32.totalorder %s40, 1
      %p57 = por %p55, %p56
      %p58 = scmp.ne.s32.totalorder %s50, %s53
      %p59 = scmp.eq.s32.totalorder %s40, 0
      %p60 = por %p58, %p59
      %p61 = scmp.ne.s32.totalorder %s50, %s53
      %p62 = scmp.eq.s32.totalorder %s45, 1
      %p63 = por %p61, %p62
      %p64 = scmp.ne.s32.totalorder %s53, %s54
      %p65 = scmp.eq.s32.totalorder %s45, 0
      %p66 = por %p64, %p65
      %p67 = scmp.ne.s32.totalorder %s53, %s54
      %p68 = scmp.eq.s32.totalorder %s46, 1
      %p69 = por %p67, %p68
      %p71 = scmp.ne.s32.totalorder %s54, %s70
      %p72 = scmp.eq.s32.totalorder %s46, 0
      %p73 = por %p71, %p72
      %s74 = ssub.s32 %s40, %s47
      %p75 = scmp.eq.s32.totalorder %s74, 0
      %s77 = sadd.s32 %s76, 1
      %s78 = scalar_select %p75, %s76, %s77
      %p81 = pneg %p75
      %p82 = scmp.eq.s32.totalorder %s40, 1
      %p83 = por %p81, %p82
      %p84 = scmp.ne.s32.totalorder %s76, %s79
      %p85 = scmp.eq.s32.totalorder %s40, 0
      %p86 = por %p84, %p85
      %p87 = scmp.ne.s32.totalorder %s76, %s79
      %p88 = scmp.eq.s32.totalorder %s45, 1
      %p89 = por %p87, %p88
      %p90 = scmp.ne.s32.totalorder %s79, %s80
      %p91 = scmp.eq.s32.totalorder %s45, 0
      %p92 = por %p90, %p91
      %p93 = scmp.ne.s32.totalorder %s79, %s80
      %p94 = scmp.eq.s32.totalorder %s46, 1
      %p95 = por %p93, %p94
      %p97 = scmp.ne.s32.totalorder %s80, %s96
      %p98 = scmp.eq.s32.totalorder %s46, 0
      %p99 = por %p97, %p98
      %s101 = sadd.s32 %s100, 1
      %p104 = scmp.eq.s32.totalorder %s40, 1
      %p105 = scmp.ne.s32.totalorder %s100, %s102
      %p106 = scmp.eq.s32.totalorder %s40, 0
      %p107 = por %p105, %p106
      %p108 = scmp.ne.s32.totalorder %s100, %s102
      %p109 = scmp.eq.s32.totalorder %s45, 1
      %p110 = por %p108, %p109
      %p111 = scmp.ne.s32.totalorder %s102, %s103
      %p112 = scmp.eq.s32.totalorder %s45, 0
      %p113 = por %p111, %p112
      %p114 = scmp.ne.s32.totalorder %s102, %s103
      %p115 = scmp.eq.s32.totalorder %s46, 1
      %p116 = por %p114, %p115
      %p118 = scmp.ne.s32.totalorder %s103, %s117
      %p119 = scmp.eq.s32.totalorder %s46, 0
      %p120 = por %p118, %p119
      %s122 = sadd.s32 %s121, 1
      %p125 = scmp.eq.s32.totalorder %s40, 1
      %p126 = scmp.ne.s32.totalorder %s121, %s123
      %p127 = scmp.eq.s32.totalorder %s40, 0
      %p128 = por %p126, %p127
      %p129 = scmp.ne.s32.totalorder %s121, %s123
      %p130 = scmp.eq.s32.totalorder %s45, 1
      %p131 = por %p129, %p130
      %p132 = scmp.ne.s32.totalorder %s123, %s124
      %p133 = scmp.eq.s32.totalorder %s45, 0
      %p134 = por %p132, %p133
      %p135 = scmp.ne.s32.totalorder %s123, %s124
      %p136 = scmp.eq.s32.totalorder %s46, 1
      %p137 = por %p135, %p136
      %p139 = scmp.ne.s32.totalorder %s124, %s138
      %p140 = scmp.eq.s32.totalorder %s46, 0
      %p141 = por %p139, %p140
      %s143 = sadd.s32 %s142, 1
      %p146 = scmp.eq.s32.totalorder %s40, 1
      %p147 = scmp.ne.s32.totalorder %s142, %s144
      %p148 = scmp.eq.s32.totalorder %s40, 0
      %p149 = por %p147, %p148
      %p150 = scmp.ne.s32.totalorder %s142, %s144
      %p151 = scmp.eq.s32.totalorder %s45, 1
      %p152 = por %p150, %p151
      %p153 = scmp.ne.s32.totalorder %s144, %s145
      %p154 = scmp.eq.s32.totalorder %s45, 0
      %p155 = por %p153, %p154
      %p156 = scmp.ne.s32.totalorder %s144, %s145
      %p157 = scmp.eq.s32.totalorder %s46, 1
      %p158 = por %p156, %p157
      %p160 = scmp.ne.s32.totalorder %s145, %s159
      %p161 = scmp.eq.s32.totalorder %s46, 0
      %p162 = por %p160, %p161
      %s164 = sadd.s32 %s163, 1
      %p167 = scmp.eq.s32.totalorder %s40, 1
      %p168 = scmp.ne.s32.totalorder %s163, %s165
      %p169 = scmp.eq.s32.totalorder %s40, 0
      %p170 = por %p168, %p169
      %p171 = scmp.ne.s32.totalorder %s163, %s165
      %p172 = scmp.eq.s32.totalorder %s45, 1
      %p173 = por %p171, %p172
      %p174 = scmp.ne.s32.totalorder %s165, %s166
      %p175 = scmp.eq.s32.totalorder %s45, 0
      %p176 = por %p174, %p175
      %p177 = scmp.ne.s32.totalorder %s165, %s166
      %p178 = scmp.eq.s32.totalorder %s46, 1
      %p179 = por %p177, %p178
      %p181 = scmp.ne.s32.totalorder %s166, %s180
      %p182 = scmp.eq.s32.totalorder %s46, 0
      %p183 = por %p181, %p182
      %s185 = sadd.s32 %s184, 1
      %p188 = scmp.eq.s32.totalorder %s40, 1
      %p189 = scmp.ne.s32.totalorder %s184, %s186
      %p190 = scmp.eq.s32.totalorder %s40, 0
      %p191 = por %p189, %p190
      %p192 = scmp.ne.s32.totalorder %s184, %s186
      %p193 = scmp.eq.s32.totalorder %s45, 1
      %p194 = por %p192, %p193
      %p195 = scmp.ne.s32.totalorder %s186, %s187
      %p196 = scmp.eq.s32.totalorder %s45, 0
      %p197 = por %p195, %p196
      %p198 = scmp.ne.s32.totalorder %s186, %s187
      %p199 = scmp.eq.s32.totalorder %s46, 1
      %p200 = por %p198, %p199
      %p202 = scmp.ne.s32.totalorder %s187, %s201
      %p203 = scmp.eq.s32.totalorder %s46, 0
      %p204 = por %p202, %p203
      %s206 = sadd.s32 %s205, 1
      %p209 = scmp.eq.s32.totalorder %s40, 1
      %p210 = scmp.ne.s32.totalorder %s205, %s207
      %p211 = scmp.eq.s32.totalorder %s40, 0
      %p212 = por %p210, %p211
      %p213 = scmp.ne.s32.totalorder %s205, %s207
      %p214 = scmp.eq.s32.totalorder %s45, 1
      %p215 = por %p213, %p214
      %p216 = scmp.ne.s32.totalorder %s207, %s208
      %p217 = scmp.eq.s32.totalorder %s45, 0
      %p218 = por %p216, %p217
      %p219 = scmp.ne.s32.totalorder %s207, %s208
      %p220 = scmp.eq.s32.totalorder %s46, 1
      %p221 = por %p219, %p220
      %p223 = scmp.ne.s32.totalorder %s208, %s222
      %p224 = scmp.eq.s32.totalorder %s46, 0
      %p225 = por %p223, %p224
      %s227 = sadd.s32 %s226, 1
      %p230 = scmp.eq.s32.totalorder %s40, 1
      %p231 = scmp.ne.s32.totalorder %s226, %s228
      %p232 = scmp.eq.s32.totalorder %s40, 0
      %p233 = por %p231, %p232
      %p234 = scmp.ne.s32.totalorder %s226, %s228
      %p235 = scmp.eq.s32.totalorder %s45, 1
      %p236 = por %p234, %p235
      %p237 = scmp.ne.s32.totalorder %s228, %s229
      %p238 = scmp.eq.s32.totalorder %s45, 0
      %p239 = por %p237, %p238
      %p240 = scmp.ne.s32.totalorder %s228, %s229
      %p241 = scmp.eq.s32.totalorder %s46, 1
      %p242 = por %p240, %p241
      %p244 = scmp.ne.s32.totalorder %s229, %s243
      %p245 = scmp.eq.s32.totalorder %s46, 0
      %p246 = por %p244, %p245
      %s248 = sadd.s32 %s247, 1
      %p251 = scmp.eq.s32.totalorder %s40, 1
      %p252 = scmp.ne.s32.totalorder %s247, %s249
      %p253 = scmp.eq.s32.totalorder %s40, 0
      %p254 = por %p252, %p253
      %p255 = scmp.ne.s32.totalorder %s247, %s249
      %p256 = scmp.eq.s32.totalorder %s45, 1
      %p257 = por %p255, %p256
      %p258 = scmp.ne.s32.totalorder %s249, %s250
      %p259 = scmp.eq.s32.totalorder %s45, 0
      %p260 = por %p258, %p259
      %p261 = scmp.ne.s32.totalorder %s249, %s250
      %p262 = scmp.eq.s32.totalorder %s46, 1
      %p263 = por %p261, %p262
      %p265 = scmp.ne.s32.totalorder %s250, %s264
      %p266 = scmp.eq.s32.totalorder %s46, 0
      %p267 = por %p265, %p266
      %s269 = sadd.s32 %s268, 1
      %p272 = scmp.eq.s32.totalorder %s40, 1
      %p273 = scmp.ne.s32.totalorder %s268, %s270
      %p274 = scmp.eq.s32.totalorder %s40, 0
      %p275 = por %p273, %p274
      %p276 = scmp.ne.s32.totalorder %s268, %s270
      %p277 = scmp.eq.s32.totalorder %s45, 1
      %p278 = por %p276, %p277
      %p279 = scmp.ne.s32.totalorder %s270, %s271
      %p280 = scmp.eq.s32.totalorder %s45, 0
      %p281 = por %p279, %p280
      %p282 = scmp.ne.s32.totalorder %s270, %s271
      %p283 = scmp.eq.s32.totalorder %s46, 1
      %p284 = por %p282, %p283
      %p286 = scmp.ne.s32.totalorder %s271, %s285
      %p287 = scmp.eq.s32.totalorder %s46, 0
      %p288 = por %p286, %p287
      %s290 = sadd.s32 %s289, 1
      %p293 = scmp.eq.s32.totalorder %s40, 1
      %p294 = scmp.ne.s32.totalorder %s289, %s291
      %p295 = scmp.eq.s32.totalorder %s40, 0
      %p296 = por %p294, %p295
      %p297 = scmp.ne.s32.totalorder %s289, %s291
      %p298 = scmp.eq.s32.totalorder %s45, 1
      %p299 = por %p297, %p298
      %p300 = scmp.ne.s32.totalorder %s291, %s292
      %p301 = scmp.eq.s32.totalorder %s45, 0
      %p302 = por %p300, %p301
      %p303 = scmp.ne.s32.totalorder %s291, %s292
      %p304 = scmp.eq.s32.totalorder %s46, 1
      %p305 = por %p303, %p304
      %p307 = scmp.ne.s32.totalorder %s292, %s306
      %p308 = scmp.eq.s32.totalorder %s46, 0
      %p309 = por %p307, %p308
      %s311 = sadd.s32 %s310, 1
      %p314 = scmp.eq.s32.totalorder %s40, 1
      %p315 = scmp.ne.s32.totalorder %s310, %s312
      %p316 = scmp.eq.s32.totalorder %s40, 0
      %p317 = por %p315, %p316
      %p318 = scmp.ne.s32.totalorder %s310, %s312
      %p319 = scmp.eq.s32.totalorder %s45, 1
      %p320 = por %p318, %p319
      %p321 = scmp.ne.s32.totalorder %s312, %s313
      %p322 = scmp.eq.s32.totalorder %s45, 0
      %p323 = por %p321, %p322
      %p324 = scmp.ne.s32.totalorder %s312, %s313
      %p325 = scmp.eq.s32.totalorder %s46, 1
      %p326 = por %p324, %p325
      %p328 = scmp.ne.s32.totalorder %s313, %s327
      %p329 = scmp.eq.s32.totalorder %s46, 0
      %p330 = por %p328, %p329
      %s332 = sadd.s32 %s331, 1
      %p335 = scmp.eq.s32.totalorder %s40, 1
      %p336 = scmp.ne.s32.totalorder %s331, %s333
      %p337 = scmp.eq.s32.totalorder %s40, 0
      %p338 = por %p336, %p337
      %p339 = scmp.ne.s32.totalorder %s331, %s333
      %p340 = scmp.eq.s32.totalorder %s45, 1
      %p341 = por %p339, %p340
      %p342 = scmp.ne.s32.totalorder %s333, %s334
      %p343 = scmp.eq.s32.totalorder %s45, 0
      %p344 = por %p342, %p343
      %p345 = scmp.ne.s32.totalorder %s333, %s334
      %p346 = scmp.eq.s32.totalorder %s46, 1
      %p347 = por %p345, %p346
      %p349 = scmp.ne.s32.totalorder %s334, %s348
      %p350 = scmp.eq.s32.totalorder %s46, 0
      %p351 = por %p349, %p350
      %s353 = sadd.s32 %s352, 1
      %p356 = scmp.eq.s32.totalorder %s40, 1
      %p357 = scmp.ne.s32.totalorder %s352, %s354
      %p358 = scmp.eq.s32.totalorder %s40, 0
      %p359 = por %p357, %p358
      %p360 = scmp.ne.s32.totalorder %s352, %s354
      %p361 = scmp.eq.s32.totalorder %s45, 1
      %p362 = por %p360, %p361
      %p363 = scmp.ne.s32.totalorder %s354, %s355
      %p364 = scmp.eq.s32.totalorder %s45, 0
      %p365 = por %p363, %p364
      %p366 = scmp.ne.s32.totalorder %s354, %s355
      %p367 = scmp.eq.s32.totalorder %s46, 1
      %p368 = por %p366, %p367
      %p370 = scmp.ne.s32.totalorder %s355, %s369
      %p371 = scmp.eq.s32.totalorder %s46, 0
      %p372 = por %p370, %p371
      %s374 = sadd.s32 %s373, 1
      %p377 = scmp.eq.s32.totalorder %s40, 1
      %p378 = scmp.ne.s32.totalorder %s373, %s375
      %p379 = scmp.eq.s32.totalorder %s40, 0
      %p380 = por %p378, %p379
      %p381 = scmp.ne.s32.totalorder %s373, %s375
      %p382 = scmp.eq.s32.totalorder %s45, 1
      %p383 = por %p381, %p382
      %p384 = scmp.ne.s32.totalorder %s375, %s376
      %p385 = scmp.eq.s32.totalorder %s45, 0
      %p386 = por %p384, %p385
      %p387 = scmp.ne.s32.totalorder %s375, %s376
      %p388 = scmp.eq.s32.totalorder %s46, 1
      %p389 = por %p387, %p388
      %p391 = scmp.ne.s32.totalorder %s376, %s390
      %p392 = scmp.eq.s32.totalorder %s46, 0
      %p393 = por %p391, %p392
      %s395 = sadd.s32 %s394, 1
      %p398 = scmp.eq.s32.totalorder %s40, 1
      %p399 = scmp.ne.s32.totalorder %s394, %s396
      %p400 = scmp.eq.s32.totalorder %s40, 0
      %p401 = por %p399, %p400
      %p402 = scmp.ne.s32.totalorder %s394, %s396
      %p403 = scmp.eq.s32.totalorder %s45, 1
      %p404 = por %p402, %p403
      %p405 = scmp.ne.s32.totalorder %s396, %s397
      %p406 = scmp.eq.s32.totalorder %s45, 0
      %p407 = por %p405, %p406
      %p408 = scmp.ne.s32.totalorder %s396, %s397
      %p409 = scmp.eq.s32.totalorder %s46, 1
      %p410 = por %p408, %p409
      %p412 = scmp.ne.s32.totalorder %s397, %s411
      %p413 = scmp.eq.s32.totalorder %s46, 0
      %p414 = por %p412, %p413
      %s416 = sadd.s32 %s415, 1
      %p419 = scmp.eq.s32.totalorder %s40, 1
      %p420 = scmp.ne.s32.totalorder %s415, %s417
      %p421 = scmp.eq.s32.totalorder %s40, 0
      %p422 = por %p420, %p421
      %p423 = scmp.ne.s32.totalorder %s415, %s417
      %p424 = scmp.eq.s32.totalorder %s45, 1
      %p425 = por %p423, %p424
      %p426 = scmp.ne.s32.totalorder %s417, %s418
      %p427 = scmp.eq.s32.totalorder %s45, 0
      %p428 = por %p426, %p427
      %p429 = scmp.ne.s32.totalorder %s417, %s418
      %p430 = scmp.eq.s32.totalorder %s46, 1
      %p431 = por %p429, %p430
      %p433 = scmp.ne.s32.totalorder %s418, %s432
      %p434 = scmp.eq.s32.totalorder %s46, 0
      %p435 = por %p433, %p434
      %s437 = sadd.s32 %s436, 1
      %p440 = scmp.eq.s32.totalorder %s40, 1
      %p441 = scmp.ne.s32.totalorder %s436, %s438
      %p442 = scmp.eq.s32.totalorder %s40, 0
      %p443 = por %p441, %p442
      %p444 = scmp.ne.s32.totalorder %s436, %s438
      %p445 = scmp.eq.s32.totalorder %s45, 1
      %p446 = por %p444, %p445
      %p447 = scmp.ne.s32.totalorder %s438, %s439
      %p448 = scmp.eq.s32.totalorder %s45, 0
      %p449 = por %p447, %p448
      %p450 = scmp.ne.s32.totalorder %s438, %s439
      %p451 = scmp.eq.s32.totalorder %s46, 1
      %p452 = por %p450, %p451
      %p454 = scmp.ne.s32.totalorder %s439, %s453
      %p455 = scmp.eq.s32.totalorder %s46, 0
      %p456 = por %p454, %p455
      %s458 = sadd.s32 %s457, 1
      %p461 = scmp.eq.s32.totalorder %s40, 1
      %p462 = scmp.ne.s32.totalorder %s457, %s459
      %p463 = scmp.eq.s32.totalorder %s40, 0
      %p464 = por %p462, %p463
      %p465 = scmp.ne.s32.totalorder %s457, %s459
      %p466 = scmp.eq.s32.totalorder %s45, 1
      %p467 = por %p465, %p466
      %p468 = scmp.ne.s32.totalorder %s459, %s460
      %p469 = scmp.eq.s32.totalorder %s45, 0
      %p470 = por %p468, %p469
      %p471 = scmp.ne.s32.totalorder %s459, %s460
      %p472 = scmp.eq.s32.totalorder %s46, 1
      %p473 = por %p471, %p472
      %p475 = scmp.ne.s32.totalorder %s460, %s474
      %p476 = scmp.eq.s32.totalorder %s46, 0
      %p477 = por %p475, %p476
      %s479 = sadd.s32 %s478, 1
      %p482 = scmp.eq.s32.totalorder %s40, 1
      %p483 = scmp.ne.s32.totalorder %s478, %s480
      %p484 = scmp.eq.s32.totalorder %s40, 0
      %p485 = por %p483, %p484
      %p486 = scmp.ne.s32.totalorder %s478, %s480
      %p487 = scmp.eq.s32.totalorder %s45, 1
      %p488 = por %p486, %p487
      %p489 = scmp.ne.s32.totalorder %s480, %s481
      %p490 = scmp.eq.s32.totalorder %s45, 0
      %p491 = por %p489, %p490
      %p492 = scmp.ne.s32.totalorder %s480, %s481
      %p493 = scmp.eq.s32.totalorder %s46, 1
      %p494 = por %p492, %p493
      %p496 = scmp.ne.s32.totalorder %s481, %s495
      %p497 = scmp.eq.s32.totalorder %s46, 0
      %p498 = por %p496, %p497
      %s500 = sadd.s32 %s499, 1
      %p503 = scmp.eq.s32.totalorder %s40, 1
      %p504 = scmp.ne.s32.totalorder %s499, %s501
      %p505 = scmp.eq.s32.totalorder %s40, 0
      %p506 = por %p504, %p505
      %p507 = scmp.ne.s32.totalorder %s499, %s501
      %p508 = scmp.eq.s32.totalorder %s45, 1
      %p509 = por %p507, %p508
      %p510 = scmp.ne.s32.totalorder %s501, %s502
      %p511 = scmp.eq.s32.totalorder %s45, 0
      %p512 = por %p510, %p511
      %p513 = scmp.ne.s32.totalorder %s501, %s502
      %p514 = scmp.eq.s32.totalorder %s46, 1
      %p515 = por %p513, %p514
      %p517 = scmp.ne.s32.totalorder %s502, %s516
      %p518 = scmp.eq.s32.totalorder %s46, 0
      %p519 = por %p517, %p518
      %s521 = sadd.s32 %s520, 1
      %p524 = scmp.eq.s32.totalorder %s40, 1
      %p525 = scmp.ne.s32.totalorder %s520, %s522
      %p526 = scmp.eq.s32.totalorder %s40, 0
      %p527 = por %p525, %p526
      %p528 = scmp.ne.s32.totalorder %s520, %s522
      %p529 = scmp.eq.s32.totalorder %s45, 1
      %p530 = por %p528, %p529
      %p531 = scmp.ne.s32.totalorder %s522, %s523
      %p532 = scmp.eq.s32.totalorder %s45, 0
      %p533 = por %p531, %p532
      %p534 = scmp.ne.s32.totalorder %s522, %s523
      %p535 = scmp.eq.s32.totalorder %s46, 1
      %p536 = por %p534, %p535
      %p538 = scmp.ne.s32.totalorder %s523, %s537
      %p539 = scmp.eq.s32.totalorder %s46, 0
      %p540 = por %p538, %p539
      %s541 = ssub.s32 %s40, %s47
      %p542 = scmp.eq.s32.totalorder %s541, 0
      %s544 = sadd.s32 %s543, 1
      %s545 = scalar_select %p542, %s543, %s544
      %p548 = pneg %p542
      %p549 = scmp.eq.s32.totalorder %s40, 1
      %p550 = por %p548, %p549
      %p551 = scmp.ne.s32.totalorder %s543, %s546
      %p552 = scmp.eq.s32.totalorder %s40, 0
      %p553 = por %p551, %p552
      %p554 = scmp.ne.s32.totalorder %s543, %s546
      %p555 = scmp.eq.s32.totalorder %s45, 1
      %p556 = por %p554, %p555
      %p557 = scmp.ne.s32.totalorder %s546, %s547
      %p558 = scmp.eq.s32.totalorder %s45, 0
      %p559 = por %p557, %p558
      %p560 = scmp.ne.s32.totalorder %s546, %s547
      %p561 = scmp.eq.s32.totalorder %s46, 1
      %p562 = por %p560, %p561
      %p564 = scmp.ne.s32.totalorder %s547, %s563
      %p565 = scmp.eq.s32.totalorder %s46, 0
      %p566 = por %p564, %p565
      %p567 = scmp.le.s32.totalorder 1, %s40
      %p568 = scmp.lt.s32.totalorder %s40, 3
      %p569 = pnand %p567, %p568
      %p570 = pneg %p569
      // Predicated region
      $region9: #{decoder_layer_forward.1} parent=5 // pred_check
        _
      $region10: #{decoder_layer_forward.1} parent=5 // pred_check_branch
        %572 = sbr.rel (%p569) target = $region12
      $region11: #{decoder_layer_forward.1} parent=5 // pred_region
        %s573 = ssub.s32 %s40, 1
        // Predicated region
        $region13: #{decoder_layer_forward.1} parent=11 // pred_check
          %p574 = pneg %p113
        $region14: #{decoder_layer_forward.1} parent=11 // pred_check_branch
          %576 = sbr.rel (%p574) target = $region16
        $region15: #{decoder_layer_forward.1} parent=11 // pred_region
          _
        $region16: #{decoder_layer_forward.1} parent=11 // pred_fallthru
          _
        // Predicated region
        $region17: #{decoder_layer_forward.1} parent=11 // pred_check
          %p577 = pneg %p134
        $region18: #{decoder_layer_forward.1} parent=11 // pred_check_branch
          %579 = sbr.rel (%p577) target = $region20
        $region19: #{decoder_layer_forward.1} parent=11 // pred_region
          %s581 = ssub.s32 3072, 3072
          %582 = vsyncadd [#allocation3], %s581
          %s583 = sshll.u32 [#allocation2], 4
          %s584 = int_to_ptr.vmem [resolvable:$true] %s583
          %589 = dma.hbm_to_vmem [thread:$0]  %s3, 3072, %s584, [#allocation3], 192, 192, 12
        $region20: #{decoder_layer_forward.1} parent=11 // pred_fallthru
          _
        // Predicated region
        $region21: #{decoder_layer_forward.1} parent=11 // pred_check
          %p590 = pneg %p155
        $region22: #{decoder_layer_forward.1} parent=11 // pred_check_branch
          %592 = sbr.rel (%p590) target = $region24
        $region23: #{decoder_layer_forward.1} parent=11 // pred_region
          _
        $region24: #{decoder_layer_forward.1} parent=11 // pred_fallthru
          _
        // Predicated region
        $region25: #{decoder_layer_forward.1} parent=11 // pred_check
          %p593 = pneg %p176
        $region26: #{decoder_layer_forward.1} parent=11 // pred_check_branch
          %595 = sbr.rel (%p593) target = $region28
        $region27: #{decoder_layer_forward.1} parent=11 // pred_region
          %s597 = ssub.s32 1024, 1024
          %598 = vsyncadd [#allocation6], %s597
          %s599 = sshll.u32 [#allocation5], 4
          %s600 = int_to_ptr.vmem [resolvable:$true] %s599
          %605 = dma.hbm_to_vmem [thread:$0]  %s5, 1024, %s600, [#allocation6], 64, 64, 4
        $region28: #{decoder_layer_forward.1} parent=11 // pred_fallthru
          _
        // Predicated region
        $region29: #{decoder_layer_forward.1} parent=11 // pred_check
          %p606 = pneg %p197
        $region30: #{decoder_layer_forward.1} parent=11 // pred_check_branch
          %608 = sbr.rel (%p606) target = $region32
        $region31: #{decoder_layer_forward.1} parent=11 // pred_region
          _
        $region32: #{decoder_layer_forward.1} parent=11 // pred_fallthru
          _
        // Predicated region
        $region33: #{decoder_layer_forward.1} parent=11 // pred_check
          %p609 = pneg %p218
        $region34: #{decoder_layer_forward.1} parent=11 // pred_check_branch
          %611 = sbr.rel (%p609) target = $region36
        $region35: #{decoder_layer_forward.1} parent=11 // pred_region
          %s613 = ssub.s32 16, 16
          %614 = vsyncadd [#allocation6], %s613
          %s616 = sshll.u32 [#allocation7], 4
          %s617 = int_to_ptr.vmem [resolvable:$true] %s616
          %619 = dma.hbm_to_vmem [thread:$0]  %s7, 16, %s617, [#allocation6]
        $region36: #{decoder_layer_forward.1} parent=11 // pred_fallthru
          _
        // Predicated region
        $region37: #{decoder_layer_forward.1} parent=11 // pred_check
          %p620 = pneg %p239
        $region38: #{decoder_layer_forward.1} parent=11 // pred_check_branch
          %622 = sbr.rel (%p620) target = $region40
        $region39: #{decoder_layer_forward.1} parent=11 // pred_region
          %s624 = ssub.s32 16, 16
          %625 = vsyncadd [#allocation9], %s624
          %s627 = sshll.u32 [#allocation8], 4
          %s628 = int_to_ptr.vmem [resolvable:$true] %s627
          %630 = dma.hbm_to_vmem [thread:$0]  %s8, 16, %s628, [#allocation9]
        $region40: #{decoder_layer_forward.1} parent=11 // pred_fallthru
          _
        // Predicated region
        $region41: #{decoder_layer_forward.1} parent=11 // pred_check
          %p631 = pneg %p260
        $region42: #{decoder_layer_forward.1} parent=11 // pred_check_branch
          %633 = sbr.rel (%p631) target = $region44
        $region43: #{decoder_layer_forward.1} parent=11 // pred_region
          %s635 = ssub.s32 1024, 1024
          %636 = vsyncadd [#allocation9], %s635
          %s637 = sshll.u32 [#allocation10], 4
          %s638 = int_to_ptr.vmem [resolvable:$true] %s637
          %643 = dma.hbm_to_vmem [thread:$0]  %s9, 1024, %s638, [#allocation9], 64, 64, 4
        $region44: #{decoder_layer_forward.1} parent=11 // pred_fallthru
          _
        // Predicated region
        $region45: #{decoder_layer_forward.1} parent=11 // pred_check
          %p644 = pneg %p281
        $region46: #{decoder_layer_forward.1} parent=11 // pred_check_branch
          %646 = sbr.rel (%p644) target = $region48
        $region47: #{decoder_layer_forward.1} parent=11 // pred_region
          %s648 = ssub.s32 16, 16
          %649 = vsyncadd [#allocation12], %s648
          %s651 = sshll.u32 [#allocation11], 4
          %s652 = int_to_ptr.vmem [resolvable:$true] %s651
          %654 = dma.hbm_to_vmem [thread:$0]  %s10, 16, %s652, [#allocation12]
        $region48: #{decoder_layer_forward.1} parent=11 // pred_fallthru
          _
        // Predicated region
        $region49: #{decoder_layer_forward.1} parent=11 // pred_check
          %p655 = pneg %p302
        $region50: #{decoder_layer_forward.1} parent=11 // pred_check_branch
          %657 = sbr.rel (%p655) target = $region52
        $region51: #{decoder_layer_forward.1} parent=11 // pred_region
          %s659 = ssub.s32 2048, 2048
          %660 = vsyncadd [#allocation12], %s659
          %s661 = sshll.u32 [#allocation13], 4
          %s662 = int_to_ptr.vmem [resolvable:$true] %s661
          %667 = dma.hbm_to_vmem [thread:$0]  %s11, 2048, %s662, [#allocation12], 128, 128, 8
        $region52: #{decoder_layer_forward.1} parent=11 // pred_fallthru
          _
        // Predicated region
        $region53: #{decoder_layer_forward.1} parent=11 // pred_check
          %p668 = pneg %p323
        $region54: #{decoder_layer_forward.1} parent=11 // pred_check_branch
          %670 = sbr.rel (%p668) target = $region56
        $region55: #{decoder_layer_forward.1} parent=11 // pred_region
          _
        $region56: #{decoder_layer_forward.1} parent=11 // pred_fallthru
          _
        // Predicated region
        $region57: #{decoder_layer_forward.1} parent=11 // pred_check
          %p671 = pneg %p344
        $region58: #{decoder_layer_forward.1} parent=11 // pred_check_branch
          %673 = sbr.rel (%p671) target = $region60
        $region59: #{decoder_layer_forward.1} parent=11 // pred_region
          %s675 = ssub.s32 1024, 1024
          %676 = vsyncadd [#allocation15], %s675
          %s677 = sshll.u32 [#allocation14], 4
          %s678 = int_to_ptr.vmem [resolvable:$true] %s677
          %683 = dma.hbm_to_vmem [thread:$0]  %s13, 1024, %s678, [#allocation15], 64, 64, 4
        $region60: #{decoder_layer_forward.1} parent=11 // pred_fallthru
          _
        // Predicated region
        $region61: #{decoder_layer_forward.1} parent=11 // pred_check
          %p684 = pneg %p365
        $region62: #{decoder_layer_forward.1} parent=11 // pred_check_branch
          %686 = sbr.rel (%p684) target = $region64
        $region63: #{decoder_layer_forward.1} parent=11 // pred_region
          %s688 = ssub.s32 16, 16
          %689 = vsyncadd [#allocation15], %s688
          %s691 = sshll.u32 [#allocation16], 4
          %s692 = int_to_ptr.vmem [resolvable:$true] %s691
          %694 = dma.hbm_to_vmem [thread:$0]  %s14, 16, %s692, [#allocation15]
        $region64: #{decoder_layer_forward.1} parent=11 // pred_fallthru
          _
        // Predicated region
        $region65: #{decoder_layer_forward.1} parent=11 // pred_check
          %p695 = pneg %p386
        $region66: #{decoder_layer_forward.1} parent=11 // pred_check_branch
          %697 = sbr.rel (%p695) target = $region68
        $region67: #{decoder_layer_forward.1} parent=11 // pred_region
          _
        $region68: #{decoder_layer_forward.1} parent=11 // pred_fallthru
          _
        // Predicated region
        $region69: #{decoder_layer_forward.1} parent=11 // pred_check
          %p698 = pneg %p407
        $region70: #{decoder_layer_forward.1} parent=11 // pred_check_branch
          %700 = sbr.rel (%p698) target = $region72
        $region71: #{decoder_layer_forward.1} parent=11 // pred_region
          %s702 = ssub.s32 16, 16
          %703 = vsyncadd [#allocation18], %s702
          %s705 = sshll.u32 [#allocation17], 4
          %s706 = int_to_ptr.vmem [resolvable:$true] %s705
          %708 = dma.hbm_to_vmem [thread:$0]  %s16, 16, %s706, [#allocation18]
        $region72: #{decoder_layer_forward.1} parent=11 // pred_fallthru
          _
        // Predicated region
        $region73: #{decoder_layer_forward.1} parent=11 // pred_check
          %p709 = pneg %p428
        $region74: #{decoder_layer_forward.1} parent=11 // pred_check_branch
          %711 = sbr.rel (%p709) target = $region76
        $region75: #{decoder_layer_forward.1} parent=11 // pred_region
          %s713 = ssub.s32 2048, 2048
          %714 = vsyncadd [#allocation18], %s713
          %s715 = sshll.u32 [#allocation19], 4
          %s716 = int_to_ptr.vmem [resolvable:$true] %s715
          %721 = dma.hbm_to_vmem [thread:$0]  %s17, 2048, %s716, [#allocation18], 128, 128, 8
        $region76: #{decoder_layer_forward.1} parent=11 // pred_fallthru
          _
        // Predicated region
        $region77: #{decoder_layer_forward.1} parent=11 // pred_check
          %p722 = pneg %p449
        $region78: #{decoder_layer_forward.1} parent=11 // pred_check_branch
          %724 = sbr.rel (%p722) target = $region80
        $region79: #{decoder_layer_forward.1} parent=11 // pred_region
          %s726 = ssub.s32 32, 32
          %727 = vsyncadd [#allocation21], %s726
          %s729 = sshll.u32 [#allocation20], 4
          %s730 = int_to_ptr.vmem [resolvable:$true] %s729
          %732 = dma.hbm_to_vmem [thread:$0]  %s18, 32, %s730, [#allocation21]
        $region80: #{decoder_layer_forward.1} parent=11 // pred_fallthru
          _
        // Predicated region
        $region81: #{decoder_layer_forward.1} parent=11 // pred_check
          %p733 = pneg %p470
        $region82: #{decoder_layer_forward.1} parent=11 // pred_check_branch
          %735 = sbr.rel (%p733) target = $region84
        $region83: #{decoder_layer_forward.1} parent=11 // pred_region
          %s737 = ssub.s32 2048, 2048
          %738 = vsyncadd [#allocation21], %s737
          %s739 = sshll.u32 [#allocation22], 4
          %s740 = int_to_ptr.vmem [resolvable:$true] %s739
          %745 = dma.hbm_to_vmem [thread:$0]  %s19, 2048, %s740, [#allocation21], 64, 64, 4
        $region84: #{decoder_layer_forward.1} parent=11 // pred_fallthru
          _
        // Predicated region
        $region85: #{decoder_layer_forward.1} parent=11 // pred_check
          %p746 = pneg %p491
        $region86: #{decoder_layer_forward.1} parent=11 // pred_check_branch
          %748 = sbr.rel (%p746) target = $region88
        $region87: #{decoder_layer_forward.1} parent=11 // pred_region
          %s750 = ssub.s32 16, 16
          %751 = vsyncadd [#allocation24], %s750
          %s753 = sshll.u32 [#allocation23], 4
          %s754 = int_to_ptr.vmem [resolvable:$true] %s753
          %756 = dma.hbm_to_vmem [thread:$0]  %s20, 16, %s754, [#allocation24]
        $region88: #{decoder_layer_forward.1} parent=11 // pred_fallthru
          _
        // Predicated region
        $region89: #{decoder_layer_forward.1} parent=11 // pred_check
          %p757 = pneg %p512
        $region90: #{decoder_layer_forward.1} parent=11 // pred_check_branch
          %759 = sbr.rel (%p757) target = $region92
        $region91: #{decoder_layer_forward.1} parent=11 // pred_region
          _
        $region92: #{decoder_layer_forward.1} parent=11 // pred_fallthru
          _
        // Predicated region
        $region93: #{decoder_layer_forward.1} parent=11 // pred_check
          %p760 = pneg %p533
        $region94: #{decoder_layer_forward.1} parent=11 // pred_check_branch
          %762 = sbr.rel (%p760) target = $region96
        $region95: #{decoder_layer_forward.1} parent=11 // pred_region
          _
        $region96: #{decoder_layer_forward.1} parent=11 // pred_fallthru
          _
      $region12: #{decoder_layer_forward.1} parent=5 // pred_fallthru
        _
      %p763 = scmp.lt.s32.totalorder %s40, 2
      // Predicated region
      $region97: #{decoder_layer_forward.1} parent=5 // pred_check
        %p764 = pneg %p763
      $region98: #{decoder_layer_forward.1} parent=5 // pred_check_branch
        %766 = sbr.rel (%p764) target = $region100
      $region99: #{decoder_layer_forward.1} parent=5 // pred_region
        // Predicated region
        $region101: #{decoder_layer_forward.1} parent=99 // pred_check
          %p767 = pneg %p60
        $region102: #{decoder_layer_forward.1} parent=99 // pred_check_branch
          %769 = sbr.rel (%p767) target = $region104
        $region103: #{decoder_layer_forward.1} parent=99 // pred_region
          %p770 = scmp.lt.s32.totalorder %s40, 1
          %s771 = scalar_select %p770, %s40, 1
          %s772 = smul.addr %s771, 8
          %s773 = scalar_lea.vmem %s0, %s772
        $region104: #{decoder_layer_forward.1} parent=99 // pred_fallthru
          _
        // Predicated region
        $region105: #{decoder_layer_forward.1} parent=99 // pred_check
          %p774 = pneg %p86
        $region106: #{decoder_layer_forward.1} parent=99 // pred_check_branch
          %776 = sbr.rel (%p774) target = $region108
        $region107: #{decoder_layer_forward.1} parent=99 // pred_region
          %p777 = scmp.lt.s32.totalorder %s40, 1
          %s778 = scalar_select %p777, %s40, 1
          %s779 = smul.addr %s778, 4
          %s780 = scalar_lea.vmem %s1, %s779
        $region108: #{decoder_layer_forward.1} parent=99 // pred_fallthru
          _
      $region100: #{decoder_layer_forward.1} parent=5 // pred_fallthru
        _
      %p781 = scmp.le.s32.totalorder 1, %s40
      %p782 = scmp.lt.s32.totalorder %s40, 3
      %p783 = pnand %p781, %p782
      %p784 = pneg %p783
      // Predicated region
      $region109: #{decoder_layer_forward.1} parent=5 // pred_check
        _
      $region110: #{decoder_layer_forward.1} parent=5 // pred_check_branch
        %786 = sbr.rel (%p783) target = $region112
      $region111: #{decoder_layer_forward.1} parent=5 // pred_region
        %s787 = ssub.s32 %s40, 1
        // Predicated region
        $region113: #{decoder_layer_forward.1} parent=111 // pred_check
          %p788 = pneg %p134
        $region114: #{decoder_layer_forward.1} parent=111 // pred_check_branch
          %790 = sbr.rel (%p788) target = $region116
        $region115: #{decoder_layer_forward.1} parent=111 // pred_region
          %791 = dma.done [#allocation3], 3072
        $region116: #{decoder_layer_forward.1} parent=111 // pred_fallthru
          _
        // Predicated region
        $region117: #{decoder_layer_forward.1} parent=111 // pred_check
          %p792 = pneg %p176
        $region118: #{decoder_layer_forward.1} parent=111 // pred_check_branch
          %794 = sbr.rel (%p792) target = $region120
        $region119: #{decoder_layer_forward.1} parent=111 // pred_region
          %795 = dma.done [#allocation6], 1024
        $region120: #{decoder_layer_forward.1} parent=111 // pred_fallthru
          _
        // Predicated region
        $region121: #{decoder_layer_forward.1} parent=111 // pred_check
          %p796 = pneg %p218
        $region122: #{decoder_layer_forward.1} parent=111 // pred_check_branch
          %798 = sbr.rel (%p796) target = $region124
        $region123: #{decoder_layer_forward.1} parent=111 // pred_region
          %799 = dma.done [#allocation6], 16
        $region124: #{decoder_layer_forward.1} parent=111 // pred_fallthru
          _
        // Predicated region
        $region125: #{decoder_layer_forward.1} parent=111 // pred_check
          %p800 = pneg %p239
        $region126: #{decoder_layer_forward.1} parent=111 // pred_check_branch
          %802 = sbr.rel (%p800) target = $region128
        $region127: #{decoder_layer_forward.1} parent=111 // pred_region
          %803 = dma.done [#allocation9], 16
        $region128: #{decoder_layer_forward.1} parent=111 // pred_fallthru
          _
        // Predicated region
        $region129: #{decoder_layer_forward.1} parent=111 // pred_check
          %p804 = pneg %p260
        $region130: #{decoder_layer_forward.1} parent=111 // pred_check_branch
          %806 = sbr.rel (%p804) target = $region132
        $region131: #{decoder_layer_forward.1} parent=111 // pred_region
          %807 = dma.done [#allocation9], 1024
        $region132: #{decoder_layer_forward.1} parent=111 // pred_fallthru
          _
        // Predicated region
        $region133: #{decoder_layer_forward.1} parent=111 // pred_check
          %p808 = pneg %p281
        $region134: #{decoder_layer_forward.1} parent=111 // pred_check_branch
          %810 = sbr.rel (%p808) target = $region136
        $region135: #{decoder_layer_forward.1} parent=111 // pred_region
          %811 = dma.done [#allocation12], 16
        $region136: #{decoder_layer_forward.1} parent=111 // pred_fallthru
          _
        // Predicated region
        $region137: #{decoder_layer_forward.1} parent=111 // pred_check
          %p812 = pneg %p302
        $region138: #{decoder_layer_forward.1} parent=111 // pred_check_branch
          %814 = sbr.rel (%p812) target = $region140
        $region139: #{decoder_layer_forward.1} parent=111 // pred_region
          %815 = dma.done [#allocation12], 2048
        $region140: #{decoder_layer_forward.1} parent=111 // pred_fallthru
          _
        // Predicated region
        $region141: #{decoder_layer_forward.1} parent=111 // pred_check
          %p816 = pneg %p344
        $region142: #{decoder_layer_forward.1} parent=111 // pred_check_branch
          %818 = sbr.rel (%p816) target = $region144
        $region143: #{decoder_layer_forward.1} parent=111 // pred_region
          %819 = dma.done [#allocation15], 1024
        $region144: #{decoder_layer_forward.1} parent=111 // pred_fallthru
          _
        // Predicated region
        $region145: #{decoder_layer_forward.1} parent=111 // pred_check
          %p820 = pneg %p365
        $region146: #{decoder_layer_forward.1} parent=111 // pred_check_branch
          %822 = sbr.rel (%p820) target = $region148
        $region147: #{decoder_layer_forward.1} parent=111 // pred_region
          %823 = dma.done [#allocation15], 16
        $region148: #{decoder_layer_forward.1} parent=111 // pred_fallthru
          _
        // Predicated region
        $region149: #{decoder_layer_forward.1} parent=111 // pred_check
          %p824 = pneg %p407
        $region150: #{decoder_layer_forward.1} parent=111 // pred_check_branch
          %826 = sbr.rel (%p824) target = $region152
        $region151: #{decoder_layer_forward.1} parent=111 // pred_region
          %827 = dma.done [#allocation18], 16
        $region152: #{decoder_layer_forward.1} parent=111 // pred_fallthru
          _
        // Predicated region
        $region153: #{decoder_layer_forward.1} parent=111 // pred_check
          %p828 = pneg %p428
        $region154: #{decoder_layer_forward.1} parent=111 // pred_check_branch
          %830 = sbr.rel (%p828) target = $region156
        $region155: #{decoder_layer_forward.1} parent=111 // pred_region
          %831 = dma.done [#allocation18], 2048
        $region156: #{decoder_layer_forward.1} parent=111 // pred_fallthru
          _
        // Predicated region
        $region157: #{decoder_layer_forward.1} parent=111 // pred_check
          %p832 = pneg %p449
        $region158: #{decoder_layer_forward.1} parent=111 // pred_check_branch
          %834 = sbr.rel (%p832) target = $region160
        $region159: #{decoder_layer_forward.1} parent=111 // pred_region
          %835 = dma.done [#allocation21], 32
        $region160: #{decoder_layer_forward.1} parent=111 // pred_fallthru
          _
        // Predicated region
        $region161: #{decoder_layer_forward.1} parent=111 // pred_check
          %p836 = pneg %p470
        $region162: #{decoder_layer_forward.1} parent=111 // pred_check_branch
          %838 = sbr.rel (%p836) target = $region164
        $region163: #{decoder_layer_forward.1} parent=111 // pred_region
          %839 = dma.done [#allocation21], 2048
        $region164: #{decoder_layer_forward.1} parent=111 // pred_fallthru
          _
        // Predicated region
        $region165: #{decoder_layer_forward.1} parent=111 // pred_check
          %p840 = pneg %p491
        $region166: #{decoder_layer_forward.1} parent=111 // pred_check_branch
          %842 = sbr.rel (%p840) target = $region168
        $region167: #{decoder_layer_forward.1} parent=111 // pred_region
          %843 = dma.done [#allocation24], 16
        $region168: #{decoder_layer_forward.1} parent=111 // pred_fallthru
          _
        %p844 = scmp.lt.s32.totalorder %s45, 1
        %s845 = scalar_select %p844, %s45, 1
        %s846 = smul.addr %s845, 8
        %s847 = scalar_lea.vmem %s0, %s846
        %p848 = pneg %p66
        %p849 = pneg %p63
        %p850 = scmp.lt.s32.totalorder %s45, 1
        %s851 = scalar_select %p850, %s45, 1
        %s852 = smul.addr %s851, 4
        %s853 = scalar_lea.vmem %s1, %s852
        %p854 = pneg %p92
        %p855 = pneg %p89
        %p856 = pneg %p113
        %p857 = pneg %p110
        %p858 = pneg %p134
        %p859 = pneg %p131
        %p860 = pneg %p155
        %p861 = pneg %p152
        %p862 = pneg %p176
        %p863 = pneg %p173
        %p864 = pneg %p197
        %p865 = pneg %p194
        %p866 = pneg %p218
        %p867 = pneg %p215
        %p868 = pneg %p239
        %p869 = pneg %p236
        %p870 = pneg %p260
        %p871 = pneg %p257
        %p872 = pneg %p281
        %p873 = pneg %p278
        %p874 = pneg %p302
        %p875 = pneg %p299
        %p876 = pneg %p323
        %p877 = pneg %p320
        %p878 = pneg %p344
        %p879 = pneg %p341
        %p880 = pneg %p365
        %p881 = pneg %p362
        %p882 = pneg %p386
        %p883 = pneg %p383
        %p884 = pneg %p407
        %p885 = pneg %p404
        %p886 = pneg %p428
        %p887 = pneg %p425
        %p888 = pneg %p449
        %p889 = pneg %p446
        %p890 = pneg %p470
        %p891 = pneg %p467
        %p892 = pneg %p491
        %p893 = pneg %p488
        %p894 = pneg %p512
        %p895 = pneg %p509
        %p896 = pneg %p533
        %p897 = pneg %p530
        %p898 = pneg %p559
        %p899 = pneg %p556
        %s900 = sand.u32 %s546, 1
        %s901 = scalar_lea.sflag [#allocation4], %s900
        %s902 = sand.u32 %s546, 1
        %s903 = smul.addr %s902, 8
        %s904 = scalar_lea.vmem [#allocation25], %s903
        %p905 = scmp.lt.s32.totalorder %s45, 1
        %s906 = scalar_select %p905, %s45, 1
        %s907 = smul.addr %s906, 8
        %s908 = scalar_lea.vmem %s0, %s907
        %p909 = scmp.lt.s32.totalorder %s45, 1
        %s910 = scalar_select %p909, %s45, 1
        %s911 = smul.addr %s910, 4
        %s912 = scalar_lea.vmem %s1, %s911
        %v914 = vld [vmem:[%s908] sm:$0xff]
        %v915 = vld [vmem:[%s912] sm:$0xf]
        %v916 = vld [vmem:[%s2] sm:$0xff]
        %v917 = vsub.f32 1.0, %v916
        %v918 = vmul.f32 %v917, -1e+09
        %v919 = vpack.c.bf16 %v914, %v914
        %v920 = vpack.c.bf16 %v915, %v915
        %v921 = vld [vmem:[#allocation2] sm:$0xff]
        %v922 = vld [vmem:[#allocation2 + $0x8] sm:$0xf]
        %v923 = vld [vmem:[#allocation2 + $0xc] sm:$0xff]
        %v924 = vld [vmem:[#allocation2 + $0x14] sm:$0xf]
        %v925 = vld [vmem:[#allocation2 + $0x18] sm:$0xff]
        %v926 = vld [vmem:[#allocation2 + $0x20] sm:$0xf]
        %v927 = vld [vmem:[#allocation2 + $0x24] sm:$0xff]
        %v928 = vld [vmem:[#allocation2 + $0x2c] sm:$0xf]
        %v929 = vld [vmem:[#allocation2 + $0x30] sm:$0xff]
        %v930 = vld [vmem:[#allocation2 + $0x38] sm:$0xf]
        %v931 = vld [vmem:[#allocation2 + $0x3c] sm:$0xff]
        %v932 = vld [vmem:[#allocation2 + $0x44] sm:$0xf]
        %v933 = vld [vmem:[#allocation2 + $0x48] sm:$0xff]
        %v934 = vld [vmem:[#allocation2 + $0x50] sm:$0xf]
        %v935 = vld [vmem:[#allocation2 + $0x54] sm:$0xff]
        %v936 = vld [vmem:[#allocation2 + $0x5c] sm:$0xf]
        %v937 = vld [vmem:[#allocation2 + $0x60] sm:$0xff]
        %v938 = vld [vmem:[#allocation2 + $0x68] sm:$0xf]
        %v939 = vld [vmem:[#allocation2 + $0x6c] sm:$0xff]
        %v940 = vld [vmem:[#allocation2 + $0x74] sm:$0xf]
        %v941 = vld [vmem:[#allocation2 + $0x78] sm:$0xff]
        %v942 = vld [vmem:[#allocation2 + $0x80] sm:$0xf]
        %v943 = vld [vmem:[#allocation2 + $0x84] sm:$0xff]
        %v944 = vld [vmem:[#allocation2 + $0x8c] sm:$0xf]
        %v945 = vld [vmem:[#allocation2 + $0x90] sm:$0xff]
        %v946 = vld [vmem:[#allocation2 + $0x98] sm:$0xf]
        %v947 = vld [vmem:[#allocation2 + $0x9c] sm:$0xff]
        %v948 = vld [vmem:[#allocation2 + $0xa4] sm:$0xf]
        %v949 = vld [vmem:[#allocation2 + $0xa8] sm:$0xff]
        %v950 = vld [vmem:[#allocation2 + $0xb0] sm:$0xf]
        %v951 = vld [vmem:[#allocation2 + $0xb4] sm:$0xff]
        %v952 = vld [vmem:[#allocation2 + $0xbc] sm:$0xf]
        %v953 = vld [vmem:[%s4] sm:$0x7]
        %v955 = vlaneseq
        %v956 = vshrl.u32 %v955, 7
        %v957 = vsub.s32 0, %v956
        %v958 = vrot.slane %v953, %v957
        %v959 = vlaneseq
        %v960 = vshrl.u32 %v959, 7
        %v961 = vsub.s32 1, %v960
        %v962 = vrot.slane %v953, %v961
        %v963 = vlaneseq
        %v964 = vshrl.u32 %v963, 7
        %v965 = vsub.s32 2, %v964
        %v966 = vrot.slane %v953, %v965
        %v1002 = vunpack.c.l.b16 %v921
        %v1003 = vunpack.c.h.b16 %v921
        %v1004 = vunpack.c.l.b16 %v922
        %v1005 = vunpack.c.l.b16 %v923
        %v1006 = vunpack.c.h.b16 %v923
        %v1007 = vunpack.c.l.b16 %v924
        %v1008 = vunpack.c.l.b16 %v925
        %v1009 = vunpack.c.h.b16 %v925
        %v1010 = vunpack.c.l.b16 %v926
        %v1011 = vunpack.c.l.b16 %v927
        %v1012 = vunpack.c.h.b16 %v927
        %v1013 = vunpack.c.l.b16 %v928
        %v1014 = vunpack.c.l.b16 %v929
        %v1015 = vunpack.c.h.b16 %v929
        %v1016 = vunpack.c.l.b16 %v930
        %v1017 = vunpack.c.l.b16 %v931
        %v1018 = vunpack.c.h.b16 %v931
        %v1019 = vunpack.c.l.b16 %v932
        %v1020 = vunpack.c.l.b16 %v933
        %v1021 = vunpack.c.h.b16 %v933
        %v1022 = vunpack.c.l.b16 %v934
        %v1023 = vunpack.c.l.b16 %v935
        %v1024 = vunpack.c.h.b16 %v935
        %v1025 = vunpack.c.l.b16 %v936
        %v1026 = vunpack.c.l.b16 %v937
        %v1027 = vunpack.c.h.b16 %v937
        %v1028 = vunpack.c.l.b16 %v938
        %v1029 = vunpack.c.l.b16 %v939
        %v1030 = vunpack.c.h.b16 %v939
        %v1031 = vunpack.c.l.b16 %v940
        %v1032 = vunpack.c.l.b16 %v941
        %v1033 = vunpack.c.h.b16 %v941
        %v1034 = vunpack.c.l.b16 %v942
        %v1035 = vunpack.c.l.b16 %v943
        %v1036 = vunpack.c.h.b16 %v943
        %v1037 = vunpack.c.l.b16 %v944
        %v1038 = vunpack.c.l.b16 %v945
        %v1039 = vunpack.c.h.b16 %v945
        %v1040 = vunpack.c.l.b16 %v946
        %v1041 = vunpack.c.l.b16 %v947
        %v1042 = vunpack.c.h.b16 %v947
        %v1043 = vunpack.c.l.b16 %v948
        %v1044 = vunpack.c.l.b16 %v949
        %v1045 = vunpack.c.h.b16 %v949
        %v1046 = vunpack.c.l.b16 %v950
        %v1047 = vunpack.c.l.b16 %v951
        %v1048 = vunpack.c.h.b16 %v951
        %v1049 = vunpack.c.l.b16 %v952
        %v1050 = vpack.c.b16 %v1005, %v1002
        %v1051 = vpack.c.b16 %v1006, %v1003
        %v1052 = vpack.c.b16 %v1007, %v1004
        %v1053 = vpack.c.b16 %v1011, %v1008
        %v1054 = vpack.c.b16 %v1012, %v1009
        %v1055 = vpack.c.b16 %v1013, %v1010
        %v1056 = vpack.c.b16 %v1017, %v1014
        %v1057 = vpack.c.b16 %v1018, %v1015
        %v1058 = vpack.c.b16 %v1019, %v1016
        %v1059 = vpack.c.b16 %v1023, %v1020
        %v1060 = vpack.c.b16 %v1024, %v1021
        %v1061 = vpack.c.b16 %v1025, %v1022
        %v1062 = vpack.c.b16 %v1029, %v1026
        %v1063 = vpack.c.b16 %v1030, %v1027
        %v1064 = vpack.c.b16 %v1031, %v1028
        %v1065 = vpack.c.b16 %v1035, %v1032
        %v1066 = vpack.c.b16 %v1036, %v1033
        %v1067 = vpack.c.b16 %v1037, %v1034
        %v1068 = vpack.c.b16 %v1041, %v1038
        %v1069 = vpack.c.b16 %v1042, %v1039
        %v1070 = vpack.c.b16 %v1043, %v1040
        %v1071 = vpack.c.b16 %v1047, %v1044
        %v1072 = vpack.c.b16 %v1048, %v1045
        %v1073 = vpack.c.b16 %v1049, %v1046
        %1098 = vmatprep.subr.bf16.mxu0 %v1051
        %1099 = vmatpush1.bf16.msra.mxu0 %v1050
        %1100 = vmatprep.subr.bf16.mxu0 %v1054
        %1101 = vmatpush1.bf16.msra.mxu0 %v1053
        %1102 = vmatprep.subr.bf16.mxu0 %v1057
        %1103 = vmatpush1.bf16.msra.mxu0 %v1056
        %1104 = vmatprep.subr.bf16.mxu0 %v1060
        %1105 = vmatpush1.bf16.msra.mxu0 %v1059
        %1106 = vmatprep.subr.bf16.mxu0 %v1063
        %1107 = vmatpush1.bf16.msra.mxu0 %v1062
        %1108 = vmatprep.subr.bf16.mxu0 %v1066
        %1109 = vmatpush1.bf16.msra.mxu0 %v1065
        %1110 = vmatprep.subr.bf16.mxu0 %v1069
        %1111 = vmatpush1.bf16.msra.mxu0 %v1068
        %1112 = vmatprep.subr.bf16.mxu0 %v1072
        %1113 = vmatpush1.bf16.msra.mxu0 %v1071
        %1114 = vmatprep.subr.bf16.mxu0 0
        %1115 = vmatpush1.bf16.msra.mxu0 0
        %1116 = vmatprep.subr.bf16.mxu0 0
        %1117 = vmatpush1.bf16.msra.mxu0 0
        %1118 = vmatprep.subr.bf16.mxu0 0
        %1119 = vmatpush1.bf16.msra.mxu0 0
        %1120 = vmatprep.subr.bf16.mxu0 0
        %1121 = vmatpush1.bf16.msra.mxu0 0
        %1122 = vmatprep.subr.bf16.mxu0 0
        %1123 = vmatpush1.bf16.msra.mxu0 0
        %1124 = vmatprep.subr.bf16.mxu0 0
        %1125 = vmatpush1.bf16.msra.mxu0 0
        %1126 = vmatprep.subr.bf16.mxu0 0
        %1127 = vmatpush1.bf16.msra.mxu0 0
        %1128 = vmatprep.subr.bf16.mxu0 0
        %1129 = vmatpush1.bf16.msra.mxu0 0
        %1130 = vmatprep.mubr.bf16.mxu0 0
        %1131 = vmatmul.mubr.bf16.gmra.mrb[0].mxu0 %v919
        %v1132 = vpop.f32.mrb[0].mxu0
        %v1133 = vadd.f32 %v958, %v1132
        %v1134 = vpop.f32.mrb[0].mxu0
        %v1135 = vadd.f32 %v962, %v1134
        %v1136 = vpop.f32.mrb[0].mxu0
        %v1137 = vpop.f32.mrb[0].mxu0
        %1138 = vdwg.mxu0
        %1139 = vmatprep.subr.bf16.mxu0 0
        %1140 = vmatpush1.bf16.msra.mxu0 %v1052
        %1141 = vmatprep.subr.bf16.mxu0 0
        %1142 = vmatpush1.bf16.msra.mxu0 %v1055
        %1143 = vmatprep.subr.bf16.mxu0 0
        %1144 = vmatpush1.bf16.msra.mxu0 %v1058
        %1145 = vmatprep.subr.bf16.mxu0 0
        %1146 = vmatpush1.bf16.msra.mxu0 %v1061
        %1147 = vmatprep.subr.bf16.mxu0 0
        %1148 = vmatpush1.bf16.msra.mxu0 %v1064
        %1149 = vmatprep.subr.bf16.mxu0 0
        %1150 = vmatpush1.bf16.msra.mxu0 %v1067
        %1151 = vmatprep.subr.bf16.mxu0 0
        %1152 = vmatpush1.bf16.msra.mxu0 %v1070
        %1153 = vmatprep.subr.bf16.mxu0 0
        %1154 = vmatpush1.bf16.msra.mxu0 %v1073
        %1155 = vmatprep.subr.bf16.mxu0 0
        %1156 = vmatpush1.bf16.msra.mxu0 0
        %1157 = vmatprep.subr.bf16.mxu0 0
        %1158 = vmatpush1.bf16.msra.mxu0 0
        %1159 = vmatprep.subr.bf16.mxu0 0
        %1160 = vmatpush1.bf16.msra.mxu0 0
        %1161 = vmatprep.subr.bf16.mxu0 0
        %1162 = vmatpush1.bf16.msra.mxu0 0
        %1163 = vmatprep.subr.bf16.mxu0 0
        %1164 = vmatpush1.bf16.msra.mxu0 0
        %1165 = vmatprep.subr.bf16.mxu0 0
        %1166 = vmatpush1.bf16.msra.mxu0 0
        %1167 = vmatprep.subr.bf16.mxu0 0
        %1168 = vmatpush1.bf16.msra.mxu0 0
        %1169 = vmatprep.subr.bf16.mxu0 0
        %1170 = vmatpush1.bf16.msra.mxu0 0
        %1171 = vmatprep.mubr.bf16.mxu0 0
        %1172 = vmatmul.mubr.bf16.gmra.mrb[0].mxu0 %v919
        %v1173 = vpop.f32.mrb[0].mxu0
        %v1174 = vadd.f32 %v966, %v1173
        %v1175 = vpop.f32.mrb[0].mxu0
        %v1176 = vpop.f32.mrb[0].mxu0
        %v1177 = vpop.f32.mrb[0].mxu0
        %1178 = vdwg.mxu0
        %v1179 = vld [vmem:[#allocation5] sm:$0xf]
        %v1180 = vld [vmem:[#allocation5 + $0x4] sm:$0xf]
        %v1181 = vld [vmem:[#allocation5 + $0x8] sm:$0xf]
        %v1182 = vld [vmem:[#allocation5 + $0xc] sm:$0xf]
        %v1183 = vld [vmem:[#allocation5 + $0x10] sm:$0xf]
        %v1184 = vld [vmem:[#allocation5 + $0x14] sm:$0xf]
        %v1185 = vld [vmem:[#allocation5 + $0x18] sm:$0xf]
        %v1186 = vld [vmem:[#allocation5 + $0x1c] sm:$0xf]
        %v1187 = vld [vmem:[#allocation5 + $0x20] sm:$0xf]
        %v1188 = vld [vmem:[#allocation5 + $0x24] sm:$0xf]
        %v1189 = vld [vmem:[#allocation5 + $0x28] sm:$0xf]
        %v1190 = vld [vmem:[#allocation5 + $0x2c] sm:$0xf]
        %v1191 = vld [vmem:[#allocation5 + $0x30] sm:$0xf]
        %v1192 = vld [vmem:[#allocation5 + $0x34] sm:$0xf]
        %v1193 = vld [vmem:[#allocation5 + $0x38] sm:$0xf]
        %v1194 = vld [vmem:[#allocation5 + $0x3c] sm:$0xf]
        %v1195 = vld [vmem:[%s6] sm:$0x1]
        %1197 = vrot.lane.b32.xlu0 %v1133, 96
        %v1198 = vpop.permute.xlu0 %1197
        %1200 = vrot.lane.b32.xlu0 %v1133, 64
        %v1201 = vpop.permute.xlu0 %1200
        %1203 = vrot.lane.b32.xlu0 %v1133, 32
        %v1204 = vpop.permute.xlu0 %1203
        %v1206 = vcombine.low %v1133, %v1201
        %v1207 = vcombine.high %v1133, %v1201
        %v1209 = vunpack.c.l.s4 1983009808
        %v1210 = vunpack.c.0.s8 %v1209
        %v1211 = vlaneseq
        %v1212 = vshrl.u32 %v1211, 7
        %v1213 = vsub.s32 %v1210, %v1212
        %v1214 = vrot.slane %v1206, %v1213
        %v1216 = vunpack.c.l.s4 1983009808
        %v1217 = vunpack.c.0.s8 %v1216
        %v1218 = vlaneseq
        %v1219 = vshrl.u32 %v1218, 7
        %v1220 = vsub.s32 %v1217, %v1219
        %v1221 = vrot.slane %v1207, %v1220
        %v1222 = vcombine.low %v1198, %v1204
        %v1223 = vcombine.high %v1198, %v1204
        %v1225 = vunpack.c.l.s4 1983009808
        %v1226 = vunpack.c.0.s8 %v1225
        %v1227 = vlaneseq
        %v1228 = vshrl.u32 %v1227, 7
        %v1229 = vsub.s32 %v1226, %v1228
        %v1230 = vrot.slane %v1222, %v1229
        %v1232 = vunpack.c.l.s4 1983009808
        %v1233 = vunpack.c.0.s8 %v1232
        %v1234 = vlaneseq
        %v1235 = vshrl.u32 %v1234, 7
        %v1236 = vsub.s32 %v1233, %v1235
        %v1237 = vrot.slane %v1223, %v1236
        %v1238 = vcombine.low %v1214, %v1230
        %v1239 = vcombine.high %v1214, %v1230
        %v1241 = vunpack.c.l.s4 1934713408
        %v1242 = vunpack.c.0.s8 %v1241
        %v1243 = vlaneseq
        %v1244 = vshrl.u32 %v1243, 7
        %v1245 = vsub.s32 %v1242, %v1244
        %v1246 = vrot.slane %v1238, %v1245
        %v1248 = vunpack.c.l.s4 1934713408
        %v1249 = vunpack.c.0.s8 %v1248
        %v1250 = vlaneseq
        %v1251 = vshrl.u32 %v1250, 7
        %v1252 = vsub.s32 %v1249, %v1251
        %v1253 = vrot.slane %v1239, %v1252
        %v1254 = vcombine.low %v1221, %v1237
        %v1255 = vcombine.high %v1221, %v1237
        %v1257 = vunpack.c.l.s4 1934713408
        %v1258 = vunpack.c.0.s8 %v1257
        %v1259 = vlaneseq
        %v1260 = vshrl.u32 %v1259, 7
        %v1261 = vsub.s32 %v1258, %v1260
        %v1262 = vrot.slane %v1254, %v1261
        %v1264 = vunpack.c.l.s4 1934713408
        %v1265 = vunpack.c.0.s8 %v1264
        %v1266 = vlaneseq
        %v1267 = vshrl.u32 %v1266, 7
        %v1268 = vsub.s32 %v1265, %v1267
        %v1269 = vrot.slane %v1255, %v1268
        %v1270 = vcombine.high %v1246, 0.0
        %v1271 = vcombine.high %v1253, 0.0
        %v1272 = vcombine.high %v1262, 0.0
        %v1273 = vcombine.high %v1269, 0.0
        %v1274 = vcombine.low %v1246, %v1253
        %v1276 = vunpack.c.l.s4 1983009808
        %v1277 = vunpack.c.0.s8 %v1276
        %v1278 = vlaneseq
        %v1279 = vshrl.u32 %v1278, 7
        %v1280 = vsub.s32 %v1277, %v1279
        %v1281 = vrot.slane %v1274, %v1280
        %v1282 = vcombine.low %v1270, %v1271
        %v1284 = vunpack.c.l.s4 1983009808
        %v1285 = vunpack.c.0.s8 %v1284
        %v1286 = vlaneseq
        %v1287 = vshrl.u32 %v1286, 7
        %v1288 = vsub.s32 %v1285, %v1287
        %v1289 = vrot.slane %v1282, %v1288
        %v1290 = vcombine.low %v1262, %v1269
        %v1292 = vunpack.c.l.s4 1983009808
        %v1293 = vunpack.c.0.s8 %v1292
        %v1294 = vlaneseq
        %v1295 = vshrl.u32 %v1294, 7
        %v1296 = vsub.s32 %v1293, %v1295
        %v1297 = vrot.slane %v1290, %v1296
        %v1298 = vcombine.low %v1272, %v1273
        %v1300 = vunpack.c.l.s4 1983009808
        %v1301 = vunpack.c.0.s8 %v1300
        %v1302 = vlaneseq
        %v1303 = vshrl.u32 %v1302, 7
        %v1304 = vsub.s32 %v1301, %v1303
        %v1305 = vrot.slane %v1298, %v1304
        %v1306 = vcombine.low %v1281, %v1289
        %v1307 = vcombine.high %v1281, %v1289
        %v1309 = vunpack.c.l.s4 1934713408
        %v1310 = vunpack.c.0.s8 %v1309
        %v1311 = vlaneseq
        %v1312 = vshrl.u32 %v1311, 7
        %v1313 = vsub.s32 %v1310, %v1312
        %v1314 = vrot.slane %v1306, %v1313
        %v1316 = vunpack.c.l.s4 1934713408
        %v1317 = vunpack.c.0.s8 %v1316
        %v1318 = vlaneseq
        %v1319 = vshrl.u32 %v1318, 7
        %v1320 = vsub.s32 %v1317, %v1319
        %v1321 = vrot.slane %v1307, %v1320
        %v1322 = vcombine.low %v1297, %v1305
        %v1323 = vcombine.high %v1297, %v1305
        %v1325 = vunpack.c.l.s4 1934713408
        %v1326 = vunpack.c.0.s8 %v1325
        %v1327 = vlaneseq
        %v1328 = vshrl.u32 %v1327, 7
        %v1329 = vsub.s32 %v1326, %v1328
        %v1330 = vrot.slane %v1322, %v1329
        %v1332 = vunpack.c.l.s4 1934713408
        %v1333 = vunpack.c.0.s8 %v1332
        %v1334 = vlaneseq
        %v1335 = vshrl.u32 %v1334, 7
        %v1336 = vsub.s32 %v1333, %v1335
        %v1337 = vrot.slane %v1323, %v1336
        %v1338 = vcombine.low %v1314, %v1330
        %v1339 = vcombine.high %v1314, %v1330
        %v1340 = vcombine.low %v1321, %v1337
        %v1341 = vcombine.high %v1321, %v1337
        %v1342 = vpack.c.bf16 %v1338, %v1338
        %v1343 = vpack.c.bf16 %v1339, %v1339
        %v1344 = vpack.c.bf16 %v1340, %v1340
        %v1345 = vpack.c.bf16 %v1341, %v1341
        %1347 = vrot.lane.b32.xlu0 %v1135, 96
        %v1348 = vpop.permute.xlu0 %1347
        %1350 = vrot.lane.b32.xlu0 %v1135, 64
        %v1351 = vpop.permute.xlu0 %1350
        %1353 = vrot.lane.b32.xlu0 %v1135, 32
        %v1354 = vpop.permute.xlu0 %1353
        %v1356 = vcombine.low %v1135, %v1351
        %v1357 = vcombine.high %v1135, %v1351
        %v1359 = vunpack.c.l.s4 1983009808
        %v1360 = vunpack.c.0.s8 %v1359
        %v1361 = vlaneseq
        %v1362 = vshrl.u32 %v1361, 7
        %v1363 = vsub.s32 %v1360, %v1362
        %v1364 = vrot.slane %v1356, %v1363
        %v1366 = vunpack.c.l.s4 1983009808
        %v1367 = vunpack.c.0.s8 %v1366
        %v1368 = vlaneseq
        %v1369 = vshrl.u32 %v1368, 7
        %v1370 = vsub.s32 %v1367, %v1369
        %v1371 = vrot.slane %v1357, %v1370
        %v1372 = vcombine.low %v1348, %v1354
        %v1373 = vcombine.high %v1348, %v1354
        %v1375 = vunpack.c.l.s4 1983009808
        %v1376 = vunpack.c.0.s8 %v1375
        %v1377 = vlaneseq
        %v1378 = vshrl.u32 %v1377, 7
        %v1379 = vsub.s32 %v1376, %v1378
        %v1380 = vrot.slane %v1372, %v1379
        %v1382 = vunpack.c.l.s4 1983009808
        %v1383 = vunpack.c.0.s8 %v1382
        %v1384 = vlaneseq
        %v1385 = vshrl.u32 %v1384, 7
        %v1386 = vsub.s32 %v1383, %v1385
        %v1387 = vrot.slane %v1373, %v1386
        %v1388 = vcombine.low %v1364, %v1380
        %v1389 = vcombine.high %v1364, %v1380
        %v1391 = vunpack.c.l.s4 1934713408
        %v1392 = vunpack.c.0.s8 %v1391
        %v1393 = vlaneseq
        %v1394 = vshrl.u32 %v1393, 7
        %v1395 = vsub.s32 %v1392, %v1394
        %v1396 = vrot.slane %v1388, %v1395
        %v1398 = vunpack.c.l.s4 1934713408
        %v1399 = vunpack.c.0.s8 %v1398
        %v1400 = vlaneseq
        %v1401 = vshrl.u32 %v1400, 7
        %v1402 = vsub.s32 %v1399, %v1401
        %v1403 = vrot.slane %v1389, %v1402
        %v1404 = vcombine.low %v1371, %v1387
        %v1405 = vcombine.high %v1371, %v1387
        %v1407 = vunpack.c.l.s4 1934713408
        %v1408 = vunpack.c.0.s8 %v1407
        %v1409 = vlaneseq
        %v1410 = vshrl.u32 %v1409, 7
        %v1411 = vsub.s32 %v1408, %v1410
        %v1412 = vrot.slane %v1404, %v1411
        %v1414 = vunpack.c.l.s4 1934713408
        %v1415 = vunpack.c.0.s8 %v1414
        %v1416 = vlaneseq
        %v1417 = vshrl.u32 %v1416, 7
        %v1418 = vsub.s32 %v1415, %v1417
        %v1419 = vrot.slane %v1405, %v1418
        %v1420 = vcombine.high %v1396, 0.0
        %v1421 = vcombine.high %v1403, 0.0
        %v1422 = vcombine.high %v1412, 0.0
        %v1423 = vcombine.high %v1419, 0.0
        %v1424 = vcombine.low %v1396, %v1403
        %v1426 = vunpack.c.l.s4 1983009808
        %v1427 = vunpack.c.0.s8 %v1426
        %v1428 = vlaneseq
        %v1429 = vshrl.u32 %v1428, 7
        %v1430 = vsub.s32 %v1427, %v1429
        %v1431 = vrot.slane %v1424, %v1430
        %v1432 = vcombine.low %v1420, %v1421
        %v1434 = vunpack.c.l.s4 1983009808
        %v1435 = vunpack.c.0.s8 %v1434
        %v1436 = vlaneseq
        %v1437 = vshrl.u32 %v1436, 7
        %v1438 = vsub.s32 %v1435, %v1437
        %v1439 = vrot.slane %v1432, %v1438
        %v1440 = vcombine.low %v1412, %v1419
        %v1442 = vunpack.c.l.s4 1983009808
        %v1443 = vunpack.c.0.s8 %v1442
        %v1444 = vlaneseq
        %v1445 = vshrl.u32 %v1444, 7
        %v1446 = vsub.s32 %v1443, %v1445
        %v1447 = vrot.slane %v1440, %v1446
        %v1448 = vcombine.low %v1422, %v1423
        %v1450 = vunpack.c.l.s4 1983009808
        %v1451 = vunpack.c.0.s8 %v1450
        %v1452 = vlaneseq
        %v1453 = vshrl.u32 %v1452, 7
        %v1454 = vsub.s32 %v1451, %v1453
        %v1455 = vrot.slane %v1448, %v1454
        %v1456 = vcombine.low %v1431, %v1439
        %v1457 = vcombine.high %v1431, %v1439
        %v1459 = vunpack.c.l.s4 1934713408
        %v1460 = vunpack.c.0.s8 %v1459
        %v1461 = vlaneseq
        %v1462 = vshrl.u32 %v1461, 7
        %v1463 = vsub.s32 %v1460, %v1462
        %v1464 = vrot.slane %v1456, %v1463
        %v1466 = vunpack.c.l.s4 1934713408
        %v1467 = vunpack.c.0.s8 %v1466
        %v1468 = vlaneseq
        %v1469 = vshrl.u32 %v1468, 7
        %v1470 = vsub.s32 %v1467, %v1469
        %v1471 = vrot.slane %v1457, %v1470
        %v1472 = vcombine.low %v1447, %v1455
        %v1473 = vcombine.high %v1447, %v1455
        %v1475 = vunpack.c.l.s4 1934713408
        %v1476 = vunpack.c.0.s8 %v1475
        %v1477 = vlaneseq
        %v1478 = vshrl.u32 %v1477, 7
        %v1479 = vsub.s32 %v1476, %v1478
        %v1480 = vrot.slane %v1472, %v1479
        %v1482 = vunpack.c.l.s4 1934713408
        %v1483 = vunpack.c.0.s8 %v1482
        %v1484 = vlaneseq
        %v1485 = vshrl.u32 %v1484, 7
        %v1486 = vsub.s32 %v1483, %v1485
        %v1487 = vrot.slane %v1473, %v1486
        %v1488 = vcombine.low %v1464, %v1480
        %v1489 = vcombine.high %v1464, %v1480
        %v1490 = vcombine.low %v1471, %v1487
        %v1491 = vcombine.high %v1471, %v1487
        %v1492 = vpack.c.bf16 %v1488, %v1488
        %v1493 = vpack.c.bf16 %v1489, %v1489
        %v1494 = vpack.c.bf16 %v1490, %v1490
        %v1495 = vpack.c.bf16 %v1491, %v1491
        %1497 = vrot.lane.b32.xlu0 %v1174, 96
        %v1498 = vpop.permute.xlu0 %1497
        %1500 = vrot.lane.b32.xlu0 %v1174, 64
        %v1501 = vpop.permute.xlu0 %1500
        %1503 = vrot.lane.b32.xlu0 %v1174, 32
        %v1504 = vpop.permute.xlu0 %1503
        %v1506 = vcombine.low %v1174, %v1501
        %v1507 = vcombine.high %v1174, %v1501
        %v1509 = vunpack.c.l.s4 1983009808
        %v1510 = vunpack.c.0.s8 %v1509
        %v1511 = vlaneseq
        %v1512 = vshrl.u32 %v1511, 7
        %v1513 = vsub.s32 %v1510, %v1512
        %v1514 = vrot.slane %v1506, %v1513
        %v1516 = vunpack.c.l.s4 1983009808
        %v1517 = vunpack.c.0.s8 %v1516
        %v1518 = vlaneseq
        %v1519 = vshrl.u32 %v1518, 7
        %v1520 = vsub.s32 %v1517, %v1519
        %v1521 = vrot.slane %v1507, %v1520
        %v1522 = vcombine.low %v1498, %v1504
        %v1523 = vcombine.high %v1498, %v1504
        %v1525 = vunpack.c.l.s4 1983009808
        %v1526 = vunpack.c.0.s8 %v1525
        %v1527 = vlaneseq
        %v1528 = vshrl.u32 %v1527, 7
        %v1529 = vsub.s32 %v1526, %v1528
        %v1530 = vrot.slane %v1522, %v1529
        %v1532 = vunpack.c.l.s4 1983009808
        %v1533 = vunpack.c.0.s8 %v1532
        %v1534 = vlaneseq
        %v1535 = vshrl.u32 %v1534, 7
        %v1536 = vsub.s32 %v1533, %v1535
        %v1537 = vrot.slane %v1523, %v1536
        %v1538 = vcombine.low %v1514, %v1530
        %v1539 = vcombine.high %v1514, %v1530
        %v1541 = vunpack.c.l.s4 1934713408
        %v1542 = vunpack.c.0.s8 %v1541
        %v1543 = vlaneseq
        %v1544 = vshrl.u32 %v1543, 7
        %v1545 = vsub.s32 %v1542, %v1544
        %v1546 = vrot.slane %v1538, %v1545
        %v1548 = vunpack.c.l.s4 1934713408
        %v1549 = vunpack.c.0.s8 %v1548
        %v1550 = vlaneseq
        %v1551 = vshrl.u32 %v1550, 7
        %v1552 = vsub.s32 %v1549, %v1551
        %v1553 = vrot.slane %v1539, %v1552
        %v1554 = vcombine.low %v1521, %v1537
        %v1555 = vcombine.high %v1521, %v1537
        %v1557 = vunpack.c.l.s4 1934713408
        %v1558 = vunpack.c.0.s8 %v1557
        %v1559 = vlaneseq
        %v1560 = vshrl.u32 %v1559, 7
        %v1561 = vsub.s32 %v1558, %v1560
        %v1562 = vrot.slane %v1554, %v1561
        %v1564 = vunpack.c.l.s4 1934713408
        %v1565 = vunpack.c.0.s8 %v1564
        %v1566 = vlaneseq
        %v1567 = vshrl.u32 %v1566, 7
        %v1568 = vsub.s32 %v1565, %v1567
        %v1569 = vrot.slane %v1555, %v1568
        %v1570 = vcombine.high %v1546, 0.0
        %v1571 = vcombine.high %v1553, 0.0
        %v1572 = vcombine.high %v1562, 0.0
        %v1573 = vcombine.high %v1569, 0.0
        %v1574 = vcombine.low %v1546, %v1553
        %v1576 = vunpack.c.l.s4 1983009808
        %v1577 = vunpack.c.0.s8 %v1576
        %v1578 = vlaneseq
        %v1579 = vshrl.u32 %v1578, 7
        %v1580 = vsub.s32 %v1577, %v1579
        %v1581 = vrot.slane %v1574, %v1580
        %v1582 = vcombine.low %v1570, %v1571
        %v1584 = vunpack.c.l.s4 1983009808
        %v1585 = vunpack.c.0.s8 %v1584
        %v1586 = vlaneseq
        %v1587 = vshrl.u32 %v1586, 7
        %v1588 = vsub.s32 %v1585, %v1587
        %v1589 = vrot.slane %v1582, %v1588
        %v1590 = vcombine.low %v1562, %v1569
        %v1592 = vunpack.c.l.s4 1983009808
        %v1593 = vunpack.c.0.s8 %v1592
        %v1594 = vlaneseq
        %v1595 = vshrl.u32 %v1594, 7
        %v1596 = vsub.s32 %v1593, %v1595
        %v1597 = vrot.slane %v1590, %v1596
        %v1598 = vcombine.low %v1572, %v1573
        %v1600 = vunpack.c.l.s4 1983009808
        %v1601 = vunpack.c.0.s8 %v1600
        %v1602 = vlaneseq
        %v1603 = vshrl.u32 %v1602, 7
        %v1604 = vsub.s32 %v1601, %v1603
        %v1605 = vrot.slane %v1598, %v1604
        %v1606 = vcombine.low %v1581, %v1589
        %v1607 = vcombine.high %v1581, %v1589
        %v1609 = vunpack.c.l.s4 1934713408
        %v1610 = vunpack.c.0.s8 %v1609
        %v1611 = vlaneseq
        %v1612 = vshrl.u32 %v1611, 7
        %v1613 = vsub.s32 %v1610, %v1612
        %v1614 = vrot.slane %v1606, %v1613
        %v1616 = vunpack.c.l.s4 1934713408
        %v1617 = vunpack.c.0.s8 %v1616
        %v1618 = vlaneseq
        %v1619 = vshrl.u32 %v1618, 7
        %v1620 = vsub.s32 %v1617, %v1619
        %v1621 = vrot.slane %v1607, %v1620
        %v1622 = vcombine.low %v1597, %v1605
        %v1623 = vcombine.high %v1597, %v1605
        %v1625 = vunpack.c.l.s4 1934713408
        %v1626 = vunpack.c.0.s8 %v1625
        %v1627 = vlaneseq
        %v1628 = vshrl.u32 %v1627, 7
        %v1629 = vsub.s32 %v1626, %v1628
        %v1630 = vrot.slane %v1622, %v1629
        %v1632 = vunpack.c.l.s4 1934713408
        %v1633 = vunpack.c.0.s8 %v1632
        %v1634 = vlaneseq
        %v1635 = vshrl.u32 %v1634, 7
        %v1636 = vsub.s32 %v1633, %v1635
        %v1637 = vrot.slane %v1623, %v1636
        %v1638 = vcombine.low %v1614, %v1630
        %v1639 = vcombine.high %v1614, %v1630
        %v1640 = vcombine.low %v1621, %v1637
        %v1641 = vcombine.high %v1621, %v1637
        %v1642 = vpack.c.bf16 %v1638, %v1638
        %v1643 = vpack.c.bf16 %v1639, %v1639
        %v1644 = vpack.c.bf16 %v1640, %v1640
        %v1645 = vpack.c.bf16 %v1641, %v1641
        %vm1646 = vcmask 261120
        %v1648 = vsel %vm1646, %v1342, 0
        %v1651 = vsel %vm1646, %v1492, 0
        %1653 = vmatprep.subr.bf16.mxu0 0
        %1654 = vmatpush1.bf16.xpose.msra.mxu0 %v1651
        %1655 = vmatprep.subr.bf16.mxu0 0
        %1656 = vmatpush1.bf16.xpose.msra.mxu0 0
        %1657 = vmatprep.subr.bf16.mxu0 0
        %1658 = vmatpush1.bf16.xpose.msra.mxu0 0
        %1659 = vmatprep.subr.bf16.mxu0 0
        %1660 = vmatpush1.bf16.xpose.msra.mxu0 0
        %1661 = vmatprep.subr.bf16.mxu0 0
        %1662 = vmatpush1.bf16.xpose.msra.mxu0 0
        %1663 = vmatprep.subr.bf16.mxu0 0
        %1664 = vmatpush1.bf16.xpose.msra.mxu0 0
        %1665 = vmatprep.subr.bf16.mxu0 0
        %1666 = vmatpush1.bf16.xpose.msra.mxu0 0
        %1667 = vmatprep.subr.bf16.mxu0 0
        %1668 = vmatpush1.bf16.xpose.msra.mxu0 0
        %1669 = vmatprep.subr.bf16.mxu0 0
        %1670 = vmatpush1.bf16.xpose.msra.mxu0 0
        %1671 = vmatprep.subr.bf16.mxu0 0
        %1672 = vmatpush1.bf16.xpose.msra.mxu0 0
        %1673 = vmatprep.subr.bf16.mxu0 0
        %1674 = vmatpush1.bf16.xpose.msra.mxu0 0
        %1675 = vmatprep.subr.bf16.mxu0 0
        %1676 = vmatpush1.bf16.xpose.msra.mxu0 0
        %1677 = vmatprep.subr.bf16.mxu0 0
        %1678 = vmatpush1.bf16.xpose.msra.mxu0 0
        %1679 = vmatprep.subr.bf16.mxu0 0
        %1680 = vmatpush1.bf16.xpose.msra.mxu0 0
        %1681 = vmatprep.subr.bf16.mxu0 0
        %1682 = vmatpush1.bf16.xpose.msra.mxu0 0
        %1683 = vmatprep.subr.bf16.mxu0 0
        %1684 = vmatpush1.bf16.xpose.msra.mxu0 0
        %1685 = vmatprep.mubr.bf16.mxu0 0
        %1686 = vmatmul.mubr.bf16.gmra.mrb[0].mxu0 %v1648
        %v1687 = vpop.f32.mrb[0].mxu0
        %v1688 = vadd.f32 0.0, %v1687
        %v1689 = vpop.f32.mrb[0].mxu0
        %v1690 = vpop.f32.mrb[0].mxu0
        %v1691 = vpop.f32.mrb[0].mxu0
        %1692 = vdwg.mxu0
        %v1694 = vsel %vm1646, %v1343, 0
        %v1697 = vsel %vm1646, %v1493, 0
        %1699 = vmatprep.subr.bf16.mxu0 0
        %1700 = vmatpush1.bf16.xpose.msra.mxu0 %v1697
        %1701 = vmatprep.subr.bf16.mxu0 0
        %1702 = vmatpush1.bf16.xpose.msra.mxu0 0
        %1703 = vmatprep.subr.bf16.mxu0 0
        %1704 = vmatpush1.bf16.xpose.msra.mxu0 0
        %1705 = vmatprep.subr.bf16.mxu0 0
        %1706 = vmatpush1.bf16.xpose.msra.mxu0 0
        %1707 = vmatprep.subr.bf16.mxu0 0
        %1708 = vmatpush1.bf16.xpose.msra.mxu0 0
        %1709 = vmatprep.subr.bf16.mxu0 0
        %1710 = vmatpush1.bf16.xpose.msra.mxu0 0
        %1711 = vmatprep.subr.bf16.mxu0 0
        %1712 = vmatpush1.bf16.xpose.msra.mxu0 0
        %1713 = vmatprep.subr.bf16.mxu0 0
        %1714 = vmatpush1.bf16.xpose.msra.mxu0 0
        %1715 = vmatprep.subr.bf16.mxu0 0
        %1716 = vmatpush1.bf16.xpose.msra.mxu0 0
        %1717 = vmatprep.subr.bf16.mxu0 0
        %1718 = vmatpush1.bf16.xpose.msra.mxu0 0
        %1719 = vmatprep.subr.bf16.mxu0 0
        %1720 = vmatpush1.bf16.xpose.msra.mxu0 0
        %1721 = vmatprep.subr.bf16.mxu0 0
        %1722 = vmatpush1.bf16.xpose.msra.mxu0 0
        %1723 = vmatprep.subr.bf16.mxu0 0
        %1724 = vmatpush1.bf16.xpose.msra.mxu0 0
        %1725 = vmatprep.subr.bf16.mxu0 0
        %1726 = vmatpush1.bf16.xpose.msra.mxu0 0
        %1727 = vmatprep.subr.bf16.mxu0 0
        %1728 = vmatpush1.bf16.xpose.msra.mxu0 0
        %1729 = vmatprep.subr.bf16.mxu0 0
        %1730 = vmatpush1.bf16.xpose.msra.mxu0 0
        %1731 = vmatprep.mubr.bf16.mxu0 0
        %1732 = vmatmul.mubr.bf16.gmra.mrb[0].mxu0 %v1694
        %v1733 = vpop.f32.mrb[0].mxu0
        %v1734 = vadd.f32 0.0, %v1733
        %v1735 = vpop.f32.mrb[0].mxu0
        %v1736 = vpop.f32.mrb[0].mxu0
        %v1737 = vpop.f32.mrb[0].mxu0
        %1738 = vdwg.mxu0
        %v1740 = vsel %vm1646, %v1344, 0
        %v1743 = vsel %vm1646, %v1494, 0
        %1745 = vmatprep.subr.bf16.mxu0 0
        %1746 = vmatpush1.bf16.xpose.msra.mxu0 %v1743
        %1747 = vmatprep.subr.bf16.mxu0 0
        %1748 = vmatpush1.bf16.xpose.msra.mxu0 0
        %1749 = vmatprep.subr.bf16.mxu0 0
        %1750 = vmatpush1.bf16.xpose.msra.mxu0 0
        %1751 = vmatprep.subr.bf16.mxu0 0
        %1752 = vmatpush1.bf16.xpose.msra.mxu0 0
        %1753 = vmatprep.subr.bf16.mxu0 0
        %1754 = vmatpush1.bf16.xpose.msra.mxu0 0
        %1755 = vmatprep.subr.bf16.mxu0 0
        %1756 = vmatpush1.bf16.xpose.msra.mxu0 0
        %1757 = vmatprep.subr.bf16.mxu0 0
        %1758 = vmatpush1.bf16.xpose.msra.mxu0 0
        %1759 = vmatprep.subr.bf16.mxu0 0
        %1760 = vmatpush1.bf16.xpose.msra.mxu0 0
        %1761 = vmatprep.subr.bf16.mxu0 0
        %1762 = vmatpush1.bf16.xpose.msra.mxu0 0
        %1763 = vmatprep.subr.bf16.mxu0 0
        %1764 = vmatpush1.bf16.xpose.msra.mxu0 0
        %1765 = vmatprep.subr.bf16.mxu0 0
        %1766 = vmatpush1.bf16.xpose.msra.mxu0 0
        %1767 = vmatprep.subr.bf16.mxu0 0
        %1768 = vmatpush1.bf16.xpose.msra.mxu0 0
        %1769 = vmatprep.subr.bf16.mxu0 0
        %1770 = vmatpush1.bf16.xpose.msra.mxu0 0
        %1771 = vmatprep.subr.bf16.mxu0 0
        %1772 = vmatpush1.bf16.xpose.msra.mxu0 0
        %1773 = vmatprep.subr.bf16.mxu0 0
        %1774 = vmatpush1.bf16.xpose.msra.mxu0 0
        %1775 = vmatprep.subr.bf16.mxu0 0
        %1776 = vmatpush1.bf16.xpose.msra.mxu0 0
        %1777 = vmatprep.mubr.bf16.mxu0 0
        %1778 = vmatmul.mubr.bf16.gmra.mrb[0].mxu0 %v1740
        %v1779 = vpop.f32.mrb[0].mxu0
        %v1780 = vadd.f32 0.0, %v1779
        %v1781 = vpop.f32.mrb[0].mxu0
        %v1782 = vpop.f32.mrb[0].mxu0
        %v1783 = vpop.f32.mrb[0].mxu0
        %1784 = vdwg.mxu0
        %v1786 = vsel %vm1646, %v1345, 0
        %v1789 = vsel %vm1646, %v1495, 0
        %1791 = vmatprep.subr.bf16.mxu0 0
        %1792 = vmatpush1.bf16.xpose.msra.mxu0 %v1789
        %1793 = vmatprep.subr.bf16.mxu0 0
        %1794 = vmatpush1.bf16.xpose.msra.mxu0 0
        %1795 = vmatprep.subr.bf16.mxu0 0
        %1796 = vmatpush1.bf16.xpose.msra.mxu0 0
        %1797 = vmatprep.subr.bf16.mxu0 0
        %1798 = vmatpush1.bf16.xpose.msra.mxu0 0
        %1799 = vmatprep.subr.bf16.mxu0 0
        %1800 = vmatpush1.bf16.xpose.msra.mxu0 0
        %1801 = vmatprep.subr.bf16.mxu0 0
        %1802 = vmatpush1.bf16.xpose.msra.mxu0 0
        %1803 = vmatprep.subr.bf16.mxu0 0
        %1804 = vmatpush1.bf16.xpose.msra.mxu0 0
        %1805 = vmatprep.subr.bf16.mxu0 0
        %1806 = vmatpush1.bf16.xpose.msra.mxu0 0
        %1807 = vmatprep.subr.bf16.mxu0 0
        %1808 = vmatpush1.bf16.xpose.msra.mxu0 0
        %1809 = vmatprep.subr.bf16.mxu0 0
        %1810 = vmatpush1.bf16.xpose.msra.mxu0 0
        %1811 = vmatprep.subr.bf16.mxu0 0
        %1812 = vmatpush1.bf16.xpose.msra.mxu0 0
        %1813 = vmatprep.subr.bf16.mxu0 0
        %1814 = vmatpush1.bf16.xpose.msra.mxu0 0
        %1815 = vmatprep.subr.bf16.mxu0 0
        %1816 = vmatpush1.bf16.xpose.msra.mxu0 0
        %1817 = vmatprep.subr.bf16.mxu0 0
        %1818 = vmatpush1.bf16.xpose.msra.mxu0 0
        %1819 = vmatprep.subr.bf16.mxu0 0
        %1820 = vmatpush1.bf16.xpose.msra.mxu0 0
        %1821 = vmatprep.subr.bf16.mxu0 0
        %1822 = vmatpush1.bf16.xpose.msra.mxu0 0
        %1823 = vmatprep.mubr.bf16.mxu0 0
        %1824 = vmatmul.mubr.bf16.gmra.mrb[0].mxu0 %v1786
        %v1825 = vpop.f32.mrb[0].mxu0
        %v1826 = vadd.f32 0.0, %v1825
        %v1827 = vpop.f32.mrb[0].mxu0
        %v1828 = vpop.f32.mrb[0].mxu0
        %v1829 = vpop.f32.mrb[0].mxu0
        %1830 = vdwg.mxu0
        %v1831 = vmul.f32 %v1688, 0.17677669
        %v1832 = vmul.f32 %v1734, 0.17677669
        %v1833 = vmul.f32 %v1780, 0.17677669
        %v1834 = vmul.f32 %v1826, 0.17677669
        %v1835 = vadd.f32 %v1831, %v918
        %v1836 = vadd.f32 %v1832, %v918
        %v1837 = vadd.f32 %v1833, %v918
        %v1838 = vadd.f32 %v1834, %v918
        %vm1839 = vcmask 64512
        %v1840 = vsel %vm1839, %v1835, -inf
        %1841 = vmax.xlane.f32.xlu0 %v1840
        %v1842 = vpop.xlane.xlu0 %1841
        %v1843 = vsel %vm1839, %v1836, -inf
        %1844 = vmax.xlane.f32.xlu0 %v1843
        %v1845 = vpop.xlane.xlu0 %1844
        %v1846 = vsel %vm1839, %v1837, -inf
        %1847 = vmax.xlane.f32.xlu0 %v1846
        %v1848 = vpop.xlane.xlu0 %1847
        %v1849 = vsel %vm1839, %v1838, -inf
        %1850 = vmax.xlane.f32.xlu0 %v1849
        %v1851 = vpop.xlane.xlu0 %1850
        %v1852 = vsub.f32 %v1835, %v1842
        %v1853 = vsub.f32 %v1836, %v1845
        %v1854 = vsub.f32 %v1837, %v1848
        %v1855 = vsub.f32 %v1838, %v1851
        %v1856 = vmul.f32 %v1852, 1.442695
        %v1857 = vpow.pop %v1856
        %v1858 = vmul.f32 %v1853, 1.442695
        %v1859 = vpow.pop %v1858
        %v1860 = vmul.f32 %v1854, 1.442695
        %v1861 = vpow.pop %v1860
        %v1862 = vmul.f32 %v1855, 1.442695
        %v1863 = vpow.pop %v1862
        %v1864 = vsel %vm1839, %v1857, 0.0
        %1865 = vadd.xlane.f32.xlu0 %v1864
        %v1866 = vpop.xlane.xlu0 %1865
        %v1867 = vsel %vm1839, %v1859, 0.0
        %1868 = vadd.xlane.f32.xlu0 %v1867
        %v1869 = vpop.xlane.xlu0 %1868
        %v1870 = vsel %vm1839, %v1861, 0.0
        %1871 = vadd.xlane.f32.xlu0 %v1870
        %v1872 = vpop.xlane.xlu0 %1871
        %v1873 = vsel %vm1839, %v1863, 0.0
        %1874 = vadd.xlane.f32.xlu0 %v1873
        %v1875 = vpop.xlane.xlu0 %1874
        %v1876 = vrcp.pop %v1866
        %v1877 = vrcp.pop %v1869
        %v1878 = vrcp.pop %v1872
        %v1879 = vrcp.pop %v1875
        %v1880 = vmul.f32 %v1857, %v1876
        %v1881 = vmul.f32 %v1859, %v1877
        %v1882 = vmul.f32 %v1861, %v1878
        %v1883 = vmul.f32 %v1863, %v1879
        %v1884 = vpack.c.bf16 %v1880, %v1880
        %v1885 = vpack.c.bf16 %v1881, %v1881
        %v1886 = vpack.c.bf16 %v1882, %v1882
        %v1887 = vpack.c.bf16 %v1883, %v1883
        %v1889 = vsel %vm1839, %v1884, 0
        %vm1891 = vcmask 1043456
        %v1893 = vsel %vm1891, %v1642, 0
        %1895 = vmatprep.subr.bf16.mxu0 0
        %1896 = vmatpush1.bf16.msra.mxu0 %v1893
        %1897 = vmatprep.subr.bf16.mxu0 0
        %1898 = vmatpush1.bf16.msra.mxu0 0
        %1899 = vmatprep.subr.bf16.mxu0 0
        %1900 = vmatpush1.bf16.msra.mxu0 0
        %1901 = vmatprep.subr.bf16.mxu0 0
        %1902 = vmatpush1.bf16.msra.mxu0 0
        %1903 = vmatprep.subr.bf16.mxu0 0
        %1904 = vmatpush1.bf16.msra.mxu0 0
        %1905 = vmatprep.subr.bf16.mxu0 0
        %1906 = vmatpush1.bf16.msra.mxu0 0
        %1907 = vmatprep.subr.bf16.mxu0 0
        %1908 = vmatpush1.bf16.msra.mxu0 0
        %1909 = vmatprep.subr.bf16.mxu0 0
        %1910 = vmatpush1.bf16.msra.mxu0 0
        %1911 = vmatprep.subr.bf16.mxu0 0
        %1912 = vmatpush1.bf16.msra.mxu0 0
        %1913 = vmatprep.subr.bf16.mxu0 0
        %1914 = vmatpush1.bf16.msra.mxu0 0
        %1915 = vmatprep.subr.bf16.mxu0 0
        %1916 = vmatpush1.bf16.msra.mxu0 0
        %1917 = vmatprep.subr.bf16.mxu0 0
        %1918 = vmatpush1.bf16.msra.mxu0 0
        %1919 = vmatprep.subr.bf16.mxu0 0
        %1920 = vmatpush1.bf16.msra.mxu0 0
        %1921 = vmatprep.subr.bf16.mxu0 0
        %1922 = vmatpush1.bf16.msra.mxu0 0
        %1923 = vmatprep.subr.bf16.mxu0 0
        %1924 = vmatpush1.bf16.msra.mxu0 0
        %1925 = vmatprep.subr.bf16.mxu0 0
        %1926 = vmatpush1.bf16.msra.mxu0 0
        %1927 = vmatprep.mubr.bf16.mxu0 0
        %1928 = vmatmul.mubr.bf16.gmra.mrb[0].mxu0 %v1889
        %v1929 = vpop.f32.mrb[0].mxu0
        %v1930 = vadd.f32 0.0, %v1929
        %v1931 = vpop.f32.mrb[0].mxu0
        %v1932 = vpop.f32.mrb[0].mxu0
        %v1933 = vpop.f32.mrb[0].mxu0
        %1934 = vdwg.mxu0
        %v1936 = vsel %vm1839, %v1885, 0
        %v1939 = vsel %vm1891, %v1643, 0
        %1941 = vmatprep.subr.bf16.mxu0 0
        %1942 = vmatpush1.bf16.msra.mxu0 %v1939
        %1943 = vmatprep.subr.bf16.mxu0 0
        %1944 = vmatpush1.bf16.msra.mxu0 0
        %1945 = vmatprep.subr.bf16.mxu0 0
        %1946 = vmatpush1.bf16.msra.mxu0 0
        %1947 = vmatprep.subr.bf16.mxu0 0
        %1948 = vmatpush1.bf16.msra.mxu0 0
        %1949 = vmatprep.subr.bf16.mxu0 0
        %1950 = vmatpush1.bf16.msra.mxu0 0
        %1951 = vmatprep.subr.bf16.mxu0 0
        %1952 = vmatpush1.bf16.msra.mxu0 0
        %1953 = vmatprep.subr.bf16.mxu0 0
        %1954 = vmatpush1.bf16.msra.mxu0 0
        %1955 = vmatprep.subr.bf16.mxu0 0
        %1956 = vmatpush1.bf16.msra.mxu0 0
        %1957 = vmatprep.subr.bf16.mxu0 0
        %1958 = vmatpush1.bf16.msra.mxu0 0
        %1959 = vmatprep.subr.bf16.mxu0 0
        %1960 = vmatpush1.bf16.msra.mxu0 0
        %1961 = vmatprep.subr.bf16.mxu0 0
        %1962 = vmatpush1.bf16.msra.mxu0 0
        %1963 = vmatprep.subr.bf16.mxu0 0
        %1964 = vmatpush1.bf16.msra.mxu0 0
        %1965 = vmatprep.subr.bf16.mxu0 0
        %1966 = vmatpush1.bf16.msra.mxu0 0
        %1967 = vmatprep.subr.bf16.mxu0 0
        %1968 = vmatpush1.bf16.msra.mxu0 0
        %1969 = vmatprep.subr.bf16.mxu0 0
        %1970 = vmatpush1.bf16.msra.mxu0 0
        %1971 = vmatprep.subr.bf16.mxu0 0
        %1972 = vmatpush1.bf16.msra.mxu0 0
        %1973 = vmatprep.mubr.bf16.mxu0 0
        %1974 = vmatmul.mubr.bf16.gmra.mrb[0].mxu0 %v1936
        %v1975 = vpop.f32.mrb[0].mxu0
        %v1976 = vadd.f32 0.0, %v1975
        %v1977 = vpop.f32.mrb[0].mxu0
        %v1978 = vpop.f32.mrb[0].mxu0
        %v1979 = vpop.f32.mrb[0].mxu0
        %1980 = vdwg.mxu0
        %v1982 = vsel %vm1839, %v1886, 0
        %v1985 = vsel %vm1891, %v1644, 0
        %1987 = vmatprep.subr.bf16.mxu0 0
        %1988 = vmatpush1.bf16.msra.mxu0 %v1985
        %1989 = vmatprep.subr.bf16.mxu0 0
        %1990 = vmatpush1.bf16.msra.mxu0 0
        %1991 = vmatprep.subr.bf16.mxu0 0
        %1992 = vmatpush1.bf16.msra.mxu0 0
        %1993 = vmatprep.subr.bf16.mxu0 0
        %1994 = vmatpush1.bf16.msra.mxu0 0
        %1995 = vmatprep.subr.bf16.mxu0 0
        %1996 = vmatpush1.bf16.msra.mxu0 0
        %1997 = vmatprep.subr.bf16.mxu0 0
        %1998 = vmatpush1.bf16.msra.mxu0 0
        %1999 = vmatprep.subr.bf16.mxu0 0
        %2000 = vmatpush1.bf16.msra.mxu0 0
        %2001 = vmatprep.subr.bf16.mxu0 0
        %2002 = vmatpush1.bf16.msra.mxu0 0
        %2003 = vmatprep.subr.bf16.mxu0 0
        %2004 = vmatpush1.bf16.msra.mxu0 0
        %2005 = vmatprep.subr.bf16.mxu0 0
        %2006 = vmatpush1.bf16.msra.mxu0 0
        %2007 = vmatprep.subr.bf16.mxu0 0
        %2008 = vmatpush1.bf16.msra.mxu0 0
        %2009 = vmatprep.subr.bf16.mxu0 0
        %2010 = vmatpush1.bf16.msra.mxu0 0
        %2011 = vmatprep.subr.bf16.mxu0 0
        %2012 = vmatpush1.bf16.msra.mxu0 0
        %2013 = vmatprep.subr.bf16.mxu0 0
        %2014 = vmatpush1.bf16.msra.mxu0 0
        %2015 = vmatprep.subr.bf16.mxu0 0
        %2016 = vmatpush1.bf16.msra.mxu0 0
        %2017 = vmatprep.subr.bf16.mxu0 0
        %2018 = vmatpush1.bf16.msra.mxu0 0
        %2019 = vmatprep.mubr.bf16.mxu0 0
        %2020 = vmatmul.mubr.bf16.gmra.mrb[0].mxu0 %v1982
        %v2021 = vpop.f32.mrb[0].mxu0
        %v2022 = vadd.f32 0.0, %v2021
        %v2023 = vpop.f32.mrb[0].mxu0
        %v2024 = vpop.f32.mrb[0].mxu0
        %v2025 = vpop.f32.mrb[0].mxu0
        %2026 = vdwg.mxu0
        %v2028 = vsel %vm1839, %v1887, 0
        %v2031 = vsel %vm1891, %v1645, 0
        %2033 = vmatprep.subr.bf16.mxu0 0
        %2034 = vmatpush1.bf16.msra.mxu0 %v2031
        %2035 = vmatprep.subr.bf16.mxu0 0
        %2036 = vmatpush1.bf16.msra.mxu0 0
        %2037 = vmatprep.subr.bf16.mxu0 0
        %2038 = vmatpush1.bf16.msra.mxu0 0
        %2039 = vmatprep.subr.bf16.mxu0 0
        %2040 = vmatpush1.bf16.msra.mxu0 0
        %2041 = vmatprep.subr.bf16.mxu0 0
        %2042 = vmatpush1.bf16.msra.mxu0 0
        %2043 = vmatprep.subr.bf16.mxu0 0
        %2044 = vmatpush1.bf16.msra.mxu0 0
        %2045 = vmatprep.subr.bf16.mxu0 0
        %2046 = vmatpush1.bf16.msra.mxu0 0
        %2047 = vmatprep.subr.bf16.mxu0 0
        %2048 = vmatpush1.bf16.msra.mxu0 0
        %2049 = vmatprep.subr.bf16.mxu0 0
        %2050 = vmatpush1.bf16.msra.mxu0 0
        %2051 = vmatprep.subr.bf16.mxu0 0
        %2052 = vmatpush1.bf16.msra.mxu0 0
        %2053 = vmatprep.subr.bf16.mxu0 0
        %2054 = vmatpush1.bf16.msra.mxu0 0
        %2055 = vmatprep.subr.bf16.mxu0 0
        %2056 = vmatpush1.bf16.msra.mxu0 0
        %2057 = vmatprep.subr.bf16.mxu0 0
        %2058 = vmatpush1.bf16.msra.mxu0 0
        %2059 = vmatprep.subr.bf16.mxu0 0
        %2060 = vmatpush1.bf16.msra.mxu0 0
        %2061 = vmatprep.subr.bf16.mxu0 0
        %2062 = vmatpush1.bf16.msra.mxu0 0
        %2063 = vmatprep.subr.bf16.mxu0 0
        %2064 = vmatpush1.bf16.msra.mxu0 0
        %2065 = vmatprep.mubr.bf16.mxu0 0
        %2066 = vmatmul.mubr.bf16.gmra.mrb[0].mxu0 %v2028
        %v2067 = vpop.f32.mrb[0].mxu0
        %v2068 = vadd.f32 0.0, %v2067
        %v2069 = vpop.f32.mrb[0].mxu0
        %v2070 = vpop.f32.mrb[0].mxu0
        %v2071 = vpop.f32.mrb[0].mxu0
        %2072 = vdwg.mxu0
        %v2073 = vcombine.low %v1930, %v2022
        %v2074 = vcombine.high %v1930, %v2022
        %v2076 = vunpack.c.l.s4 1983009808
        %v2077 = vunpack.c.0.s8 %v2076
        %v2078 = vlaneseq
        %v2079 = vshrl.u32 %v2078, 7
        %v2080 = vsub.s32 %v2077, %v2079
        %v2081 = vrot.slane %v2073, %v2080
        %v2083 = vunpack.c.l.s4 1983009808
        %v2084 = vunpack.c.0.s8 %v2083
        %v2085 = vlaneseq
        %v2086 = vshrl.u32 %v2085, 7
        %v2087 = vsub.s32 %v2084, %v2086
        %v2088 = vrot.slane %v2074, %v2087
        %v2089 = vcombine.low %v1976, %v2068
        %v2090 = vcombine.high %v1976, %v2068
        %v2092 = vunpack.c.l.s4 1983009808
        %v2093 = vunpack.c.0.s8 %v2092
        %v2094 = vlaneseq
        %v2095 = vshrl.u32 %v2094, 7
        %v2096 = vsub.s32 %v2093, %v2095
        %v2097 = vrot.slane %v2089, %v2096
        %v2099 = vunpack.c.l.s4 1983009808
        %v2100 = vunpack.c.0.s8 %v2099
        %v2101 = vlaneseq
        %v2102 = vshrl.u32 %v2101, 7
        %v2103 = vsub.s32 %v2100, %v2102
        %v2104 = vrot.slane %v2090, %v2103
        %v2105 = vcombine.low %v2081, %v2097
        %v2106 = vcombine.high %v2081, %v2097
        %v2108 = vunpack.c.l.s4 1934713408
        %v2109 = vunpack.c.0.s8 %v2108
        %v2110 = vlaneseq
        %v2111 = vshrl.u32 %v2110, 7
        %v2112 = vsub.s32 %v2109, %v2111
        %v2113 = vrot.slane %v2105, %v2112
        %v2115 = vunpack.c.l.s4 1934713408
        %v2116 = vunpack.c.0.s8 %v2115
        %v2117 = vlaneseq
        %v2118 = vshrl.u32 %v2117, 7
        %v2119 = vsub.s32 %v2116, %v2118
        %v2120 = vrot.slane %v2106, %v2119
        %v2121 = vcombine.low %v2088, %v2104
        %v2122 = vcombine.high %v2088, %v2104
        %v2124 = vunpack.c.l.s4 1934713408
        %v2125 = vunpack.c.0.s8 %v2124
        %v2126 = vlaneseq
        %v2127 = vshrl.u32 %v2126, 7
        %v2128 = vsub.s32 %v2125, %v2127
        %v2129 = vrot.slane %v2121, %v2128
        %v2131 = vunpack.c.l.s4 1934713408
        %v2132 = vunpack.c.0.s8 %v2131
        %v2133 = vlaneseq
        %v2134 = vshrl.u32 %v2133, 7
        %v2135 = vsub.s32 %v2132, %v2134
        %v2136 = vrot.slane %v2122, %v2135
        %v2137 = vcombine.high %v2113, 0.0
        %v2138 = vcombine.high %v2120, 0.0
        %v2139 = vcombine.high %v2129, 0.0
        %v2140 = vcombine.high %v2136, 0.0
        %v2141 = vcombine.low %v2113, %v2120
        %v2143 = vunpack.c.l.s4 1983009808
        %v2144 = vunpack.c.0.s8 %v2143
        %v2145 = vlaneseq
        %v2146 = vshrl.u32 %v2145, 7
        %v2147 = vsub.s32 %v2144, %v2146
        %v2148 = vrot.slane %v2141, %v2147
        %v2149 = vcombine.low %v2137, %v2138
        %v2151 = vunpack.c.l.s4 1983009808
        %v2152 = vunpack.c.0.s8 %v2151
        %v2153 = vlaneseq
        %v2154 = vshrl.u32 %v2153, 7
        %v2155 = vsub.s32 %v2152, %v2154
        %v2156 = vrot.slane %v2149, %v2155
        %v2157 = vcombine.low %v2129, %v2136
        %v2159 = vunpack.c.l.s4 1983009808
        %v2160 = vunpack.c.0.s8 %v2159
        %v2161 = vlaneseq
        %v2162 = vshrl.u32 %v2161, 7
        %v2163 = vsub.s32 %v2160, %v2162
        %v2164 = vrot.slane %v2157, %v2163
        %v2165 = vcombine.low %v2139, %v2140
        %v2167 = vunpack.c.l.s4 1983009808
        %v2168 = vunpack.c.0.s8 %v2167
        %v2169 = vlaneseq
        %v2170 = vshrl.u32 %v2169, 7
        %v2171 = vsub.s32 %v2168, %v2170
        %v2172 = vrot.slane %v2165, %v2171
        %v2173 = vcombine.low %v2148, %v2156
        %v2174 = vcombine.high %v2148, %v2156
        %v2176 = vunpack.c.l.s4 1934713408
        %v2177 = vunpack.c.0.s8 %v2176
        %v2178 = vlaneseq
        %v2179 = vshrl.u32 %v2178, 7
        %v2180 = vsub.s32 %v2177, %v2179
        %v2181 = vrot.slane %v2173, %v2180
        %v2183 = vunpack.c.l.s4 1934713408
        %v2184 = vunpack.c.0.s8 %v2183
        %v2185 = vlaneseq
        %v2186 = vshrl.u32 %v2185, 7
        %v2187 = vsub.s32 %v2184, %v2186
        %v2188 = vrot.slane %v2174, %v2187
        %v2189 = vcombine.low %v2164, %v2172
        %v2190 = vcombine.high %v2164, %v2172
        %v2192 = vunpack.c.l.s4 1934713408
        %v2193 = vunpack.c.0.s8 %v2192
        %v2194 = vlaneseq
        %v2195 = vshrl.u32 %v2194, 7
        %v2196 = vsub.s32 %v2193, %v2195
        %v2197 = vrot.slane %v2189, %v2196
        %v2199 = vunpack.c.l.s4 1934713408
        %v2200 = vunpack.c.0.s8 %v2199
        %v2201 = vlaneseq
        %v2202 = vshrl.u32 %v2201, 7
        %v2203 = vsub.s32 %v2200, %v2202
        %v2204 = vrot.slane %v2190, %v2203
        %v2205 = vcombine.low %v2181, %v2197
        %v2206 = vcombine.high %v2181, %v2197
        %v2207 = vcombine.low %v2188, %v2204
        %v2208 = vcombine.high %v2188, %v2204
        %2210 = vrot.lane.b32.xlu0 %v2206, 32
        %v2211 = vpop.permute.xlu0 %2210
        %2214 = vrot.lane.b32.xlu0 %v2207, 64
        %v2215 = vpop.permute.xlu0 %2214
        %2218 = vrot.lane.b32.xlu0 %v2208, 96
        %v2219 = vpop.permute.xlu0 %2218
        %v2221 = vsel %vm1646, %v2205, %v2211
        %vm2222 = vcmask 523264
        %v2223 = vsel %vm2222, %v2221, %v2215
        %vm2224 = vcmask 785408
        %v2225 = vsel %vm2224, %v2223, %v2219
        %v2226 = vpack.c.bf16 %v2225, %v2225
        %v2228 = vlaneseq
        %v2229 = vshrl.u32 %v2228, 7
        %v2230 = vsub.s32 0, %v2229
        %v2231 = vrot.slane %v1195, %v2230
        %v2249 = vunpack.c.l.b16 %v1179
        %v2250 = vunpack.c.l.b16 %v1180
        %v2251 = vunpack.c.l.b16 %v1181
        %v2252 = vunpack.c.l.b16 %v1182
        %v2253 = vunpack.c.l.b16 %v1183
        %v2254 = vunpack.c.l.b16 %v1184
        %v2255 = vunpack.c.l.b16 %v1185
        %v2256 = vunpack.c.l.b16 %v1186
        %v2257 = vunpack.c.l.b16 %v1187
        %v2258 = vunpack.c.l.b16 %v1188
        %v2259 = vunpack.c.l.b16 %v1189
        %v2260 = vunpack.c.l.b16 %v1190
        %v2261 = vunpack.c.l.b16 %v1191
        %v2262 = vunpack.c.l.b16 %v1192
        %v2263 = vunpack.c.l.b16 %v1193
        %v2264 = vunpack.c.l.b16 %v1194
        %v2265 = vpack.c.b16 %v2250, %v2249
        %v2266 = vpack.c.b16 %v2252, %v2251
        %v2267 = vpack.c.b16 %v2254, %v2253
        %v2268 = vpack.c.b16 %v2256, %v2255
        %v2269 = vpack.c.b16 %v2258, %v2257
        %v2270 = vpack.c.b16 %v2260, %v2259
        %v2271 = vpack.c.b16 %v2262, %v2261
        %v2272 = vpack.c.b16 %v2264, %v2263
        %2281 = vmatprep.subr.bf16.mxu0 0
        %2282 = vmatpush1.bf16.msra.mxu0 %v2265
        %2283 = vmatprep.subr.bf16.mxu0 0
        %2284 = vmatpush1.bf16.msra.mxu0 %v2266
        %2285 = vmatprep.subr.bf16.mxu0 0
        %2286 = vmatpush1.bf16.msra.mxu0 %v2267
        %2287 = vmatprep.subr.bf16.mxu0 0
        %2288 = vmatpush1.bf16.msra.mxu0 %v2268
        %2289 = vmatprep.subr.bf16.mxu0 0
        %2290 = vmatpush1.bf16.msra.mxu0 %v2269
        %2291 = vmatprep.subr.bf16.mxu0 0
        %2292 = vmatpush1.bf16.msra.mxu0 %v2270
        %2293 = vmatprep.subr.bf16.mxu0 0
        %2294 = vmatpush1.bf16.msra.mxu0 %v2271
        %2295 = vmatprep.subr.bf16.mxu0 0
        %2296 = vmatpush1.bf16.msra.mxu0 %v2272
        %2297 = vmatprep.subr.bf16.mxu0 0
        %2298 = vmatpush1.bf16.msra.mxu0 0
        %2299 = vmatprep.subr.bf16.mxu0 0
        %2300 = vmatpush1.bf16.msra.mxu0 0
        %2301 = vmatprep.subr.bf16.mxu0 0
        %2302 = vmatpush1.bf16.msra.mxu0 0
        %2303 = vmatprep.subr.bf16.mxu0 0
        %2304 = vmatpush1.bf16.msra.mxu0 0
        %2305 = vmatprep.subr.bf16.mxu0 0
        %2306 = vmatpush1.bf16.msra.mxu0 0
        %2307 = vmatprep.subr.bf16.mxu0 0
        %2308 = vmatpush1.bf16.msra.mxu0 0
        %2309 = vmatprep.subr.bf16.mxu0 0
        %2310 = vmatpush1.bf16.msra.mxu0 0
        %2311 = vmatprep.subr.bf16.mxu0 0
        %2312 = vmatpush1.bf16.msra.mxu0 0
        %2313 = vmatprep.mubr.bf16.mxu0 0
        %2314 = vmatmul.mubr.bf16.gmra.mrb[0].mxu0 %v2226
        %v2315 = vpop.f32.mrb[0].mxu0
        %v2316 = vadd.f32 %v2231, %v2315
        %v2317 = vpop.f32.mrb[0].mxu0
        %v2318 = vpop.f32.mrb[0].mxu0
        %v2319 = vpop.f32.mrb[0].mxu0
        %2320 = vdwg.mxu0
        %v2321 = vadd.f32 %v914, %v2316
        %v2322 = vld [vmem:[#allocation7] sm:$0x1]
        %v2323 = vld [vmem:[#allocation8] sm:$0x1]
        %2324 = vadd.xlane.f32.xlu0 %v2321
        %v2325 = vpop.xlane.xlu0 %2324
        %v2326 = vrcp.pop 128.0
        %v2327 = vmul.f32 %v2325, %v2326
        %v2328 = vsub.f32 %v2321, %v2327
        %v2329 = vmul.f32 %v2328, %v2328
        %2330 = vadd.xlane.f32.xlu0 %v2329
        %v2331 = vpop.xlane.xlu0 %2330
        %v2332 = vmul.f32 %v2331, %v2326
        %v2333 = vadd.f32 %v2332, 1e-05
        %v2334 = vrsqrt.pop %v2333
        %v2335 = vmul.f32 %v2328, %v2334
        %v2337 = vlaneseq
        %v2338 = vshrl.u32 %v2337, 7
        %v2339 = vsub.s32 0, %v2338
        %v2340 = vrot.slane %v2322, %v2339
        %v2342 = vmul.f32 %v2335, %v2340
        %v2344 = vlaneseq
        %v2345 = vshrl.u32 %v2344, 7
        %v2346 = vsub.s32 0, %v2345
        %v2347 = vrot.slane %v2323, %v2346
        %v2349 = vadd.f32 %v2342, %v2347
        %v2350 = vpack.c.bf16 %v2349, %v2349
        %v2351 = vld [vmem:[#allocation10] sm:$0xf]
        %v2352 = vld [vmem:[#allocation10 + $0x4] sm:$0xf]
        %v2353 = vld [vmem:[#allocation10 + $0x8] sm:$0xf]
        %v2354 = vld [vmem:[#allocation10 + $0xc] sm:$0xf]
        %v2355 = vld [vmem:[#allocation10 + $0x10] sm:$0xf]
        %v2356 = vld [vmem:[#allocation10 + $0x14] sm:$0xf]
        %v2357 = vld [vmem:[#allocation10 + $0x18] sm:$0xf]
        %v2358 = vld [vmem:[#allocation10 + $0x1c] sm:$0xf]
        %v2359 = vld [vmem:[#allocation10 + $0x20] sm:$0xf]
        %v2360 = vld [vmem:[#allocation10 + $0x24] sm:$0xf]
        %v2361 = vld [vmem:[#allocation10 + $0x28] sm:$0xf]
        %v2362 = vld [vmem:[#allocation10 + $0x2c] sm:$0xf]
        %v2363 = vld [vmem:[#allocation10 + $0x30] sm:$0xf]
        %v2364 = vld [vmem:[#allocation10 + $0x34] sm:$0xf]
        %v2365 = vld [vmem:[#allocation10 + $0x38] sm:$0xf]
        %v2366 = vld [vmem:[#allocation10 + $0x3c] sm:$0xf]
        %v2367 = vld [vmem:[#allocation11] sm:$0x1]
        %v2369 = vlaneseq
        %v2370 = vshrl.u32 %v2369, 7
        %v2371 = vsub.s32 0, %v2370
        %v2372 = vrot.slane %v2367, %v2371
        %v2390 = vunpack.c.l.b16 %v2351
        %v2391 = vunpack.c.l.b16 %v2352
        %v2392 = vunpack.c.l.b16 %v2353
        %v2393 = vunpack.c.l.b16 %v2354
        %v2394 = vunpack.c.l.b16 %v2355
        %v2395 = vunpack.c.l.b16 %v2356
        %v2396 = vunpack.c.l.b16 %v2357
        %v2397 = vunpack.c.l.b16 %v2358
        %v2398 = vunpack.c.l.b16 %v2359
        %v2399 = vunpack.c.l.b16 %v2360
        %v2400 = vunpack.c.l.b16 %v2361
        %v2401 = vunpack.c.l.b16 %v2362
        %v2402 = vunpack.c.l.b16 %v2363
        %v2403 = vunpack.c.l.b16 %v2364
        %v2404 = vunpack.c.l.b16 %v2365
        %v2405 = vunpack.c.l.b16 %v2366
        %v2406 = vpack.c.b16 %v2391, %v2390
        %v2407 = vpack.c.b16 %v2393, %v2392
        %v2408 = vpack.c.b16 %v2395, %v2394
        %v2409 = vpack.c.b16 %v2397, %v2396
        %v2410 = vpack.c.b16 %v2399, %v2398
        %v2411 = vpack.c.b16 %v2401, %v2400
        %v2412 = vpack.c.b16 %v2403, %v2402
        %v2413 = vpack.c.b16 %v2405, %v2404
        %2422 = vmatprep.subr.bf16.mxu0 0
        %2423 = vmatpush1.bf16.msra.mxu0 %v2406
        %2424 = vmatprep.subr.bf16.mxu0 0
        %2425 = vmatpush1.bf16.msra.mxu0 %v2407
        %2426 = vmatprep.subr.bf16.mxu0 0
        %2427 = vmatpush1.bf16.msra.mxu0 %v2408
        %2428 = vmatprep.subr.bf16.mxu0 0
        %2429 = vmatpush1.bf16.msra.mxu0 %v2409
        %2430 = vmatprep.subr.bf16.mxu0 0
        %2431 = vmatpush1.bf16.msra.mxu0 %v2410
        %2432 = vmatprep.subr.bf16.mxu0 0
        %2433 = vmatpush1.bf16.msra.mxu0 %v2411
        %2434 = vmatprep.subr.bf16.mxu0 0
        %2435 = vmatpush1.bf16.msra.mxu0 %v2412
        %2436 = vmatprep.subr.bf16.mxu0 0
        %2437 = vmatpush1.bf16.msra.mxu0 %v2413
        %2438 = vmatprep.subr.bf16.mxu0 0
        %2439 = vmatpush1.bf16.msra.mxu0 0
        %2440 = vmatprep.subr.bf16.mxu0 0
        %2441 = vmatpush1.bf16.msra.mxu0 0
        %2442 = vmatprep.subr.bf16.mxu0 0
        %2443 = vmatpush1.bf16.msra.mxu0 0
        %2444 = vmatprep.subr.bf16.mxu0 0
        %2445 = vmatpush1.bf16.msra.mxu0 0
        %2446 = vmatprep.subr.bf16.mxu0 0
        %2447 = vmatpush1.bf16.msra.mxu0 0
        %2448 = vmatprep.subr.bf16.mxu0 0
        %2449 = vmatpush1.bf16.msra.mxu0 0
        %2450 = vmatprep.subr.bf16.mxu0 0
        %2451 = vmatpush1.bf16.msra.mxu0 0
        %2452 = vmatprep.subr.bf16.mxu0 0
        %2453 = vmatpush1.bf16.msra.mxu0 0
        %2454 = vmatprep.mubr.bf16.mxu0 0
        %2455 = vmatmul.mubr.bf16.gmra.mrb[0].mxu0 %v2350
        %v2456 = vpop.f32.mrb[0].mxu0
        %v2457 = vadd.f32 %v2372, %v2456
        %v2458 = vpop.f32.mrb[0].mxu0
        %v2459 = vpop.f32.mrb[0].mxu0
        %v2460 = vpop.f32.mrb[0].mxu0
        %2461 = vdwg.mxu0
        %v2462 = vld [vmem:[#allocation13] sm:$0xff]
        %v2463 = vld [vmem:[#allocation13 + $0x8] sm:$0xff]
        %v2464 = vld [vmem:[#allocation13 + $0x10] sm:$0xff]
        %v2465 = vld [vmem:[#allocation13 + $0x18] sm:$0xff]
        %v2466 = vld [vmem:[#allocation13 + $0x20] sm:$0xff]
        %v2467 = vld [vmem:[#allocation13 + $0x28] sm:$0xff]
        %v2468 = vld [vmem:[#allocation13 + $0x30] sm:$0xff]
        %v2469 = vld [vmem:[#allocation13 + $0x38] sm:$0xff]
        %v2470 = vld [vmem:[#allocation13 + $0x40] sm:$0xff]
        %v2471 = vld [vmem:[#allocation13 + $0x48] sm:$0xff]
        %v2472 = vld [vmem:[#allocation13 + $0x50] sm:$0xff]
        %v2473 = vld [vmem:[#allocation13 + $0x58] sm:$0xff]
        %v2474 = vld [vmem:[#allocation13 + $0x60] sm:$0xff]
        %v2475 = vld [vmem:[#allocation13 + $0x68] sm:$0xff]
        %v2476 = vld [vmem:[#allocation13 + $0x70] sm:$0xff]
        %v2477 = vld [vmem:[#allocation13 + $0x78] sm:$0xff]
        %v2478 = vld [vmem:[%s12] sm:$0x3]
        %v2480 = vlaneseq
        %v2481 = vshrl.u32 %v2480, 7
        %v2482 = vsub.s32 0, %v2481
        %v2483 = vrot.slane %v2478, %v2482
        %v2484 = vlaneseq
        %v2485 = vshrl.u32 %v2484, 7
        %v2486 = vsub.s32 1, %v2485
        %v2487 = vrot.slane %v2478, %v2486
        %v2506 = vunpack.c.l.b16 %v2462
        %v2507 = vunpack.c.h.b16 %v2462
        %v2508 = vunpack.c.l.b16 %v2463
        %v2509 = vunpack.c.h.b16 %v2463
        %v2510 = vunpack.c.l.b16 %v2464
        %v2511 = vunpack.c.h.b16 %v2464
        %v2512 = vunpack.c.l.b16 %v2465
        %v2513 = vunpack.c.h.b16 %v2465
        %v2514 = vunpack.c.l.b16 %v2466
        %v2515 = vunpack.c.h.b16 %v2466
        %v2516 = vunpack.c.l.b16 %v2467
        %v2517 = vunpack.c.h.b16 %v2467
        %v2518 = vunpack.c.l.b16 %v2468
        %v2519 = vunpack.c.h.b16 %v2468
        %v2520 = vunpack.c.l.b16 %v2469
        %v2521 = vunpack.c.h.b16 %v2469
        %v2522 = vunpack.c.l.b16 %v2470
        %v2523 = vunpack.c.h.b16 %v2470
        %v2524 = vunpack.c.l.b16 %v2471
        %v2525 = vunpack.c.h.b16 %v2471
        %v2526 = vunpack.c.l.b16 %v2472
        %v2527 = vunpack.c.h.b16 %v2472
        %v2528 = vunpack.c.l.b16 %v2473
        %v2529 = vunpack.c.h.b16 %v2473
        %v2530 = vunpack.c.l.b16 %v2474
        %v2531 = vunpack.c.h.b16 %v2474
        %v2532 = vunpack.c.l.b16 %v2475
        %v2533 = vunpack.c.h.b16 %v2475
        %v2534 = vunpack.c.l.b16 %v2476
        %v2535 = vunpack.c.h.b16 %v2476
        %v2536 = vunpack.c.l.b16 %v2477
        %v2537 = vunpack.c.h.b16 %v2477
        %v2538 = vpack.c.b16 %v2508, %v2506
        %v2539 = vpack.c.b16 %v2509, %v2507
        %v2540 = vpack.c.b16 %v2512, %v2510
        %v2541 = vpack.c.b16 %v2513, %v2511
        %v2542 = vpack.c.b16 %v2516, %v2514
        %v2543 = vpack.c.b16 %v2517, %v2515
        %v2544 = vpack.c.b16 %v2520, %v2518
        %v2545 = vpack.c.b16 %v2521, %v2519
        %v2546 = vpack.c.b16 %v2524, %v2522
        %v2547 = vpack.c.b16 %v2525, %v2523
        %v2548 = vpack.c.b16 %v2528, %v2526
        %v2549 = vpack.c.b16 %v2529, %v2527
        %v2550 = vpack.c.b16 %v2532, %v2530
        %v2551 = vpack.c.b16 %v2533, %v2531
        %v2552 = vpack.c.b16 %v2536, %v2534
        %v2553 = vpack.c.b16 %v2537, %v2535
        %2570 = vmatprep.subr.bf16.mxu0 %v2539
        %2571 = vmatpush1.bf16.msra.mxu0 %v2538
        %2572 = vmatprep.subr.bf16.mxu0 %v2541
        %2573 = vmatpush1.bf16.msra.mxu0 %v2540
        %2574 = vmatprep.subr.bf16.mxu0 %v2543
        %2575 = vmatpush1.bf16.msra.mxu0 %v2542
        %2576 = vmatprep.subr.bf16.mxu0 %v2545
        %2577 = vmatpush1.bf16.msra.mxu0 %v2544
        %2578 = vmatprep.subr.bf16.mxu0 %v2547
        %2579 = vmatpush1.bf16.msra.mxu0 %v2546
        %2580 = vmatprep.subr.bf16.mxu0 %v2549
        %2581 = vmatpush1.bf16.msra.mxu0 %v2548
        %2582 = vmatprep.subr.bf16.mxu0 %v2551
        %2583 = vmatpush1.bf16.msra.mxu0 %v2550
        %2584 = vmatprep.subr.bf16.mxu0 %v2553
        %2585 = vmatpush1.bf16.msra.mxu0 %v2552
        %2586 = vmatprep.subr.bf16.mxu0 0
        %2587 = vmatpush1.bf16.msra.mxu0 0
        %2588 = vmatprep.subr.bf16.mxu0 0
        %2589 = vmatpush1.bf16.msra.mxu0 0
        %2590 = vmatprep.subr.bf16.mxu0 0
        %2591 = vmatpush1.bf16.msra.mxu0 0
        %2592 = vmatprep.subr.bf16.mxu0 0
        %2593 = vmatpush1.bf16.msra.mxu0 0
        %2594 = vmatprep.subr.bf16.mxu0 0
        %2595 = vmatpush1.bf16.msra.mxu0 0
        %2596 = vmatprep.subr.bf16.mxu0 0
        %2597 = vmatpush1.bf16.msra.mxu0 0
        %2598 = vmatprep.subr.bf16.mxu0 0
        %2599 = vmatpush1.bf16.msra.mxu0 0
        %2600 = vmatprep.subr.bf16.mxu0 0
        %2601 = vmatpush1.bf16.msra.mxu0 0
        %2602 = vmatprep.mubr.bf16.mxu0 0
        %2603 = vmatmul.mubr.bf16.gmra.mrb[0].mxu0 %v920
        %v2604 = vpop.f32.mrb[0].mxu0
        %v2605 = vadd.f32 %v2483, %v2604
        %v2606 = vpop.f32.mrb[0].mxu0
        %v2607 = vadd.f32 %v2487, %v2606
        %v2608 = vpop.f32.mrb[0].mxu0
        %v2609 = vpop.f32.mrb[0].mxu0
        %2610 = vdwg.mxu0
        %v2611 = vld [vmem:[#allocation14] sm:$0xf]
        %v2612 = vld [vmem:[#allocation14 + $0x4] sm:$0xf]
        %v2613 = vld [vmem:[#allocation14 + $0x8] sm:$0xf]
        %v2614 = vld [vmem:[#allocation14 + $0xc] sm:$0xf]
        %v2615 = vld [vmem:[#allocation14 + $0x10] sm:$0xf]
        %v2616 = vld [vmem:[#allocation14 + $0x14] sm:$0xf]
        %v2617 = vld [vmem:[#allocation14 + $0x18] sm:$0xf]
        %v2618 = vld [vmem:[#allocation14 + $0x1c] sm:$0xf]
        %v2619 = vld [vmem:[#allocation14 + $0x20] sm:$0xf]
        %v2620 = vld [vmem:[#allocation14 + $0x24] sm:$0xf]
        %v2621 = vld [vmem:[#allocation14 + $0x28] sm:$0xf]
        %v2622 = vld [vmem:[#allocation14 + $0x2c] sm:$0xf]
        %v2623 = vld [vmem:[#allocation14 + $0x30] sm:$0xf]
        %v2624 = vld [vmem:[#allocation14 + $0x34] sm:$0xf]
        %v2625 = vld [vmem:[#allocation14 + $0x38] sm:$0xf]
        %v2626 = vld [vmem:[#allocation14 + $0x3c] sm:$0xf]
        %v2627 = vld [vmem:[#allocation16] sm:$0x1]
        %2629 = vrot.lane.b32.xlu0 %v2457, 96
        %v2630 = vpop.permute.xlu0 %2629
        %2632 = vrot.lane.b32.xlu0 %v2457, 64
        %v2633 = vpop.permute.xlu0 %2632
        %2635 = vrot.lane.b32.xlu0 %v2457, 32
        %v2636 = vpop.permute.xlu0 %2635
        %v2638 = vcombine.low %v2457, %v2633
        %v2639 = vcombine.high %v2457, %v2633
        %v2641 = vunpack.c.l.s4 1983009808
        %v2642 = vunpack.c.0.s8 %v2641
        %v2643 = vlaneseq
        %v2644 = vshrl.u32 %v2643, 7
        %v2645 = vsub.s32 %v2642, %v2644
        %v2646 = vrot.slane %v2638, %v2645
        %v2648 = vunpack.c.l.s4 1983009808
        %v2649 = vunpack.c.0.s8 %v2648
        %v2650 = vlaneseq
        %v2651 = vshrl.u32 %v2650, 7
        %v2652 = vsub.s32 %v2649, %v2651
        %v2653 = vrot.slane %v2639, %v2652
        %v2654 = vcombine.low %v2630, %v2636
        %v2655 = vcombine.high %v2630, %v2636
        %v2657 = vunpack.c.l.s4 1983009808
        %v2658 = vunpack.c.0.s8 %v2657
        %v2659 = vlaneseq
        %v2660 = vshrl.u32 %v2659, 7
        %v2661 = vsub.s32 %v2658, %v2660
        %v2662 = vrot.slane %v2654, %v2661
        %v2664 = vunpack.c.l.s4 1983009808
        %v2665 = vunpack.c.0.s8 %v2664
        %v2666 = vlaneseq
        %v2667 = vshrl.u32 %v2666, 7
        %v2668 = vsub.s32 %v2665, %v2667
        %v2669 = vrot.slane %v2655, %v2668
        %v2670 = vcombine.low %v2646, %v2662
        %v2671 = vcombine.high %v2646, %v2662
        %v2673 = vunpack.c.l.s4 1934713408
        %v2674 = vunpack.c.0.s8 %v2673
        %v2675 = vlaneseq
        %v2676 = vshrl.u32 %v2675, 7
        %v2677 = vsub.s32 %v2674, %v2676
        %v2678 = vrot.slane %v2670, %v2677
        %v2680 = vunpack.c.l.s4 1934713408
        %v2681 = vunpack.c.0.s8 %v2680
        %v2682 = vlaneseq
        %v2683 = vshrl.u32 %v2682, 7
        %v2684 = vsub.s32 %v2681, %v2683
        %v2685 = vrot.slane %v2671, %v2684
        %v2686 = vcombine.low %v2653, %v2669
        %v2687 = vcombine.high %v2653, %v2669
        %v2689 = vunpack.c.l.s4 1934713408
        %v2690 = vunpack.c.0.s8 %v2689
        %v2691 = vlaneseq
        %v2692 = vshrl.u32 %v2691, 7
        %v2693 = vsub.s32 %v2690, %v2692
        %v2694 = vrot.slane %v2686, %v2693
        %v2696 = vunpack.c.l.s4 1934713408
        %v2697 = vunpack.c.0.s8 %v2696
        %v2698 = vlaneseq
        %v2699 = vshrl.u32 %v2698, 7
        %v2700 = vsub.s32 %v2697, %v2699
        %v2701 = vrot.slane %v2687, %v2700
        %v2702 = vcombine.high %v2678, 0.0
        %v2703 = vcombine.high %v2685, 0.0
        %v2704 = vcombine.high %v2694, 0.0
        %v2705 = vcombine.high %v2701, 0.0
        %v2706 = vcombine.low %v2678, %v2685
        %v2708 = vunpack.c.l.s4 1983009808
        %v2709 = vunpack.c.0.s8 %v2708
        %v2710 = vlaneseq
        %v2711 = vshrl.u32 %v2710, 7
        %v2712 = vsub.s32 %v2709, %v2711
        %v2713 = vrot.slane %v2706, %v2712
        %v2714 = vcombine.low %v2702, %v2703
        %v2716 = vunpack.c.l.s4 1983009808
        %v2717 = vunpack.c.0.s8 %v2716
        %v2718 = vlaneseq
        %v2719 = vshrl.u32 %v2718, 7
        %v2720 = vsub.s32 %v2717, %v2719
        %v2721 = vrot.slane %v2714, %v2720
        %v2722 = vcombine.low %v2694, %v2701
        %v2724 = vunpack.c.l.s4 1983009808
        %v2725 = vunpack.c.0.s8 %v2724
        %v2726 = vlaneseq
        %v2727 = vshrl.u32 %v2726, 7
        %v2728 = vsub.s32 %v2725, %v2727
        %v2729 = vrot.slane %v2722, %v2728
        %v2730 = vcombine.low %v2704, %v2705
        %v2732 = vunpack.c.l.s4 1983009808
        %v2733 = vunpack.c.0.s8 %v2732
        %v2734 = vlaneseq
        %v2735 = vshrl.u32 %v2734, 7
        %v2736 = vsub.s32 %v2733, %v2735
        %v2737 = vrot.slane %v2730, %v2736
        %v2738 = vcombine.low %v2713, %v2721
        %v2739 = vcombine.high %v2713, %v2721
        %v2741 = vunpack.c.l.s4 1934713408
        %v2742 = vunpack.c.0.s8 %v2741
        %v2743 = vlaneseq
        %v2744 = vshrl.u32 %v2743, 7
        %v2745 = vsub.s32 %v2742, %v2744
        %v2746 = vrot.slane %v2738, %v2745
        %v2748 = vunpack.c.l.s4 1934713408
        %v2749 = vunpack.c.0.s8 %v2748
        %v2750 = vlaneseq
        %v2751 = vshrl.u32 %v2750, 7
        %v2752 = vsub.s32 %v2749, %v2751
        %v2753 = vrot.slane %v2739, %v2752
        %v2754 = vcombine.low %v2729, %v2737
        %v2755 = vcombine.high %v2729, %v2737
        %v2757 = vunpack.c.l.s4 1934713408
        %v2758 = vunpack.c.0.s8 %v2757
        %v2759 = vlaneseq
        %v2760 = vshrl.u32 %v2759, 7
        %v2761 = vsub.s32 %v2758, %v2760
        %v2762 = vrot.slane %v2754, %v2761
        %v2764 = vunpack.c.l.s4 1934713408
        %v2765 = vunpack.c.0.s8 %v2764
        %v2766 = vlaneseq
        %v2767 = vshrl.u32 %v2766, 7
        %v2768 = vsub.s32 %v2765, %v2767
        %v2769 = vrot.slane %v2755, %v2768
        %v2770 = vcombine.low %v2746, %v2762
        %v2771 = vcombine.high %v2746, %v2762
        %v2772 = vcombine.low %v2753, %v2769
        %v2773 = vcombine.high %v2753, %v2769
        %v2774 = vpack.c.bf16 %v2770, %v2770
        %v2775 = vpack.c.bf16 %v2771, %v2771
        %v2776 = vpack.c.bf16 %v2772, %v2772
        %v2777 = vpack.c.bf16 %v2773, %v2773
        %2779 = vrot.lane.b32.xlu0 %v2605, 96
        %v2780 = vpop.permute.xlu0 %2779
        %2782 = vrot.lane.b32.xlu0 %v2605, 64
        %v2783 = vpop.permute.xlu0 %2782
        %2785 = vrot.lane.b32.xlu0 %v2605, 32
        %v2786 = vpop.permute.xlu0 %2785
        %v2788 = vcombine.low %v2605, %v2783
        %v2790 = vunpack.c.l.s4 1983009808
        %v2791 = vunpack.c.0.s8 %v2790
        %v2792 = vlaneseq
        %v2793 = vshrl.u32 %v2792, 7
        %v2794 = vsub.s32 %v2791, %v2793
        %v2795 = vrot.slane %v2788, %v2794
        %v2796 = vcombine.low %v2780, %v2786
        %v2798 = vunpack.c.l.s4 1983009808
        %v2799 = vunpack.c.0.s8 %v2798
        %v2800 = vlaneseq
        %v2801 = vshrl.u32 %v2800, 7
        %v2802 = vsub.s32 %v2799, %v2801
        %v2803 = vrot.slane %v2796, %v2802
        %v2804 = vcombine.low %v2795, %v2803
        %v2805 = vcombine.high %v2795, %v2803
        %v2807 = vunpack.c.l.s4 1934713408
        %v2808 = vunpack.c.0.s8 %v2807
        %v2809 = vlaneseq
        %v2810 = vshrl.u32 %v2809, 7
        %v2811 = vsub.s32 %v2808, %v2810
        %v2812 = vrot.slane %v2804, %v2811
        %v2814 = vunpack.c.l.s4 1934713408
        %v2815 = vunpack.c.0.s8 %v2814
        %v2816 = vlaneseq
        %v2817 = vshrl.u32 %v2816, 7
        %v2818 = vsub.s32 %v2815, %v2817
        %v2819 = vrot.slane %v2805, %v2818
        %v2820 = vcombine.high %v2812, 0.0
        %v2821 = vcombine.high %v2819, 0.0
        %v2822 = vcombine.low %v2812, %v2819
        %v2824 = vunpack.c.l.s4 1983009808
        %v2825 = vunpack.c.0.s8 %v2824
        %v2826 = vlaneseq
        %v2827 = vshrl.u32 %v2826, 7
        %v2828 = vsub.s32 %v2825, %v2827
        %v2829 = vrot.slane %v2822, %v2828
        %v2830 = vcombine.low %v2820, %v2821
        %v2832 = vunpack.c.l.s4 1983009808
        %v2833 = vunpack.c.0.s8 %v2832
        %v2834 = vlaneseq
        %v2835 = vshrl.u32 %v2834, 7
        %v2836 = vsub.s32 %v2833, %v2835
        %v2837 = vrot.slane %v2830, %v2836
        %v2838 = vcombine.low %v2829, %v2837
        %v2839 = vcombine.high %v2829, %v2837
        %v2841 = vunpack.c.l.s4 1934713408
        %v2842 = vunpack.c.0.s8 %v2841
        %v2843 = vlaneseq
        %v2844 = vshrl.u32 %v2843, 7
        %v2845 = vsub.s32 %v2842, %v2844
        %v2846 = vrot.slane %v2838, %v2845
        %v2848 = vunpack.c.l.s4 1934713408
        %v2849 = vunpack.c.0.s8 %v2848
        %v2850 = vlaneseq
        %v2851 = vshrl.u32 %v2850, 7
        %v2852 = vsub.s32 %v2849, %v2851
        %v2853 = vrot.slane %v2839, %v2852
        %v2854 = vcombine.high %v2846, 0.0
        %v2855 = vcombine.high %v2853, 0.0
        %v2856 = vpack.c.bf16 %v2846, %v2846
        %v2857 = vpack.c.bf16 %v2854, %v2854
        %v2858 = vpack.c.bf16 %v2853, %v2853
        %v2859 = vpack.c.bf16 %v2855, %v2855
        %2861 = vrot.lane.b32.xlu0 %v2607, 96
        %v2862 = vpop.permute.xlu0 %2861
        %2864 = vrot.lane.b32.xlu0 %v2607, 64
        %v2865 = vpop.permute.xlu0 %2864
        %2867 = vrot.lane.b32.xlu0 %v2607, 32
        %v2868 = vpop.permute.xlu0 %2867
        %v2870 = vcombine.low %v2607, %v2865
        %v2872 = vunpack.c.l.s4 1983009808
        %v2873 = vunpack.c.0.s8 %v2872
        %v2874 = vlaneseq
        %v2875 = vshrl.u32 %v2874, 7
        %v2876 = vsub.s32 %v2873, %v2875
        %v2877 = vrot.slane %v2870, %v2876
        %v2878 = vcombine.low %v2862, %v2868
        %v2880 = vunpack.c.l.s4 1983009808
        %v2881 = vunpack.c.0.s8 %v2880
        %v2882 = vlaneseq
        %v2883 = vshrl.u32 %v2882, 7
        %v2884 = vsub.s32 %v2881, %v2883
        %v2885 = vrot.slane %v2878, %v2884
        %v2886 = vcombine.low %v2877, %v2885
        %v2887 = vcombine.high %v2877, %v2885
        %v2889 = vunpack.c.l.s4 1934713408
        %v2890 = vunpack.c.0.s8 %v2889
        %v2891 = vlaneseq
        %v2892 = vshrl.u32 %v2891, 7
        %v2893 = vsub.s32 %v2890, %v2892
        %v2894 = vrot.slane %v2886, %v2893
        %v2896 = vunpack.c.l.s4 1934713408
        %v2897 = vunpack.c.0.s8 %v2896
        %v2898 = vlaneseq
        %v2899 = vshrl.u32 %v2898, 7
        %v2900 = vsub.s32 %v2897, %v2899
        %v2901 = vrot.slane %v2887, %v2900
        %v2902 = vcombine.high %v2894, 0.0
        %v2903 = vcombine.high %v2901, 0.0
        %v2904 = vcombine.low %v2894, %v2901
        %v2906 = vunpack.c.l.s4 1983009808
        %v2907 = vunpack.c.0.s8 %v2906
        %v2908 = vlaneseq
        %v2909 = vshrl.u32 %v2908, 7
        %v2910 = vsub.s32 %v2907, %v2909
        %v2911 = vrot.slane %v2904, %v2910
        %v2912 = vcombine.low %v2902, %v2903
        %v2914 = vunpack.c.l.s4 1983009808
        %v2915 = vunpack.c.0.s8 %v2914
        %v2916 = vlaneseq
        %v2917 = vshrl.u32 %v2916, 7
        %v2918 = vsub.s32 %v2915, %v2917
        %v2919 = vrot.slane %v2912, %v2918
        %v2920 = vcombine.low %v2911, %v2919
        %v2921 = vcombine.high %v2911, %v2919
        %v2923 = vunpack.c.l.s4 1934713408
        %v2924 = vunpack.c.0.s8 %v2923
        %v2925 = vlaneseq
        %v2926 = vshrl.u32 %v2925, 7
        %v2927 = vsub.s32 %v2924, %v2926
        %v2928 = vrot.slane %v2920, %v2927
        %v2930 = vunpack.c.l.s4 1934713408
        %v2931 = vunpack.c.0.s8 %v2930
        %v2932 = vlaneseq
        %v2933 = vshrl.u32 %v2932, 7
        %v2934 = vsub.s32 %v2931, %v2933
        %v2935 = vrot.slane %v2921, %v2934
        %v2936 = vcombine.high %v2928, 0.0
        %v2937 = vcombine.high %v2935, 0.0
        %v2938 = vpack.c.bf16 %v2928, %v2928
        %v2939 = vpack.c.bf16 %v2936, %v2936
        %v2940 = vpack.c.bf16 %v2935, %v2935
        %v2941 = vpack.c.bf16 %v2937, %v2937
        %v2943 = vsel %vm1646, %v2774, 0
        %v2946 = vsel %vm1646, %v2856, 0
        %2948 = vmatprep.subr.bf16.mxu0 0
        %2949 = vmatpush1.bf16.xpose.msra.mxu0 %v2946
        %2950 = vmatprep.subr.bf16.mxu0 0
        %2951 = vmatpush1.bf16.xpose.msra.mxu0 0
        %2952 = vmatprep.subr.bf16.mxu0 0
        %2953 = vmatpush1.bf16.xpose.msra.mxu0 0
        %2954 = vmatprep.subr.bf16.mxu0 0
        %2955 = vmatpush1.bf16.xpose.msra.mxu0 0
        %2956 = vmatprep.subr.bf16.mxu0 0
        %2957 = vmatpush1.bf16.xpose.msra.mxu0 0
        %2958 = vmatprep.subr.bf16.mxu0 0
        %2959 = vmatpush1.bf16.xpose.msra.mxu0 0
        %2960 = vmatprep.subr.bf16.mxu0 0
        %2961 = vmatpush1.bf16.xpose.msra.mxu0 0
        %2962 = vmatprep.subr.bf16.mxu0 0
        %2963 = vmatpush1.bf16.xpose.msra.mxu0 0
        %2964 = vmatprep.subr.bf16.mxu0 0
        %2965 = vmatpush1.bf16.xpose.msra.mxu0 0
        %2966 = vmatprep.subr.bf16.mxu0 0
        %2967 = vmatpush1.bf16.xpose.msra.mxu0 0
        %2968 = vmatprep.subr.bf16.mxu0 0
        %2969 = vmatpush1.bf16.xpose.msra.mxu0 0
        %2970 = vmatprep.subr.bf16.mxu0 0
        %2971 = vmatpush1.bf16.xpose.msra.mxu0 0
        %2972 = vmatprep.subr.bf16.mxu0 0
        %2973 = vmatpush1.bf16.xpose.msra.mxu0 0
        %2974 = vmatprep.subr.bf16.mxu0 0
        %2975 = vmatpush1.bf16.xpose.msra.mxu0 0
        %2976 = vmatprep.subr.bf16.mxu0 0
        %2977 = vmatpush1.bf16.xpose.msra.mxu0 0
        %2978 = vmatprep.subr.bf16.mxu0 0
        %2979 = vmatpush1.bf16.xpose.msra.mxu0 0
        %2980 = vmatprep.mubr.bf16.mxu0 0
        %2981 = vmatmul.mubr.bf16.gmra.mrb[0].mxu0 %v2943
        %v2982 = vpop.f32.mrb[0].mxu0
        %v2983 = vadd.f32 0.0, %v2982
        %v2984 = vpop.f32.mrb[0].mxu0
        %v2985 = vpop.f32.mrb[0].mxu0
        %v2986 = vpop.f32.mrb[0].mxu0
        %2987 = vdwg.mxu0
        %v2989 = vsel %vm1646, %v2775, 0
        %v2992 = vsel %vm1646, %v2857, 0
        %2994 = vmatprep.subr.bf16.mxu0 0
        %2995 = vmatpush1.bf16.xpose.msra.mxu0 %v2992
        %2996 = vmatprep.subr.bf16.mxu0 0
        %2997 = vmatpush1.bf16.xpose.msra.mxu0 0
        %2998 = vmatprep.subr.bf16.mxu0 0
        %2999 = vmatpush1.bf16.xpose.msra.mxu0 0
        %3000 = vmatprep.subr.bf16.mxu0 0
        %3001 = vmatpush1.bf16.xpose.msra.mxu0 0
        %3002 = vmatprep.subr.bf16.mxu0 0
        %3003 = vmatpush1.bf16.xpose.msra.mxu0 0
        %3004 = vmatprep.subr.bf16.mxu0 0
        %3005 = vmatpush1.bf16.xpose.msra.mxu0 0
        %3006 = vmatprep.subr.bf16.mxu0 0
        %3007 = vmatpush1.bf16.xpose.msra.mxu0 0
        %3008 = vmatprep.subr.bf16.mxu0 0
        %3009 = vmatpush1.bf16.xpose.msra.mxu0 0
        %3010 = vmatprep.subr.bf16.mxu0 0
        %3011 = vmatpush1.bf16.xpose.msra.mxu0 0
        %3012 = vmatprep.subr.bf16.mxu0 0
        %3013 = vmatpush1.bf16.xpose.msra.mxu0 0
        %3014 = vmatprep.subr.bf16.mxu0 0
        %3015 = vmatpush1.bf16.xpose.msra.mxu0 0
        %3016 = vmatprep.subr.bf16.mxu0 0
        %3017 = vmatpush1.bf16.xpose.msra.mxu0 0
        %3018 = vmatprep.subr.bf16.mxu0 0
        %3019 = vmatpush1.bf16.xpose.msra.mxu0 0
        %3020 = vmatprep.subr.bf16.mxu0 0
        %3021 = vmatpush1.bf16.xpose.msra.mxu0 0
        %3022 = vmatprep.subr.bf16.mxu0 0
        %3023 = vmatpush1.bf16.xpose.msra.mxu0 0
        %3024 = vmatprep.subr.bf16.mxu0 0
        %3025 = vmatpush1.bf16.xpose.msra.mxu0 0
        %3026 = vmatprep.mubr.bf16.mxu0 0
        %3027 = vmatmul.mubr.bf16.gmra.mrb[0].mxu0 %v2989
        %v3028 = vpop.f32.mrb[0].mxu0
        %v3029 = vadd.f32 0.0, %v3028
        %v3030 = vpop.f32.mrb[0].mxu0
        %v3031 = vpop.f32.mrb[0].mxu0
        %v3032 = vpop.f32.mrb[0].mxu0
        %3033 = vdwg.mxu0
        %v3035 = vsel %vm1646, %v2776, 0
        %v3038 = vsel %vm1646, %v2858, 0
        %3040 = vmatprep.subr.bf16.mxu0 0
        %3041 = vmatpush1.bf16.xpose.msra.mxu0 %v3038
        %3042 = vmatprep.subr.bf16.mxu0 0
        %3043 = vmatpush1.bf16.xpose.msra.mxu0 0
        %3044 = vmatprep.subr.bf16.mxu0 0
        %3045 = vmatpush1.bf16.xpose.msra.mxu0 0
        %3046 = vmatprep.subr.bf16.mxu0 0
        %3047 = vmatpush1.bf16.xpose.msra.mxu0 0
        %3048 = vmatprep.subr.bf16.mxu0 0
        %3049 = vmatpush1.bf16.xpose.msra.mxu0 0
        %3050 = vmatprep.subr.bf16.mxu0 0
        %3051 = vmatpush1.bf16.xpose.msra.mxu0 0
        %3052 = vmatprep.subr.bf16.mxu0 0
        %3053 = vmatpush1.bf16.xpose.msra.mxu0 0
        %3054 = vmatprep.subr.bf16.mxu0 0
        %3055 = vmatpush1.bf16.xpose.msra.mxu0 0
        %3056 = vmatprep.subr.bf16.mxu0 0
        %3057 = vmatpush1.bf16.xpose.msra.mxu0 0
        %3058 = vmatprep.subr.bf16.mxu0 0
        %3059 = vmatpush1.bf16.xpose.msra.mxu0 0
        %3060 = vmatprep.subr.bf16.mxu0 0
        %3061 = vmatpush1.bf16.xpose.msra.mxu0 0
        %3062 = vmatprep.subr.bf16.mxu0 0
        %3063 = vmatpush1.bf16.xpose.msra.mxu0 0
        %3064 = vmatprep.subr.bf16.mxu0 0
        %3065 = vmatpush1.bf16.xpose.msra.mxu0 0
        %3066 = vmatprep.subr.bf16.mxu0 0
        %3067 = vmatpush1.bf16.xpose.msra.mxu0 0
        %3068 = vmatprep.subr.bf16.mxu0 0
        %3069 = vmatpush1.bf16.xpose.msra.mxu0 0
        %3070 = vmatprep.subr.bf16.mxu0 0
        %3071 = vmatpush1.bf16.xpose.msra.mxu0 0
        %3072 = vmatprep.mubr.bf16.mxu0 0
        %3073 = vmatmul.mubr.bf16.gmra.mrb[0].mxu0 %v3035
        %v3074 = vpop.f32.mrb[0].mxu0
        %v3075 = vadd.f32 0.0, %v3074
        %v3076 = vpop.f32.mrb[0].mxu0
        %v3077 = vpop.f32.mrb[0].mxu0
        %v3078 = vpop.f32.mrb[0].mxu0
        %3079 = vdwg.mxu0
        %v3081 = vsel %vm1646, %v2777, 0
        %v3084 = vsel %vm1646, %v2859, 0
        %3086 = vmatprep.subr.bf16.mxu0 0
        %3087 = vmatpush1.bf16.xpose.msra.mxu0 %v3084
        %3088 = vmatprep.subr.bf16.mxu0 0
        %3089 = vmatpush1.bf16.xpose.msra.mxu0 0
        %3090 = vmatprep.subr.bf16.mxu0 0
        %3091 = vmatpush1.bf16.xpose.msra.mxu0 0
        %3092 = vmatprep.subr.bf16.mxu0 0
        %3093 = vmatpush1.bf16.xpose.msra.mxu0 0
        %3094 = vmatprep.subr.bf16.mxu0 0
        %3095 = vmatpush1.bf16.xpose.msra.mxu0 0
        %3096 = vmatprep.subr.bf16.mxu0 0
        %3097 = vmatpush1.bf16.xpose.msra.mxu0 0
        %3098 = vmatprep.subr.bf16.mxu0 0
        %3099 = vmatpush1.bf16.xpose.msra.mxu0 0
        %3100 = vmatprep.subr.bf16.mxu0 0
        %3101 = vmatpush1.bf16.xpose.msra.mxu0 0
        %3102 = vmatprep.subr.bf16.mxu0 0
        %3103 = vmatpush1.bf16.xpose.msra.mxu0 0
        %3104 = vmatprep.subr.bf16.mxu0 0
        %3105 = vmatpush1.bf16.xpose.msra.mxu0 0
        %3106 = vmatprep.subr.bf16.mxu0 0
        %3107 = vmatpush1.bf16.xpose.msra.mxu0 0
        %3108 = vmatprep.subr.bf16.mxu0 0
        %3109 = vmatpush1.bf16.xpose.msra.mxu0 0
        %3110 = vmatprep.subr.bf16.mxu0 0
        %3111 = vmatpush1.bf16.xpose.msra.mxu0 0
        %3112 = vmatprep.subr.bf16.mxu0 0
        %3113 = vmatpush1.bf16.xpose.msra.mxu0 0
        %3114 = vmatprep.subr.bf16.mxu0 0
        %3115 = vmatpush1.bf16.xpose.msra.mxu0 0
        %3116 = vmatprep.subr.bf16.mxu0 0
        %3117 = vmatpush1.bf16.xpose.msra.mxu0 0
        %3118 = vmatprep.mubr.bf16.mxu0 0
        %3119 = vmatmul.mubr.bf16.gmra.mrb[0].mxu0 %v3081
        %v3120 = vpop.f32.mrb[0].mxu0
        %v3121 = vadd.f32 0.0, %v3120
        %v3122 = vpop.f32.mrb[0].mxu0
        %v3123 = vpop.f32.mrb[0].mxu0
        %v3124 = vpop.f32.mrb[0].mxu0
        %3125 = vdwg.mxu0
        %v3126 = vmul.f32 %v2983, 0.17677669
        %v3127 = vmul.f32 %v3029, 0.17677669
        %v3128 = vmul.f32 %v3075, 0.17677669
        %v3129 = vmul.f32 %v3121, 0.17677669
        %vm3130 = vcmask 31744
        %v3131 = vsel %vm3130, %v3126, -inf
        %3132 = vmax.xlane.f32.xlu0 %v3131
        %v3133 = vpop.xlane.xlu0 %3132
        %v3134 = vsel %vm3130, %v3127, -inf
        %3135 = vmax.xlane.f32.xlu0 %v3134
        %v3136 = vpop.xlane.xlu0 %3135
        %v3137 = vsel %vm3130, %v3128, -inf
        %3138 = vmax.xlane.f32.xlu0 %v3137
        %v3139 = vpop.xlane.xlu0 %3138
        %v3140 = vsel %vm3130, %v3129, -inf
        %3141 = vmax.xlane.f32.xlu0 %v3140
        %v3142 = vpop.xlane.xlu0 %3141
        %v3143 = vsub.f32 %v3126, %v3133
        %v3144 = vsub.f32 %v3127, %v3136
        %v3145 = vsub.f32 %v3128, %v3139
        %v3146 = vsub.f32 %v3129, %v3142
        %v3147 = vmul.f32 %v3143, 1.442695
        %v3148 = vpow.pop %v3147
        %v3149 = vmul.f32 %v3144, 1.442695
        %v3150 = vpow.pop %v3149
        %v3151 = vmul.f32 %v3145, 1.442695
        %v3152 = vpow.pop %v3151
        %v3153 = vmul.f32 %v3146, 1.442695
        %v3154 = vpow.pop %v3153
        %v3155 = vsel %vm3130, %v3148, 0.0
        %3156 = vadd.xlane.f32.xlu0 %v3155
        %v3157 = vpop.xlane.xlu0 %3156
        %v3158 = vsel %vm3130, %v3150, 0.0
        %3159 = vadd.xlane.f32.xlu0 %v3158
        %v3160 = vpop.xlane.xlu0 %3159
        %v3161 = vsel %vm3130, %v3152, 0.0
        %3162 = vadd.xlane.f32.xlu0 %v3161
        %v3163 = vpop.xlane.xlu0 %3162
        %v3164 = vsel %vm3130, %v3154, 0.0
        %3165 = vadd.xlane.f32.xlu0 %v3164
        %v3166 = vpop.xlane.xlu0 %3165
        %v3167 = vrcp.pop %v3157
        %v3168 = vrcp.pop %v3160
        %v3169 = vrcp.pop %v3163
        %v3170 = vrcp.pop %v3166
        %v3171 = vmul.f32 %v3148, %v3167
        %v3172 = vmul.f32 %v3150, %v3168
        %v3173 = vmul.f32 %v3152, %v3169
        %v3174 = vmul.f32 %v3154, %v3170
        %v3175 = vpack.c.bf16 %v3171, %v3171
        %v3176 = vpack.c.bf16 %v3172, %v3172
        %v3177 = vpack.c.bf16 %v3173, %v3173
        %v3178 = vpack.c.bf16 %v3174, %v3174
        %v3180 = vsel %vm3130, %v3175, 0
        %vm3182 = vcmask 1041408
        %v3184 = vsel %vm3182, %v2938, 0
        %3186 = vmatprep.subr.bf16.mxu0 0
        %3187 = vmatpush1.bf16.msra.mxu0 %v3184
        %3188 = vmatprep.subr.bf16.mxu0 0
        %3189 = vmatpush1.bf16.msra.mxu0 0
        %3190 = vmatprep.subr.bf16.mxu0 0
        %3191 = vmatpush1.bf16.msra.mxu0 0
        %3192 = vmatprep.subr.bf16.mxu0 0
        %3193 = vmatpush1.bf16.msra.mxu0 0
        %3194 = vmatprep.subr.bf16.mxu0 0
        %3195 = vmatpush1.bf16.msra.mxu0 0
        %3196 = vmatprep.subr.bf16.mxu0 0
        %3197 = vmatpush1.bf16.msra.mxu0 0
        %3198 = vmatprep.subr.bf16.mxu0 0
        %3199 = vmatpush1.bf16.msra.mxu0 0
        %3200 = vmatprep.subr.bf16.mxu0 0
        %3201 = vmatpush1.bf16.msra.mxu0 0
        %3202 = vmatprep.subr.bf16.mxu0 0
        %3203 = vmatpush1.bf16.msra.mxu0 0
        %3204 = vmatprep.subr.bf16.mxu0 0
        %3205 = vmatpush1.bf16.msra.mxu0 0
        %3206 = vmatprep.subr.bf16.mxu0 0
        %3207 = vmatpush1.bf16.msra.mxu0 0
        %3208 = vmatprep.subr.bf16.mxu0 0
        %3209 = vmatpush1.bf16.msra.mxu0 0
        %3210 = vmatprep.subr.bf16.mxu0 0
        %3211 = vmatpush1.bf16.msra.mxu0 0
        %3212 = vmatprep.subr.bf16.mxu0 0
        %3213 = vmatpush1.bf16.msra.mxu0 0
        %3214 = vmatprep.subr.bf16.mxu0 0
        %3215 = vmatpush1.bf16.msra.mxu0 0
        %3216 = vmatprep.subr.bf16.mxu0 0
        %3217 = vmatpush1.bf16.msra.mxu0 0
        %3218 = vmatprep.mubr.bf16.mxu0 0
        %3219 = vmatmul.mubr.bf16.gmra.mrb[0].mxu0 %v3180
        %v3220 = vpop.f32.mrb[0].mxu0
        %v3221 = vadd.f32 0.0, %v3220
        %v3222 = vpop.f32.mrb[0].mxu0
        %v3223 = vpop.f32.mrb[0].mxu0
        %v3224 = vpop.f32.mrb[0].mxu0
        %3225 = vdwg.mxu0
        %v3227 = vsel %vm3130, %v3176, 0
        %v3230 = vsel %vm3182, %v2939, 0
        %3232 = vmatprep.subr.bf16.mxu0 0
        %3233 = vmatpush1.bf16.msra.mxu0 %v3230
        %3234 = vmatprep.subr.bf16.mxu0 0
        %3235 = vmatpush1.bf16.msra.mxu0 0
        %3236 = vmatprep.subr.bf16.mxu0 0
        %3237 = vmatpush1.bf16.msra.mxu0 0
        %3238 = vmatprep.subr.bf16.mxu0 0
        %3239 = vmatpush1.bf16.msra.mxu0 0
        %3240 = vmatprep.subr.bf16.mxu0 0
        %3241 = vmatpush1.bf16.msra.mxu0 0
        %3242 = vmatprep.subr.bf16.mxu0 0
        %3243 = vmatpush1.bf16.msra.mxu0 0
        %3244 = vmatprep.subr.bf16.mxu0 0
        %3245 = vmatpush1.bf16.msra.mxu0 0
        %3246 = vmatprep.subr.bf16.mxu0 0
        %3247 = vmatpush1.bf16.msra.mxu0 0
        %3248 = vmatprep.subr.bf16.mxu0 0
        %3249 = vmatpush1.bf16.msra.mxu0 0
        %3250 = vmatprep.subr.bf16.mxu0 0
        %3251 = vmatpush1.bf16.msra.mxu0 0
        %3252 = vmatprep.subr.bf16.mxu0 0
        %3253 = vmatpush1.bf16.msra.mxu0 0
        %3254 = vmatprep.subr.bf16.mxu0 0
        %3255 = vmatpush1.bf16.msra.mxu0 0
        %3256 = vmatprep.subr.bf16.mxu0 0
        %3257 = vmatpush1.bf16.msra.mxu0 0
        %3258 = vmatprep.subr.bf16.mxu0 0
        %3259 = vmatpush1.bf16.msra.mxu0 0
        %3260 = vmatprep.subr.bf16.mxu0 0
        %3261 = vmatpush1.bf16.msra.mxu0 0
        %3262 = vmatprep.subr.bf16.mxu0 0
        %3263 = vmatpush1.bf16.msra.mxu0 0
        %3264 = vmatprep.mubr.bf16.mxu0 0
        %3265 = vmatmul.mubr.bf16.gmra.mrb[0].mxu0 %v3227
        %v3266 = vpop.f32.mrb[0].mxu0
        %v3267 = vadd.f32 0.0, %v3266
        %v3268 = vpop.f32.mrb[0].mxu0
        %v3269 = vpop.f32.mrb[0].mxu0
        %v3270 = vpop.f32.mrb[0].mxu0
        %3271 = vdwg.mxu0
        %v3273 = vsel %vm3130, %v3177, 0
        %v3276 = vsel %vm3182, %v2940, 0
        %3278 = vmatprep.subr.bf16.mxu0 0
        %3279 = vmatpush1.bf16.msra.mxu0 %v3276
        %3280 = vmatprep.subr.bf16.mxu0 0
        %3281 = vmatpush1.bf16.msra.mxu0 0
        %3282 = vmatprep.subr.bf16.mxu0 0
        %3283 = vmatpush1.bf16.msra.mxu0 0
        %3284 = vmatprep.subr.bf16.mxu0 0
        %3285 = vmatpush1.bf16.msra.mxu0 0
        %3286 = vmatprep.subr.bf16.mxu0 0
        %3287 = vmatpush1.bf16.msra.mxu0 0
        %3288 = vmatprep.subr.bf16.mxu0 0
        %3289 = vmatpush1.bf16.msra.mxu0 0
        %3290 = vmatprep.subr.bf16.mxu0 0
        %3291 = vmatpush1.bf16.msra.mxu0 0
        %3292 = vmatprep.subr.bf16.mxu0 0
        %3293 = vmatpush1.bf16.msra.mxu0 0
        %3294 = vmatprep.subr.bf16.mxu0 0
        %3295 = vmatpush1.bf16.msra.mxu0 0
        %3296 = vmatprep.subr.bf16.mxu0 0
        %3297 = vmatpush1.bf16.msra.mxu0 0
        %3298 = vmatprep.subr.bf16.mxu0 0
        %3299 = vmatpush1.bf16.msra.mxu0 0
        %3300 = vmatprep.subr.bf16.mxu0 0
        %3301 = vmatpush1.bf16.msra.mxu0 0
        %3302 = vmatprep.subr.bf16.mxu0 0
        %3303 = vmatpush1.bf16.msra.mxu0 0
        %3304 = vmatprep.subr.bf16.mxu0 0
        %3305 = vmatpush1.bf16.msra.mxu0 0
        %3306 = vmatprep.subr.bf16.mxu0 0
        %3307 = vmatpush1.bf16.msra.mxu0 0
        %3308 = vmatprep.subr.bf16.mxu0 0
        %3309 = vmatpush1.bf16.msra.mxu0 0
        %3310 = vmatprep.mubr.bf16.mxu0 0
        %3311 = vmatmul.mubr.bf16.gmra.mrb[0].mxu0 %v3273
        %v3312 = vpop.f32.mrb[0].mxu0
        %v3313 = vadd.f32 0.0, %v3312
        %v3314 = vpop.f32.mrb[0].mxu0
        %v3315 = vpop.f32.mrb[0].mxu0
        %v3316 = vpop.f32.mrb[0].mxu0
        %3317 = vdwg.mxu0
        %v3319 = vsel %vm3130, %v3178, 0
        %v3322 = vsel %vm3182, %v2941, 0
        %3324 = vmatprep.subr.bf16.mxu0 0
        %3325 = vmatpush1.bf16.msra.mxu0 %v3322
        %3326 = vmatprep.subr.bf16.mxu0 0
        %3327 = vmatpush1.bf16.msra.mxu0 0
        %3328 = vmatprep.subr.bf16.mxu0 0
        %3329 = vmatpush1.bf16.msra.mxu0 0
        %3330 = vmatprep.subr.bf16.mxu0 0
        %3331 = vmatpush1.bf16.msra.mxu0 0
        %3332 = vmatprep.subr.bf16.mxu0 0
        %3333 = vmatpush1.bf16.msra.mxu0 0
        %3334 = vmatprep.subr.bf16.mxu0 0
        %3335 = vmatpush1.bf16.msra.mxu0 0
        %3336 = vmatprep.subr.bf16.mxu0 0
        %3337 = vmatpush1.bf16.msra.mxu0 0
        %3338 = vmatprep.subr.bf16.mxu0 0
        %3339 = vmatpush1.bf16.msra.mxu0 0
        %3340 = vmatprep.subr.bf16.mxu0 0
        %3341 = vmatpush1.bf16.msra.mxu0 0
        %3342 = vmatprep.subr.bf16.mxu0 0
        %3343 = vmatpush1.bf16.msra.mxu0 0
        %3344 = vmatprep.subr.bf16.mxu0 0
        %3345 = vmatpush1.bf16.msra.mxu0 0
        %3346 = vmatprep.subr.bf16.mxu0 0
        %3347 = vmatpush1.bf16.msra.mxu0 0
        %3348 = vmatprep.subr.bf16.mxu0 0
        %3349 = vmatpush1.bf16.msra.mxu0 0
        %3350 = vmatprep.subr.bf16.mxu0 0
        %3351 = vmatpush1.bf16.msra.mxu0 0
        %3352 = vmatprep.subr.bf16.mxu0 0
        %3353 = vmatpush1.bf16.msra.mxu0 0
        %3354 = vmatprep.subr.bf16.mxu0 0
        %3355 = vmatpush1.bf16.msra.mxu0 0
        %3356 = vmatprep.mubr.bf16.mxu0 0
        %3357 = vmatmul.mubr.bf16.gmra.mrb[0].mxu0 %v3319
        %v3358 = vpop.f32.mrb[0].mxu0
        %v3359 = vadd.f32 0.0, %v3358
        %v3360 = vpop.f32.mrb[0].mxu0
        %v3361 = vpop.f32.mrb[0].mxu0
        %v3362 = vpop.f32.mrb[0].mxu0
        %3363 = vdwg.mxu0
        %v3364 = vcombine.low %v3221, %v3313
        %v3365 = vcombine.high %v3221, %v3313
        %v3367 = vunpack.c.l.s4 1983009808
        %v3368 = vunpack.c.0.s8 %v3367
        %v3369 = vlaneseq
        %v3370 = vshrl.u32 %v3369, 7
        %v3371 = vsub.s32 %v3368, %v3370
        %v3372 = vrot.slane %v3364, %v3371
        %v3374 = vunpack.c.l.s4 1983009808
        %v3375 = vunpack.c.0.s8 %v3374
        %v3376 = vlaneseq
        %v3377 = vshrl.u32 %v3376, 7
        %v3378 = vsub.s32 %v3375, %v3377
        %v3379 = vrot.slane %v3365, %v3378
        %v3380 = vcombine.low %v3267, %v3359
        %v3381 = vcombine.high %v3267, %v3359
        %v3383 = vunpack.c.l.s4 1983009808
        %v3384 = vunpack.c.0.s8 %v3383
        %v3385 = vlaneseq
        %v3386 = vshrl.u32 %v3385, 7
        %v3387 = vsub.s32 %v3384, %v3386
        %v3388 = vrot.slane %v3380, %v3387
        %v3390 = vunpack.c.l.s4 1983009808
        %v3391 = vunpack.c.0.s8 %v3390
        %v3392 = vlaneseq
        %v3393 = vshrl.u32 %v3392, 7
        %v3394 = vsub.s32 %v3391, %v3393
        %v3395 = vrot.slane %v3381, %v3394
        %v3396 = vcombine.low %v3372, %v3388
        %v3397 = vcombine.high %v3372, %v3388
        %v3399 = vunpack.c.l.s4 1934713408
        %v3400 = vunpack.c.0.s8 %v3399
        %v3401 = vlaneseq
        %v3402 = vshrl.u32 %v3401, 7
        %v3403 = vsub.s32 %v3400, %v3402
        %v3404 = vrot.slane %v3396, %v3403
        %v3406 = vunpack.c.l.s4 1934713408
        %v3407 = vunpack.c.0.s8 %v3406
        %v3408 = vlaneseq
        %v3409 = vshrl.u32 %v3408, 7
        %v3410 = vsub.s32 %v3407, %v3409
        %v3411 = vrot.slane %v3397, %v3410
        %v3412 = vcombine.low %v3379, %v3395
        %v3413 = vcombine.high %v3379, %v3395
        %v3415 = vunpack.c.l.s4 1934713408
        %v3416 = vunpack.c.0.s8 %v3415
        %v3417 = vlaneseq
        %v3418 = vshrl.u32 %v3417, 7
        %v3419 = vsub.s32 %v3416, %v3418
        %v3420 = vrot.slane %v3412, %v3419
        %v3422 = vunpack.c.l.s4 1934713408
        %v3423 = vunpack.c.0.s8 %v3422
        %v3424 = vlaneseq
        %v3425 = vshrl.u32 %v3424, 7
        %v3426 = vsub.s32 %v3423, %v3425
        %v3427 = vrot.slane %v3413, %v3426
        %v3428 = vcombine.high %v3404, 0.0
        %v3429 = vcombine.high %v3411, 0.0
        %v3430 = vcombine.high %v3420, 0.0
        %v3431 = vcombine.high %v3427, 0.0
        %v3432 = vcombine.low %v3404, %v3411
        %v3434 = vunpack.c.l.s4 1983009808
        %v3435 = vunpack.c.0.s8 %v3434
        %v3436 = vlaneseq
        %v3437 = vshrl.u32 %v3436, 7
        %v3438 = vsub.s32 %v3435, %v3437
        %v3439 = vrot.slane %v3432, %v3438
        %v3440 = vcombine.low %v3428, %v3429
        %v3442 = vunpack.c.l.s4 1983009808
        %v3443 = vunpack.c.0.s8 %v3442
        %v3444 = vlaneseq
        %v3445 = vshrl.u32 %v3444, 7
        %v3446 = vsub.s32 %v3443, %v3445
        %v3447 = vrot.slane %v3440, %v3446
        %v3448 = vcombine.low %v3420, %v3427
        %v3450 = vunpack.c.l.s4 1983009808
        %v3451 = vunpack.c.0.s8 %v3450
        %v3452 = vlaneseq
        %v3453 = vshrl.u32 %v3452, 7
        %v3454 = vsub.s32 %v3451, %v3453
        %v3455 = vrot.slane %v3448, %v3454
        %v3456 = vcombine.low %v3430, %v3431
        %v3458 = vunpack.c.l.s4 1983009808
        %v3459 = vunpack.c.0.s8 %v3458
        %v3460 = vlaneseq
        %v3461 = vshrl.u32 %v3460, 7
        %v3462 = vsub.s32 %v3459, %v3461
        %v3463 = vrot.slane %v3456, %v3462
        %v3464 = vcombine.low %v3439, %v3447
        %v3465 = vcombine.high %v3439, %v3447
        %v3467 = vunpack.c.l.s4 1934713408
        %v3468 = vunpack.c.0.s8 %v3467
        %v3469 = vlaneseq
        %v3470 = vshrl.u32 %v3469, 7
        %v3471 = vsub.s32 %v3468, %v3470
        %v3472 = vrot.slane %v3464, %v3471
        %v3474 = vunpack.c.l.s4 1934713408
        %v3475 = vunpack.c.0.s8 %v3474
        %v3476 = vlaneseq
        %v3477 = vshrl.u32 %v3476, 7
        %v3478 = vsub.s32 %v3475, %v3477
        %v3479 = vrot.slane %v3465, %v3478
        %v3480 = vcombine.low %v3455, %v3463
        %v3481 = vcombine.high %v3455, %v3463
        %v3483 = vunpack.c.l.s4 1934713408
        %v3484 = vunpack.c.0.s8 %v3483
        %v3485 = vlaneseq
        %v3486 = vshrl.u32 %v3485, 7
        %v3487 = vsub.s32 %v3484, %v3486
        %v3488 = vrot.slane %v3480, %v3487
        %v3490 = vunpack.c.l.s4 1934713408
        %v3491 = vunpack.c.0.s8 %v3490
        %v3492 = vlaneseq
        %v3493 = vshrl.u32 %v3492, 7
        %v3494 = vsub.s32 %v3491, %v3493
        %v3495 = vrot.slane %v3481, %v3494
        %v3496 = vcombine.low %v3472, %v3488
        %v3497 = vcombine.high %v3472, %v3488
        %v3498 = vcombine.low %v3479, %v3495
        %v3499 = vcombine.high %v3479, %v3495
        %3501 = vrot.lane.b32.xlu0 %v3497, 32
        %v3502 = vpop.permute.xlu0 %3501
        %3505 = vrot.lane.b32.xlu0 %v3498, 64
        %v3506 = vpop.permute.xlu0 %3505
        %3509 = vrot.lane.b32.xlu0 %v3499, 96
        %v3510 = vpop.permute.xlu0 %3509
        %v3512 = vsel %vm1646, %v3496, %v3502
        %v3513 = vsel %vm2222, %v3512, %v3506
        %v3514 = vsel %vm2224, %v3513, %v3510
        %v3515 = vpack.c.bf16 %v3514, %v3514
        %v3517 = vlaneseq
        %v3518 = vshrl.u32 %v3517, 7
        %v3519 = vsub.s32 0, %v3518
        %v3520 = vrot.slane %v2627, %v3519
        %v3538 = vunpack.c.l.b16 %v2611
        %v3539 = vunpack.c.l.b16 %v2612
        %v3540 = vunpack.c.l.b16 %v2613
        %v3541 = vunpack.c.l.b16 %v2614
        %v3542 = vunpack.c.l.b16 %v2615
        %v3543 = vunpack.c.l.b16 %v2616
        %v3544 = vunpack.c.l.b16 %v2617
        %v3545 = vunpack.c.l.b16 %v2618
        %v3546 = vunpack.c.l.b16 %v2619
        %v3547 = vunpack.c.l.b16 %v2620
        %v3548 = vunpack.c.l.b16 %v2621
        %v3549 = vunpack.c.l.b16 %v2622
        %v3550 = vunpack.c.l.b16 %v2623
        %v3551 = vunpack.c.l.b16 %v2624
        %v3552 = vunpack.c.l.b16 %v2625
        %v3553 = vunpack.c.l.b16 %v2626
        %v3554 = vpack.c.b16 %v3539, %v3538
        %v3555 = vpack.c.b16 %v3541, %v3540
        %v3556 = vpack.c.b16 %v3543, %v3542
        %v3557 = vpack.c.b16 %v3545, %v3544
        %v3558 = vpack.c.b16 %v3547, %v3546
        %v3559 = vpack.c.b16 %v3549, %v3548
        %v3560 = vpack.c.b16 %v3551, %v3550
        %v3561 = vpack.c.b16 %v3553, %v3552
        %3570 = vmatprep.subr.bf16.mxu0 0
        %3571 = vmatpush1.bf16.msra.mxu0 %v3554
        %3572 = vmatprep.subr.bf16.mxu0 0
        %3573 = vmatpush1.bf16.msra.mxu0 %v3555
        %3574 = vmatprep.subr.bf16.mxu0 0
        %3575 = vmatpush1.bf16.msra.mxu0 %v3556
        %3576 = vmatprep.subr.bf16.mxu0 0
        %3577 = vmatpush1.bf16.msra.mxu0 %v3557
        %3578 = vmatprep.subr.bf16.mxu0 0
        %3579 = vmatpush1.bf16.msra.mxu0 %v3558
        %3580 = vmatprep.subr.bf16.mxu0 0
        %3581 = vmatpush1.bf16.msra.mxu0 %v3559
        %3582 = vmatprep.subr.bf16.mxu0 0
        %3583 = vmatpush1.bf16.msra.mxu0 %v3560
        %3584 = vmatprep.subr.bf16.mxu0 0
        %3585 = vmatpush1.bf16.msra.mxu0 %v3561
        %3586 = vmatprep.subr.bf16.mxu0 0
        %3587 = vmatpush1.bf16.msra.mxu0 0
        %3588 = vmatprep.subr.bf16.mxu0 0
        %3589 = vmatpush1.bf16.msra.mxu0 0
        %3590 = vmatprep.subr.bf16.mxu0 0
        %3591 = vmatpush1.bf16.msra.mxu0 0
        %3592 = vmatprep.subr.bf16.mxu0 0
        %3593 = vmatpush1.bf16.msra.mxu0 0
        %3594 = vmatprep.subr.bf16.mxu0 0
        %3595 = vmatpush1.bf16.msra.mxu0 0
        %3596 = vmatprep.subr.bf16.mxu0 0
        %3597 = vmatpush1.bf16.msra.mxu0 0
        %3598 = vmatprep.subr.bf16.mxu0 0
        %3599 = vmatpush1.bf16.msra.mxu0 0
        %3600 = vmatprep.subr.bf16.mxu0 0
        %3601 = vmatpush1.bf16.msra.mxu0 0
        %3602 = vmatprep.mubr.bf16.mxu0 0
        %3603 = vmatmul.mubr.bf16.gmra.mrb[0].mxu0 %v3515
        %v3604 = vpop.f32.mrb[0].mxu0
        %v3605 = vadd.f32 %v3520, %v3604
        %v3606 = vpop.f32.mrb[0].mxu0
        %v3607 = vpop.f32.mrb[0].mxu0
        %v3608 = vpop.f32.mrb[0].mxu0
        %3609 = vdwg.mxu0
        %v3610 = vadd.f32 %v2349, %v3605
        %v3611 = vld [vmem:[%s15] sm:$0x1]
        %v3612 = vld [vmem:[#allocation17] sm:$0x1]
        %3613 = vadd.xlane.f32.xlu0 %v3610
        %v3614 = vpop.xlane.xlu0 %3613
        %v3615 = vmul.f32 %v3614, %v2326
        %v3616 = vsub.f32 %v3610, %v3615
        %v3617 = vmul.f32 %v3616, %v3616
        %3618 = vadd.xlane.f32.xlu0 %v3617
        %v3619 = vpop.xlane.xlu0 %3618
        %v3620 = vmul.f32 %v3619, %v2326
        %v3621 = vadd.f32 %v3620, 1e-05
        %v3622 = vrsqrt.pop %v3621
        %v3623 = vmul.f32 %v3616, %v3622
        %v3625 = vlaneseq
        %v3626 = vshrl.u32 %v3625, 7
        %v3627 = vsub.s32 0, %v3626
        %v3628 = vrot.slane %v3611, %v3627
        %v3630 = vmul.f32 %v3623, %v3628
        %v3632 = vlaneseq
        %v3633 = vshrl.u32 %v3632, 7
        %v3634 = vsub.s32 0, %v3633
        %v3635 = vrot.slane %v3612, %v3634
        %v3637 = vadd.f32 %v3630, %v3635
        %v3638 = vpack.c.bf16 %v3637, %v3637
        %v3639 = vld [vmem:[#allocation19] sm:$0xff]
        %v3640 = vld [vmem:[#allocation19 + $0x8] sm:$0xff]
        %v3641 = vld [vmem:[#allocation19 + $0x10] sm:$0xff]
        %v3642 = vld [vmem:[#allocation19 + $0x18] sm:$0xff]
        %v3643 = vld [vmem:[#allocation19 + $0x20] sm:$0xff]
        %v3644 = vld [vmem:[#allocation19 + $0x28] sm:$0xff]
        %v3645 = vld [vmem:[#allocation19 + $0x30] sm:$0xff]
        %v3646 = vld [vmem:[#allocation19 + $0x38] sm:$0xff]
        %v3647 = vld [vmem:[#allocation19 + $0x40] sm:$0xff]
        %v3648 = vld [vmem:[#allocation19 + $0x48] sm:$0xff]
        %v3649 = vld [vmem:[#allocation19 + $0x50] sm:$0xff]
        %v3650 = vld [vmem:[#allocation19 + $0x58] sm:$0xff]
        %v3651 = vld [vmem:[#allocation19 + $0x60] sm:$0xff]
        %v3652 = vld [vmem:[#allocation19 + $0x68] sm:$0xff]
        %v3653 = vld [vmem:[#allocation19 + $0x70] sm:$0xff]
        %v3654 = vld [vmem:[#allocation19 + $0x78] sm:$0xff]
        %v3655 = vld [vmem:[#allocation20] sm:$0x3]
        %v3657 = vlaneseq
        %v3658 = vshrl.u32 %v3657, 7
        %v3659 = vsub.s32 0, %v3658
        %v3660 = vrot.slane %v3655, %v3659
        %v3661 = vlaneseq
        %v3662 = vshrl.u32 %v3661, 7
        %v3663 = vsub.s32 1, %v3662
        %v3664 = vrot.slane %v3655, %v3663
        %v3683 = vunpack.c.l.b16 %v3639
        %v3684 = vunpack.c.h.b16 %v3639
        %v3685 = vunpack.c.l.b16 %v3640
        %v3686 = vunpack.c.h.b16 %v3640
        %v3687 = vunpack.c.l.b16 %v3641
        %v3688 = vunpack.c.h.b16 %v3641
        %v3689 = vunpack.c.l.b16 %v3642
        %v3690 = vunpack.c.h.b16 %v3642
        %v3691 = vunpack.c.l.b16 %v3643
        %v3692 = vunpack.c.h.b16 %v3643
        %v3693 = vunpack.c.l.b16 %v3644
        %v3694 = vunpack.c.h.b16 %v3644
        %v3695 = vunpack.c.l.b16 %v3645
        %v3696 = vunpack.c.h.b16 %v3645
        %v3697 = vunpack.c.l.b16 %v3646
        %v3698 = vunpack.c.h.b16 %v3646
        %v3699 = vunpack.c.l.b16 %v3647
        %v3700 = vunpack.c.h.b16 %v3647
        %v3701 = vunpack.c.l.b16 %v3648
        %v3702 = vunpack.c.h.b16 %v3648
        %v3703 = vunpack.c.l.b16 %v3649
        %v3704 = vunpack.c.h.b16 %v3649
        %v3705 = vunpack.c.l.b16 %v3650
        %v3706 = vunpack.c.h.b16 %v3650
        %v3707 = vunpack.c.l.b16 %v3651
        %v3708 = vunpack.c.h.b16 %v3651
        %v3709 = vunpack.c.l.b16 %v3652
        %v3710 = vunpack.c.h.b16 %v3652
        %v3711 = vunpack.c.l.b16 %v3653
        %v3712 = vunpack.c.h.b16 %v3653
        %v3713 = vunpack.c.l.b16 %v3654
        %v3714 = vunpack.c.h.b16 %v3654
        %v3715 = vpack.c.b16 %v3685, %v3683
        %v3716 = vpack.c.b16 %v3686, %v3684
        %v3717 = vpack.c.b16 %v3689, %v3687
        %v3718 = vpack.c.b16 %v3690, %v3688
        %v3719 = vpack.c.b16 %v3693, %v3691
        %v3720 = vpack.c.b16 %v3694, %v3692
        %v3721 = vpack.c.b16 %v3697, %v3695
        %v3722 = vpack.c.b16 %v3698, %v3696
        %v3723 = vpack.c.b16 %v3701, %v3699
        %v3724 = vpack.c.b16 %v3702, %v3700
        %v3725 = vpack.c.b16 %v3705, %v3703
        %v3726 = vpack.c.b16 %v3706, %v3704
        %v3727 = vpack.c.b16 %v3709, %v3707
        %v3728 = vpack.c.b16 %v3710, %v3708
        %v3729 = vpack.c.b16 %v3713, %v3711
        %v3730 = vpack.c.b16 %v3714, %v3712
        %3747 = vmatprep.subr.bf16.mxu0 %v3716
        %3748 = vmatpush1.bf16.msra.mxu0 %v3715
        %3749 = vmatprep.subr.bf16.mxu0 %v3718
        %3750 = vmatpush1.bf16.msra.mxu0 %v3717
        %3751 = vmatprep.subr.bf16.mxu0 %v3720
        %3752 = vmatpush1.bf16.msra.mxu0 %v3719
        %3753 = vmatprep.subr.bf16.mxu0 %v3722
        %3754 = vmatpush1.bf16.msra.mxu0 %v3721
        %3755 = vmatprep.subr.bf16.mxu0 %v3724
        %3756 = vmatpush1.bf16.msra.mxu0 %v3723
        %3757 = vmatprep.subr.bf16.mxu0 %v3726
        %3758 = vmatpush1.bf16.msra.mxu0 %v3725
        %3759 = vmatprep.subr.bf16.mxu0 %v3728
        %3760 = vmatpush1.bf16.msra.mxu0 %v3727
        %3761 = vmatprep.subr.bf16.mxu0 %v3730
        %3762 = vmatpush1.bf16.msra.mxu0 %v3729
        %3763 = vmatprep.subr.bf16.mxu0 0
        %3764 = vmatpush1.bf16.msra.mxu0 0
        %3765 = vmatprep.subr.bf16.mxu0 0
        %3766 = vmatpush1.bf16.msra.mxu0 0
        %3767 = vmatprep.subr.bf16.mxu0 0
        %3768 = vmatpush1.bf16.msra.mxu0 0
        %3769 = vmatprep.subr.bf16.mxu0 0
        %3770 = vmatpush1.bf16.msra.mxu0 0
        %3771 = vmatprep.subr.bf16.mxu0 0
        %3772 = vmatpush1.bf16.msra.mxu0 0
        %3773 = vmatprep.subr.bf16.mxu0 0
        %3774 = vmatpush1.bf16.msra.mxu0 0
        %3775 = vmatprep.subr.bf16.mxu0 0
        %3776 = vmatpush1.bf16.msra.mxu0 0
        %3777 = vmatprep.subr.bf16.mxu0 0
        %3778 = vmatpush1.bf16.msra.mxu0 0
        %3779 = vmatprep.mubr.bf16.mxu0 0
        %3780 = vmatmul.mubr.bf16.gmra.mrb[0].mxu0 %v3638
        %v3781 = vpop.f32.mrb[0].mxu0
        %v3782 = vadd.f32 %v3660, %v3781
        %v3783 = vpop.f32.mrb[0].mxu0
        %v3784 = vadd.f32 %v3664, %v3783
        %v3785 = vpop.f32.mrb[0].mxu0
        %v3786 = vpop.f32.mrb[0].mxu0
        %3787 = vdwg.mxu0
        %v3788 = vmax.f32 %v3782, 0.0
        %v3789 = vmax.f32 %v3784, 0.0
        %v3790 = vpack.c.bf16 %v3788, %v3788
        %v3791 = vpack.c.bf16 %v3789, %v3789
        %v3792 = vld [vmem:[#allocation22] sm:$0xf]
        %v3793 = vld [vmem:[#allocation22 + $0x4] sm:$0xf]
        %v3794 = vld [vmem:[#allocation22 + $0x8] sm:$0xf]
        %v3795 = vld [vmem:[#allocation22 + $0xc] sm:$0xf]
        %v3796 = vld [vmem:[#allocation22 + $0x10] sm:$0xf]
        %v3797 = vld [vmem:[#allocation22 + $0x14] sm:$0xf]
        %v3798 = vld [vmem:[#allocation22 + $0x18] sm:$0xf]
        %v3799 = vld [vmem:[#allocation22 + $0x1c] sm:$0xf]
        %v3800 = vld [vmem:[#allocation22 + $0x20] sm:$0xf]
        %v3801 = vld [vmem:[#allocation22 + $0x24] sm:$0xf]
        %v3802 = vld [vmem:[#allocation22 + $0x28] sm:$0xf]
        %v3803 = vld [vmem:[#allocation22 + $0x2c] sm:$0xf]
        %v3804 = vld [vmem:[#allocation22 + $0x30] sm:$0xf]
        %v3805 = vld [vmem:[#allocation22 + $0x34] sm:$0xf]
        %v3806 = vld [vmem:[#allocation22 + $0x38] sm:$0xf]
        %v3807 = vld [vmem:[#allocation22 + $0x3c] sm:$0xf]
        %v3808 = vld [vmem:[#allocation22 + $0x40] sm:$0xf]
        %v3809 = vld [vmem:[#allocation22 + $0x44] sm:$0xf]
        %v3810 = vld [vmem:[#allocation22 + $0x48] sm:$0xf]
        %v3811 = vld [vmem:[#allocation22 + $0x4c] sm:$0xf]
        %v3812 = vld [vmem:[#allocation22 + $0x50] sm:$0xf]
        %v3813 = vld [vmem:[#allocation22 + $0x54] sm:$0xf]
        %v3814 = vld [vmem:[#allocation22 + $0x58] sm:$0xf]
        %v3815 = vld [vmem:[#allocation22 + $0x5c] sm:$0xf]
        %v3816 = vld [vmem:[#allocation22 + $0x60] sm:$0xf]
        %v3817 = vld [vmem:[#allocation22 + $0x64] sm:$0xf]
        %v3818 = vld [vmem:[#allocation22 + $0x68] sm:$0xf]
        %v3819 = vld [vmem:[#allocation22 + $0x6c] sm:$0xf]
        %v3820 = vld [vmem:[#allocation22 + $0x70] sm:$0xf]
        %v3821 = vld [vmem:[#allocation22 + $0x74] sm:$0xf]
        %v3822 = vld [vmem:[#allocation22 + $0x78] sm:$0xf]
        %v3823 = vld [vmem:[#allocation22 + $0x7c] sm:$0xf]
        %v3824 = vld [vmem:[#allocation23] sm:$0x1]
        %v3826 = vlaneseq
        %v3827 = vshrl.u32 %v3826, 7
        %v3828 = vsub.s32 0, %v3827
        %v3829 = vrot.slane %v3824, %v3828
        %v3863 = vunpack.c.l.b16 %v3792
        %v3864 = vunpack.c.l.b16 %v3793
        %v3865 = vunpack.c.l.b16 %v3794
        %v3866 = vunpack.c.l.b16 %v3795
        %v3867 = vunpack.c.l.b16 %v3796
        %v3868 = vunpack.c.l.b16 %v3797
        %v3869 = vunpack.c.l.b16 %v3798
        %v3870 = vunpack.c.l.b16 %v3799
        %v3871 = vunpack.c.l.b16 %v3800
        %v3872 = vunpack.c.l.b16 %v3801
        %v3873 = vunpack.c.l.b16 %v3802
        %v3874 = vunpack.c.l.b16 %v3803
        %v3875 = vunpack.c.l.b16 %v3804
        %v3876 = vunpack.c.l.b16 %v3805
        %v3877 = vunpack.c.l.b16 %v3806
        %v3878 = vunpack.c.l.b16 %v3807
        %v3879 = vunpack.c.l.b16 %v3808
        %v3880 = vunpack.c.l.b16 %v3809
        %v3881 = vunpack.c.l.b16 %v3810
        %v3882 = vunpack.c.l.b16 %v3811
        %v3883 = vunpack.c.l.b16 %v3812
        %v3884 = vunpack.c.l.b16 %v3813
        %v3885 = vunpack.c.l.b16 %v3814
        %v3886 = vunpack.c.l.b16 %v3815
        %v3887 = vunpack.c.l.b16 %v3816
        %v3888 = vunpack.c.l.b16 %v3817
        %v3889 = vunpack.c.l.b16 %v3818
        %v3890 = vunpack.c.l.b16 %v3819
        %v3891 = vunpack.c.l.b16 %v3820
        %v3892 = vunpack.c.l.b16 %v3821
        %v3893 = vunpack.c.l.b16 %v3822
        %v3894 = vunpack.c.l.b16 %v3823
        %v3895 = vpack.c.b16 %v3864, %v3863
        %v3896 = vpack.c.b16 %v3866, %v3865
        %v3897 = vpack.c.b16 %v3868, %v3867
        %v3898 = vpack.c.b16 %v3870, %v3869
        %v3899 = vpack.c.b16 %v3872, %v3871
        %v3900 = vpack.c.b16 %v3874, %v3873
        %v3901 = vpack.c.b16 %v3876, %v3875
        %v3902 = vpack.c.b16 %v3878, %v3877
        %v3903 = vpack.c.b16 %v3880, %v3879
        %v3904 = vpack.c.b16 %v3882, %v3881
        %v3905 = vpack.c.b16 %v3884, %v3883
        %v3906 = vpack.c.b16 %v3886, %v3885
        %v3907 = vpack.c.b16 %v3888, %v3887
        %v3908 = vpack.c.b16 %v3890, %v3889
        %v3909 = vpack.c.b16 %v3892, %v3891
        %v3910 = vpack.c.b16 %v3894, %v3893
        %3927 = vmatprep.subr.bf16.mxu0 0
        %3928 = vmatpush1.bf16.msra.mxu0 %v3895
        %3929 = vmatprep.subr.bf16.mxu0 0
        %3930 = vmatpush1.bf16.msra.mxu0 %v3896
        %3931 = vmatprep.subr.bf16.mxu0 0
        %3932 = vmatpush1.bf16.msra.mxu0 %v3897
        %3933 = vmatprep.subr.bf16.mxu0 0
        %3934 = vmatpush1.bf16.msra.mxu0 %v3898
        %3935 = vmatprep.subr.bf16.mxu0 0
        %3936 = vmatpush1.bf16.msra.mxu0 %v3899
        %3937 = vmatprep.subr.bf16.mxu0 0
        %3938 = vmatpush1.bf16.msra.mxu0 %v3900
        %3939 = vmatprep.subr.bf16.mxu0 0
        %3940 = vmatpush1.bf16.msra.mxu0 %v3901
        %3941 = vmatprep.subr.bf16.mxu0 0
        %3942 = vmatpush1.bf16.msra.mxu0 %v3902
        %3943 = vmatprep.subr.bf16.mxu0 0
        %3944 = vmatpush1.bf16.msra.mxu0 %v3903
        %3945 = vmatprep.subr.bf16.mxu0 0
        %3946 = vmatpush1.bf16.msra.mxu0 %v3904
        %3947 = vmatprep.subr.bf16.mxu0 0
        %3948 = vmatpush1.bf16.msra.mxu0 %v3905
        %3949 = vmatprep.subr.bf16.mxu0 0
        %3950 = vmatpush1.bf16.msra.mxu0 %v3906
        %3951 = vmatprep.subr.bf16.mxu0 0
        %3952 = vmatpush1.bf16.msra.mxu0 %v3907
        %3953 = vmatprep.subr.bf16.mxu0 0
        %3954 = vmatpush1.bf16.msra.mxu0 %v3908
        %3955 = vmatprep.subr.bf16.mxu0 0
        %3956 = vmatpush1.bf16.msra.mxu0 %v3909
        %3957 = vmatprep.subr.bf16.mxu0 0
        %3958 = vmatpush1.bf16.msra.mxu0 %v3910
        %3959 = vmatprep.mubr.bf16.mxu0 %v3791
        %3960 = vmatmul.mubr.bf16.gmra.mrb[0].mxu0 %v3790
        %v3961 = vpop.f32.mrb[0].mxu0
        %v3962 = vadd.f32 %v3829, %v3961
        %v3963 = vpop.f32.mrb[0].mxu0
        %v3964 = vpop.f32.mrb[0].mxu0
        %v3965 = vpop.f32.mrb[0].mxu0
        %3966 = vdwg.mxu0
        %v3967 = vadd.f32 %v3637, %v3962
        %v3968 = vld [vmem:[%s21] sm:$0x1]
        %v3969 = vld [vmem:[%s22] sm:$0x1]
        %3970 = vadd.xlane.f32.xlu0 %v3967
        %v3971 = vpop.xlane.xlu0 %3970
        %v3972 = vmul.f32 %v3971, %v2326
        %v3973 = vsub.f32 %v3967, %v3972
        %v3974 = vmul.f32 %v3973, %v3973
        %3975 = vadd.xlane.f32.xlu0 %v3974
        %v3976 = vpop.xlane.xlu0 %3975
        %v3977 = vmul.f32 %v3976, %v2326
        %v3978 = vadd.f32 %v3977, 1e-05
        %v3979 = vrsqrt.pop %v3978
        %v3980 = vmul.f32 %v3973, %v3979
        %v3982 = vlaneseq
        %v3983 = vshrl.u32 %v3982, 7
        %v3984 = vsub.s32 0, %v3983
        %v3985 = vrot.slane %v3968, %v3984
        %v3987 = vmul.f32 %v3980, %v3985
        %v3989 = vlaneseq
        %v3990 = vshrl.u32 %v3989, 7
        %v3991 = vsub.s32 0, %v3990
        %v3992 = vrot.slane %v3969, %v3991
        %v3994 = vadd.f32 %v3987, %v3992
        %3995 = vst [vmem:[%s904] sm:$0xff] %v3994
        %s3996 = sand.u32 %s546, 1
        %s3997 = scalar_lea.sflag [#allocation4], %s3996
        %s3998 = sand.u32 %s546, 1
        %s3999 = smul.addr %s3998, 8
        %s4000 = scalar_lea.vmem [#allocation25], %s3999
        // Predicated region
        $region169: #{decoder_layer_forward.1} parent=111 // pred_check
          %p4001 = pneg %p556
        $region170: #{decoder_layer_forward.1} parent=111 // pred_check_branch
          %4003 = sbr.rel (%p4001) target = $region172
        $region171: #{decoder_layer_forward.1} parent=111 // pred_region
          %s4005 = ssub.s32 128, 128
          %4006 = vsyncadd %s3997, %s4005
          %s4007 = smul.addr %s45, 128
          %s4008 = scalar_lea.hbm %s23, %s4007
          %s4010 = sshll.u32 %s4000, 4
          %s4011 = int_to_ptr.vmem [resolvable:$true] %s4010
          %4013 = dma.vmem_to_hbm [thread:$0]  %s4011, 128, %s4008, %s3997
        $region172: #{decoder_layer_forward.1} parent=111 // pred_fallthru
          _
      $region112: #{decoder_layer_forward.1} parent=5 // pred_fallthru
        _
      %p4014 = scmp.le.s32.totalorder 2, %s40
      // Predicated region
      $region173: #{decoder_layer_forward.1} parent=5 // pred_check
        %p4015 = pneg %p4014
      $region174: #{decoder_layer_forward.1} parent=5 // pred_check_branch
        %4017 = sbr.rel (%p4015) target = $region176
      $region175: #{decoder_layer_forward.1} parent=5 // pred_region
        %s4018 = ssub.s32 %s40, 2
        // Predicated region
        $region177: #{decoder_layer_forward.1} parent=175 // pred_check
          %p4019 = pneg %p562
        $region178: #{decoder_layer_forward.1} parent=175 // pred_check_branch
          %4021 = sbr.rel (%p4019) target = $region180
        $region179: #{decoder_layer_forward.1} parent=175 // pred_region
          %s4022 = sand.u32 %s547, 1
          %s4023 = scalar_lea.sflag [#allocation4], %s4022
          %s4024 = sand.u32 %s547, 1
          %s4025 = smul.addr %s4024, 8
          %s4026 = scalar_lea.vmem [#allocation25], %s4025
          %4027 = dma.done %s4023, 128
        $region180: #{decoder_layer_forward.1} parent=175 // pred_fallthru
          _
      $region176: #{decoder_layer_forward.1} parent=5 // pred_fallthru
        _
    $region6: #{decoder_layer_forward.1} parent=1 // loop_footer
      %s44 = sadd.s32 1, %s40
    $region7: #{decoder_layer_forward.1} parent=1 // loop_footer_branch
      %39 = sbr.rel target = $region3
    $region8: #{decoder_layer_forward.1} parent=1 // loop_exit
      _
    %4028 = vsyncpa [#allocation3], 1
    %s4029 = scalar_lea.sflag [#allocation3], 1
    %4030 = vsyncpa %s4029, 1
    %4031 = vsyncpa [#allocation6], 1
    %4032 = vsyncpa [#allocation9], 1
    %4033 = vsyncpa [#allocation12], 1
    %4034 = vsyncpa [#allocation15], 1
    %4035 = vsyncpa [#allocation18], 1
    %4036 = vsyncpa [#allocation21], 1
    %4037 = vsyncpa [#allocation24], 1
    %4038 = vsyncpa [#allocation4], 1
    %s4039 = scalar_lea.sflag [#allocation4], 1
    %4040 = vsyncpa %s4039, 1

</llo_original>
